<compile_context>
chip_gen: v5e
topology: v5e:2x2
jax: 0.10.0
libtpu: 0.0.40
codegen_flags: <defaults>
</compile_context>

<pallas_src>
import functools

import jax
import jax.numpy as jnp
from jax.experimental import pallas as pl
from jax.experimental.pallas import tpu as pltpu


_GATE_LANES = 128  # each LSTM gate gets its own 128-lane stripe -> lane-tile-aligned slices


def _bilstm_pool_classifier_kernel(
    x_ref,      # (T*Bb, E)  bf16  time-major batch block of the input
    w_in_ref,   # (E, 8G)    bf16  [W_ih_fwd | W_ih_bwd], gate-lane padded
    b_in_ref,   # (1, 8G)    f32   [b_fwd | b_bwd] (b_ih + b_hh folded), gate-lane padded
    w_rec_ref,  # (2G, 4G)   bf16  rows [0,G)=W_hh_fwd, rows [G,2G)=W_hh_bwd (row padded)
    w_cls_ref,  # (2G, Hc)   bf16  rows [0,G)=enc2h fwd-half rows, [G,2G)=bwd-half rows
    tail_ref,   # (8, Hc)    f32   row0=b_enc2h, row1=w_h2o^T, row2[0]=b_h2o
    out_ref,    # (Bb, 1)    f32
    *, seq_len,
):
    T = seq_len
    rows = x_ref.shape[0]
    Bb = rows // T
    G = w_in_ref.shape[1] // 8          # 128-lane gate stripe
    G4 = 4 * G

    # ---- hoisted input projection: ONE MXU matmul covers every timestep and both
    #      directions; the per-direction bias row is broadcast-added once. ----
    gates_in = (jnp.dot(x_ref[...], w_in_ref[...],
                        preferred_element_type=jnp.float32)
                + b_in_ref[...])                               # (T*Bb, 8G) f32

    # Loop-invariant operands hoisted out of the recurrence.
    w_rec_f = w_rec_ref[0:G, :]                                # (G, 4G) bf16
    w_rec_b = w_rec_ref[G:2 * G, :]
    tail = tail_ref[...]                                       # (8, Hc) f32

    # Per-direction state.  Padded gate lanes stay exactly 0 through the recurrence
    # (zero weight columns -> pre-activation 0 -> i=f=o=0.5, g=0 -> c=h=0).
    h_f = jnp.zeros((Bb, G), jnp.float32)
    c_f = jnp.zeros((Bb, G), jnp.float32)
    h_b = jnp.zeros((Bb, G), jnp.float32)
    c_b = jnp.zeros((Bb, G), jnp.float32)
    # h = o * tanh(c) lies in (-1, 1), so -1.0 == -inf for T >= 1 and keeps vregs finite.
    m_f = jnp.full((Bb, G), -1.0, jnp.float32)
    m_b = jnp.full((Bb, G), -1.0, jnp.float32)

    def cell(pre, c_prev):
        # PyTorch gate layout [i, f, g, o]; every slice is lane-tile aligned (G = 128).
        i = jax.nn.sigmoid(pre[:, 0 * G:1 * G])
        f = jax.nn.sigmoid(pre[:, 1 * G:2 * G])
        g = jnp.tanh(pre[:, 2 * G:3 * G])
        o = jax.nn.sigmoid(pre[:, 3 * G:4 * G])
        c = f * c_prev + i * g
        return o * jnp.tanh(c), c

    # Statically unrolled recurrence (T is a small compile-time constant).  The two
    # per-direction recurrent matmuls are independent and pipeline on the MXU; there is
    # no block-diagonal concat/mask on the serial dependence chain.
    # TODO(synk): for production T, stream time chunks through a trailing "arbitrary"
    #             grid axis (h/c/m in VMEM scratch, pl.when init/finalize) or use
    #             lax.fori_loop(..., unroll=8) instead of full unrolling.
    for t in range(T):
        pre_f = (gates_in[t * Bb:(t + 1) * Bb, 0:G4]
                 + jnp.dot(h_f.astype(jnp.bfloat16), w_rec_f,
                           preferred_element_type=jnp.float32))
        pre_b = (gates_in[(T - 1 - t) * Bb:(T - t) * Bb, G4:2 * G4]
                 + jnp.dot(h_b.astype(jnp.bfloat16), w_rec_b,
                           preferred_element_type=jnp.float32))
        h_f, c_f = cell(pre_f, c_f)
        h_b, c_b = cell(pre_b, c_b)
        m_f = jnp.maximum(m_f, h_f)     # running max == max_pool1d over the seq dim
        m_b = jnp.maximum(m_b, h_b)

    # ---- classifier head (eval mode: dropout == identity) ----
    # enc2h applied as two split matmuls on the pooled halves (no lane concatenation).
    hidden = jnp.tanh(
        jnp.dot(m_f.astype(jnp.bfloat16), w_cls_ref[0:G, :],
                preferred_element_type=jnp.float32)
        + jnp.dot(m_b.astype(jnp.bfloat16), w_cls_ref[G:2 * G, :],
                  preferred_element_type=jnp.float32)
        + tail[0:1, :])                                        # (Bb, Hc) f32
    # h20: lane-reduce against the packed w_h2o row (avoids a 1-lane matmul operand).
    out_pre = (jnp.sum(hidden * tail[1:2, :], axis=-1, keepdims=True)
               + tail[2:3, 0:1])                               # (Bb, 1)
    out_ref[...] = jax.nn.sigmoid(out_pre).astype(out_ref.dtype)


def _pad_gate_lanes(w, h):
    """(..., 4h) -> (..., 4*_GATE_LANES): gate k (PyTorch order i,f,g,o) is moved to
    lanes [k*128, k*128 + h); padding lanes are zero."""
    G = _GATE_LANES
    pad = jnp.zeros(w.shape[:-1] + (G - h,), w.dtype)
    return jnp.concatenate(
        [p for k in range(4) for p in (w[..., k * h:(k + 1) * h], pad)], axis=-1)


def _pad_rows(w, rows):
    """(r, n) -> (rows, n) by zero-padding rows (padding rows contribute 0)."""
    return jnp.concatenate(
        [w, jnp.zeros((rows - w.shape[0],) + w.shape[1:], w.dtype)], axis=0)


def _pack_operands(x, params, batch_block):
    """Layout plumbing (ordinary XLA ops in the wrapper)."""
    B, T, E = x.shape
    H = params["whh_f"].shape[0]
    Hc = params["w_enc2h"].shape[1]
    G = _GATE_LANES
    Bb = batch_block
    nb = B // Bb

    # Input, time-major, grouped by batch block: (nb, T*Bb, E) bf16 MXU operand.
    x_t = jnp.transpose(x.astype(jnp.float32), (1, 0, 2))            # (T, B, E)
    x_blk = x_t.reshape(T, nb, Bb, E).transpose(1, 0, 2, 3)          # (nb, T, Bb, E)
    x_blk = x_blk.reshape(nb, T * Bb, E).astype(jnp.bfloat16)

    # Fused input-projection weight, both directions side by side (no zero halves).
    w_in = jnp.concatenate([_pad_gate_lanes(params["wih_f"], H),
                            _pad_gate_lanes(params["wih_b"], H)],
                           axis=-1).astype(jnp.bfloat16)             # (E, 8G)
    # Single per-direction bias row (b_ih + b_hh folded), broadcast once in-kernel.
    b_in = jnp.concatenate([_pad_gate_lanes(params["b_f"], H),
                            _pad_gate_lanes(params["b_b"], H)], axis=-1)  # (1, 8G) f32

    # Stacked per-direction recurrent weights.
    w_rec = jnp.concatenate(
        [_pad_rows(_pad_gate_lanes(params["whh_f"], H), G),
         _pad_rows(_pad_gate_lanes(params["whh_b"], H), G)],
        axis=0).astype(jnp.bfloat16)                                 # (2G, 4G)

    # Classifier: enc2h rows split per pooled half, stacked into one bf16 operand.
    w_cls = jnp.concatenate([_pad_rows(params["w_enc2h"][:H], G),
                             _pad_rows(params["w_enc2h"][H:], G)],
                            axis=0).astype(jnp.bfloat16)             # (2G, Hc)
    # Tiny f32 tail operands consolidated into one (8, Hc) array.
    tail = jnp.zeros((8, Hc), jnp.float32)
    tail = tail.at[0, :].set(params["b_enc2h"][0])
    tail = tail.at[1, :].set(params["w_h2o"][:, 0])
    tail = tail.at[2, 0].set(params["b_h2o"][0, 0])

    return x_blk, w_in, b_in, w_rec, w_cls, tail


def linear_classifier_with_encoder(x, params, *, batch_block=None):
    """x: (B, T, E) float32. Returns (output (B, 1), None) like the PyTorch module.

    batch_block: rows per grid step along the batch axis.  Leave None (single block)
    for small B; for large B on v7x pad B to a multiple of 8 and pick a block size so
    the "parallel" batch axis is sharded across both TensorCores.
    """
    B, T, E = x.shape
    Bb = B if batch_block is None else batch_block
    assert B % Bb == 0, "batch must divide evenly into batch blocks"
    nb = B // Bb

    ops = _pack_operands(x, params, Bb)

    def full_spec(a):
        zeros = (0,) * a.ndim
        return pl.BlockSpec(a.shape, lambda j, _z=zeros: _z)

    in_specs = [
        pl.BlockSpec((None, T * Bb, E), lambda j: (j, 0, 0)),   # x batch block (squeezed)
        full_spec(ops[1]),   # w_in   (resident across grid steps: constant index map)
        full_spec(ops[2]),   # b_in
        full_spec(ops[3]),   # w_rec
        full_spec(ops[4]),   # w_cls
        full_spec(ops[5]),   # tail
    ]
    out_spec = pl.BlockSpec((None, Bb, 1), lambda j: (j, 0, 0))

    kernel = functools.partial(_bilstm_pool_classifier_kernel, seq_len=T)
    out = pl.pallas_call(
        kernel,
        grid=(nb,),
        in_specs=in_specs,
        out_specs=out_spec,
        out_shape=jax.ShapeDtypeStruct((nb, Bb, 1), jnp.float32),
        compiler_params=pltpu.CompilerParams(
            dimension_semantics=("parallel",)),   # batch blocks shard over v7x's 2 TCs
    )(*ops)
    return out.reshape(B, 1), None


def init_params(key, *, hidden_size, encoding_size, embedding_size):
    """Deterministic synthetic parameters matching PyTorch default init shapes."""
    H, E, Hc = encoding_size, embedding_size, hidden_size
    ks = jax.random.split(key, 12)

    def unif(k, shape, bound):
        return jax.random.uniform(k, shape, jnp.float32, -bound, bound)

    k_lstm = 1.0 / jnp.sqrt(H)

    def lstm_dir(k0, k1, k2, k3):
        w_ih = unif(k0, (4 * H, E), k_lstm)   # PyTorch weight_ih_l0
        w_hh = unif(k1, (4 * H, H), k_lstm)   # PyTorch weight_hh_l0
        b_ih = unif(k2, (4 * H,), k_lstm)
        b_hh = unif(k3, (4 * H,), k_lstm)
        return w_ih.T, w_hh.T, (b_ih + b_hh).reshape(1, 4 * H)

    wih_f, whh_f, b_f = lstm_dir(ks[0], ks[1], ks[2], ks[3])
    wih_b, whh_b, b_b = lstm_dir(ks[4], ks[5], ks[6], ks[7])

    k_enc2h = 1.0 / jnp.sqrt(2 * H)
    w_enc2h = unif(ks[8], (Hc, 2 * H), k_enc2h).T          # (2H, Hc)
    b_enc2h = unif(ks[9], (Hc,), k_enc2h).reshape(1, Hc)

    k_h2o = 1.0 / jnp.sqrt(Hc)
    w_h2o = unif(ks[10], (1, Hc), k_h2o).T                  # (Hc, 1)
    b_h2o = unif(ks[11], (1,), k_h2o).reshape(1, 1)

    return dict(wih_f=wih_f, whh_f=whh_f, b_f=b_f,
                wih_b=wih_b, whh_b=whh_b, b_b=b_b,
                w_enc2h=w_enc2h, b_enc2h=b_enc2h,
                w_h2o=w_h2o, b_h2o=b_h2o)


def _reference_forward(x, params, *, matmul_dtype=jnp.float32):
    """Pure-JAX (non-Pallas) reference of the same eval-mode forward.

    matmul_dtype=bfloat16 mimics the kernel's MXU operand precision (f32 accumulation
    and f32 elementwise math in both cases)."""
    B, T, E = x.shape
    H = params["whh_f"].shape[0]

    def dot(a, b):
        return jnp.dot(a.astype(matmul_dtype), b.astype(matmul_dtype),
                       preferred_element_type=jnp.float32)

    def cell(pre, c_prev):
        i = jax.nn.sigmoid(pre[:, 0 * H:1 * H])
        f = jax.nn.sigmoid(pre[:, 1 * H:2 * H])
        g = jnp.tanh(pre[:, 2 * H:3 * H])
        o = jax.nn.sigmoid(pre[:, 3 * H:4 * H])
        c = f * c_prev + i * g
        return o * jnp.tanh(c), c

    def direction(xs, wih, whh, b):
        h = jnp.zeros((B, H), jnp.float32)
        c = jnp.zeros((B, H), jnp.float32)
        m = jnp.full((B, H), -jnp.inf, jnp.float32)
        for t in range(T):
            h, c = cell(dot(xs[:, t], wih) + dot(h, whh) + b, c)
            m = jnp.maximum(m, h)
        return m

    m_f = direction(x, params["wih_f"], params["whh_f"], params["b_f"])
    m_b = direction(x[:, ::-1], params["wih_b"], params["whh_b"], params["b_b"])
    hidden = jnp.tanh(dot(m_f, params["w_enc2h"][:H])
                      + dot(m_b, params["w_enc2h"][H:])
                      + params["b_enc2h"])
    return jax.nn.sigmoid(hidden @ params["w_h2o"] + params["b_h2o"])


if __name__ == "__main__":
    # Small shapes consistent with the module:
    #   batch B=2, seq T=8, embedding_size E=32, encoding_size H=16, hidden_size Hc=32
    B, T, E, H, Hc = 2, 8, 32, 16, 32

    key = jax.random.PRNGKey(0)
    k_x, k_p = jax.random.split(key)
    x = jax.random.normal(k_x, (B, T, E), jnp.float32)
    params = init_params(k_p, hidden_size=Hc, encoding_size=H, embedding_size=E)

    out, aux = linear_classifier_with_encoder(x, params)
    out = jax.block_until_ready(out)

    ref_matched = _reference_forward(x, params, matmul_dtype=jnp.bfloat16)
    ref_f32 = _reference_forward(x, params, matmul_dtype=jnp.float32)

    assert out.shape == (B, 1) and aux is None
    assert bool(jnp.all(jnp.isfinite(out))) and bool(jnp.all((out > 0) & (out < 1)))
    assert float(jnp.max(jnp.abs(out - ref_matched))) < 1e-3, \
        "mismatch vs matched-precision (bf16-operand) JAX reference"
    assert float(jnp.max(jnp.abs(out - ref_f32))) < 2e-2, \
        "mismatch vs full-f32 JAX reference"
    print("KERNEL_OK")
</pallas_src>

<mosaic_0001>
module attributes {stable_mosaic.version = 11 : i64} {
  func.func @_bilstm_pool_classifier_kernel(%arg0: i32, %arg1: memref<1x16x32xbf16, #tpu.memory_space<vmem>>, %arg2: memref<32x1024xbf16, #tpu.memory_space<vmem>>, %arg3: memref<1x1024xf32, #tpu.memory_space<vmem>>, %arg4: memref<256x512xbf16, #tpu.memory_space<vmem>>, %arg5: memref<256x32xbf16, #tpu.memory_space<vmem>>, %arg6: memref<8x32xf32, #tpu.memory_space<vmem>>, %arg7: memref<1x2x1xf32, #tpu.memory_space<vmem>>) attributes {dimension_semantics = [#tpu.dimension_semantics<parallel>], iteration_bounds = array<i64: 1>, scalar_prefetch = 0 : i64, scratch_operands = 0 : i64, tpu.core_type = #tpu.core_type<tc>, window_params = [{transform_indices = @transform_0, window_bounds = array<i64: 1, 16, 32>}, {pipeline_mode = #tpu.pipeline_mode<synchronous>, transform_indices = @transform_1, window_bounds = array<i64: 32, 1024>}, {pipeline_mode = #tpu.pipeline_mode<synchronous>, transform_indices = @transform_2, window_bounds = array<i64: 1, 1024>}, {pipeline_mode = #tpu.pipeline_mode<synchronous>, transform_indices = @transform_3, window_bounds = array<i64: 256, 512>}, {pipeline_mode = #tpu.pipeline_mode<synchronous>, transform_indices = @transform_4, window_bounds = array<i64: 256, 32>}, {pipeline_mode = #tpu.pipeline_mode<synchronous>, transform_indices = @transform_5, window_bounds = array<i64: 8, 32>}, {transform_indices = @transform_6, window_bounds = array<i64: 1, 2, 1>}]} {
    %c0 = arith.constant 0 : index
    %c0_0 = arith.constant 0 : index
    %c0_1 = arith.constant 0 : index
    %0 = vector.load %arg1[%c0, %c0_0, %c0_1] : memref<1x16x32xbf16, #tpu.memory_space<vmem>>, vector<1x16x32xbf16>
    %1 = vector.shape_cast %0 : vector<1x16x32xbf16> to vector<16x32xbf16>
    %c0_2 = arith.constant 0 : index
    %c0_3 = arith.constant 0 : index
    %2 = vector.load %arg2[%c0_2, %c0_3] : memref<32x1024xbf16, #tpu.memory_space<vmem>>, vector<32x1024xbf16>
    %cst = arith.constant dense<0.000000e+00> : vector<16x1024xf32>
    %3 = tpu.matmul %1, %2, %cst {dimension_numbers = #tpu.dot_dimension_numbers<[1], [0], [0], [1], [0, 0, 1, 1], [], []>} : vector<16x32xbf16>, vector<32x1024xbf16>, vector<16x1024xf32> -> vector<16x1024xf32>
    %c0_4 = arith.constant 0 : index
    %c0_5 = arith.constant 0 : index
    %4 = vector.load %arg3[%c0_4, %c0_5] : memref<1x1024xf32, #tpu.memory_space<vmem>>, vector<1x1024xf32>
    %5 = vector.broadcast %4 : vector<1x1024xf32> to vector<16x1024xf32>
    %6 = arith.addf %3, %5 : vector<16x1024xf32>
    %c0_6 = arith.constant 0 : index
    %c0_7 = arith.constant 0 : index
    %7 = vector.load %arg4[%c0_6, %c0_7] : memref<256x512xbf16, #tpu.memory_space<vmem>>, vector<128x512xbf16>
    %c128 = arith.constant 128 : index
    %c0_8 = arith.constant 0 : index
    %8 = vector.load %arg4[%c128, %c0_8] : memref<256x512xbf16, #tpu.memory_space<vmem>>, vector<128x512xbf16>
    %c0_9 = arith.constant 0 : index
    %c0_10 = arith.constant 0 : index
    %9 = vector.load %arg6[%c0_9, %c0_10] : memref<8x32xf32, #tpu.memory_space<vmem>>, vector<8x32xf32>
    %cst_11 = arith.constant 0.000000e+00 : f32
    %10 = vector.broadcast %cst_11 : f32 to vector<2x128xf32>
    %cst_12 = arith.constant 0.000000e+00 : f32
    %11 = vector.broadcast %cst_12 : f32 to vector<2x128xf32>
    %cst_13 = arith.constant 0.000000e+00 : f32
    %12 = vector.broadcast %cst_13 : f32 to vector<2x128xf32>
    %cst_14 = arith.constant 0.000000e+00 : f32
    %13 = vector.broadcast %cst_14 : f32 to vector<2x128xf32>
    %cst_15 = arith.constant -1.000000e+00 : f32
    %14 = vector.broadcast %cst_15 : f32 to vector<2x128xf32>
    %cst_16 = arith.constant -1.000000e+00 : f32
    %15 = vector.broadcast %cst_16 : f32 to vector<2x128xf32>
    %16 = vector.extract_strided_slice %6 {offsets = [0, 0], sizes = [2, 512], strides = [1, 1]} : vector<16x1024xf32> to vector<2x512xf32>
    %17 = arith.truncf %10 : vector<2x128xf32> to vector<2x128xbf16>
    %cst_17 = arith.constant dense<0.000000e+00> : vector<2x512xf32>
    %18 = tpu.matmul %17, %7, %cst_17 {dimension_numbers = #tpu.dot_dimension_numbers<[1], [0], [0], [1], [0, 0, 1, 1], [], []>} : vector<2x128xbf16>, vector<128x512xbf16>, vector<2x512xf32> -> vector<2x512xf32>
    %19 = arith.addf %16, %18 : vector<2x512xf32>
    %20 = vector.extract_strided_slice %6 {offsets = [14, 512], sizes = [2, 512], strides = [1, 1]} : vector<16x1024xf32> to vector<2x512xf32>
    %21 = arith.truncf %12 : vector<2x128xf32> to vector<2x128xbf16>
    %cst_18 = arith.constant dense<0.000000e+00> : vector<2x512xf32>
    %22 = tpu.matmul %21, %8, %cst_18 {dimension_numbers = #tpu.dot_dimension_numbers<[1], [0], [0], [1], [0, 0, 1, 1], [], []>} : vector<2x128xbf16>, vector<128x512xbf16>, vector<2x512xf32> -> vector<2x512xf32>
    %23 = arith.addf %20, %22 : vector<2x512xf32>
    %24 = vector.extract_strided_slice %19 {offsets = [0, 0], sizes = [2, 128], strides = [1, 1]} : vector<2x512xf32> to vector<2x128xf32>
    %25 = arith.negf %24 : vector<2x128xf32>
    %26 = math.exp %25 : vector<2x128xf32>
    %cst_19 = arith.constant 1.000000e+00 : f32
    %27 = vector.broadcast %cst_19 : f32 to vector<2x128xf32>
    %28 = arith.addf %27, %26 : vector<2x128xf32>
    %29 = arith.divf %27, %28 : vector<2x128xf32>
    %30 = vector.extract_strided_slice %19 {offsets = [0, 128], sizes = [2, 128], strides = [1, 1]} : vector<2x512xf32> to vector<2x128xf32>
    %31 = arith.negf %30 : vector<2x128xf32>
    %32 = math.exp %31 : vector<2x128xf32>
    %cst_20 = arith.constant 1.000000e+00 : f32
    %33 = vector.broadcast %cst_20 : f32 to vector<2x128xf32>
    %34 = arith.addf %33, %32 : vector<2x128xf32>
    %35 = arith.divf %33, %34 : vector<2x128xf32>
    %36 = vector.extract_strided_slice %19 {offsets = [0, 256], sizes = [2, 128], strides = [1, 1]} : vector<2x512xf32> to vector<2x128xf32>
    %37 = math.tanh %36 : vector<2x128xf32>
    %38 = vector.extract_strided_slice %19 {offsets = [0, 384], sizes = [2, 128], strides = [1, 1]} : vector<2x512xf32> to vector<2x128xf32>
    %39 = arith.negf %38 : vector<2x128xf32>
    %40 = math.exp %39 : vector<2x128xf32>
    %cst_21 = arith.constant 1.000000e+00 : f32
    %41 = vector.broadcast %cst_21 : f32 to vector<2x128xf32>
    %42 = arith.addf %41, %40 : vector<2x128xf32>
    %43 = arith.divf %41, %42 : vector<2x128xf32>
    %44 = arith.mulf %35, %11 : vector<2x128xf32>
    %45 = arith.mulf %29, %37 : vector<2x128xf32>
    %46 = arith.addf %44, %45 : vector<2x128xf32>
    %47 = math.tanh %46 : vector<2x128xf32>
    %48 = arith.mulf %43, %47 : vector<2x128xf32>
    %49 = vector.extract_strided_slice %23 {offsets = [0, 0], sizes = [2, 128], strides = [1, 1]} : vector<2x512xf32> to vector<2x128xf32>
    %50 = arith.negf %49 : vector<2x128xf32>
    %51 = math.exp %50 : vector<2x128xf32>
    %cst_22 = arith.constant 1.000000e+00 : f32
    %52 = vector.broadcast %cst_22 : f32 to vector<2x128xf32>
    %53 = arith.addf %52, %51 : vector<2x128xf32>
    %54 = arith.divf %52, %53 : vector<2x128xf32>
    %55 = vector.extract_strided_slice %23 {offsets = [0, 128], sizes = [2, 128], strides = [1, 1]} : vector<2x512xf32> to vector<2x128xf32>
    %56 = arith.negf %55 : vector<2x128xf32>
    %57 = math.exp %56 : vector<2x128xf32>
    %cst_23 = arith.constant 1.000000e+00 : f32
    %58 = vector.broadcast %cst_23 : f32 to vector<2x128xf32>
    %59 = arith.addf %58, %57 : vector<2x128xf32>
    %60 = arith.divf %58, %59 : vector<2x128xf32>
    %61 = vector.extract_strided_slice %23 {offsets = [0, 256], sizes = [2, 128], strides = [1, 1]} : vector<2x512xf32> to vector<2x128xf32>
    %62 = math.tanh %61 : vector<2x128xf32>
    %63 = vector.extract_strided_slice %23 {offsets = [0, 384], sizes = [2, 128], strides = [1, 1]} : vector<2x512xf32> to vector<2x128xf32>
    %64 = arith.negf %63 : vector<2x128xf32>
    %65 = math.exp %64 : vector<2x128xf32>
    %cst_24 = arith.constant 1.000000e+00 : f32
    %66 = vector.broadcast %cst_24 : f32 to vector<2x128xf32>
    %67 = arith.addf %66, %65 : vector<2x128xf32>
    %68 = arith.divf %66, %67 : vector<2x128xf32>
    %69 = arith.mulf %60, %13 : vector<2x128xf32>
    %70 = arith.mulf %54, %62 : vector<2x128xf32>
    %71 = arith.addf %69, %70 : vector<2x128xf32>
    %72 = math.tanh %71 : vector<2x128xf32>
    %73 = arith.mulf %68, %72 : vector<2x128xf32>
    %74 = arith.maximumf %14, %48 : vector<2x128xf32>
    %75 = arith.maximumf %15, %73 : vector<2x128xf32>
    %76 = vector.extract_strided_slice %6 {offsets = [2, 0], sizes = [2, 512], strides = [1, 1]} : vector<16x1024xf32> to vector<2x512xf32>
    %77 = arith.truncf %48 : vector<2x128xf32> to vector<2x128xbf16>
    %cst_25 = arith.constant dense<0.000000e+00> : vector<2x512xf32>
    %78 = tpu.matmul %77, %7, %cst_25 {dimension_numbers = #tpu.dot_dimension_numbers<[1], [0], [0], [1], [0, 0, 1, 1], [], []>} : vector<2x128xbf16>, vector<128x512xbf16>, vector<2x512xf32> -> vector<2x512xf32>
    %79 = arith.addf %76, %78 : vector<2x512xf32>
    %80 = vector.extract_strided_slice %6 {offsets = [12, 512], sizes = [2, 512], strides = [1, 1]} : vector<16x1024xf32> to vector<2x512xf32>
    %81 = arith.truncf %73 : vector<2x128xf32> to vector<2x128xbf16>
    %cst_26 = arith.constant dense<0.000000e+00> : vector<2x512xf32>
    %82 = tpu.matmul %81, %8, %cst_26 {dimension_numbers = #tpu.dot_dimension_numbers<[1], [0], [0], [1], [0, 0, 1, 1], [], []>} : vector<2x128xbf16>, vector<128x512xbf16>, vector<2x512xf32> -> vector<2x512xf32>
    %83 = arith.addf %80, %82 : vector<2x512xf32>
    %84 = vector.extract_strided_slice %79 {offsets = [0, 0], sizes = [2, 128], strides = [1, 1]} : vector<2x512xf32> to vector<2x128xf32>
    %85 = arith.negf %84 : vector<2x128xf32>
    %86 = math.exp %85 : vector<2x128xf32>
    %cst_27 = arith.constant 1.000000e+00 : f32
    %87 = vector.broadcast %cst_27 : f32 to vector<2x128xf32>
    %88 = arith.addf %87, %86 : vector<2x128xf32>
    %89 = arith.divf %87, %88 : vector<2x128xf32>
    %90 = vector.extract_strided_slice %79 {offsets = [0, 128], sizes = [2, 128], strides = [1, 1]} : vector<2x512xf32> to vector<2x128xf32>
    %91 = arith.negf %90 : vector<2x128xf32>
    %92 = math.exp %91 : vector<2x128xf32>
    %cst_28 = arith.constant 1.000000e+00 : f32
    %93 = vector.broadcast %cst_28 : f32 to vector<2x128xf32>
    %94 = arith.addf %93, %92 : vector<2x128xf32>
    %95 = arith.divf %93, %94 : vector<2x128xf32>
    %96 = vector.extract_strided_slice %79 {offsets = [0, 256], sizes = [2, 128], strides = [1, 1]} : vector<2x512xf32> to vector<2x128xf32>
    %97 = math.tanh %96 : vector<2x128xf32>
    %98 = vector.extract_strided_slice %79 {offsets = [0, 384], sizes = [2, 128], strides = [1, 1]} : vector<2x512xf32> to vector<2x128xf32>
    %99 = arith.negf %98 : vector<2x128xf32>
    %100 = math.exp %99 : vector<2x128xf32>
    %cst_29 = arith.constant 1.000000e+00 : f32
    %101 = vector.broadcast %cst_29 : f32 to vector<2x128xf32>
    %102 = arith.addf %101, %100 : vector<2x128xf32>
    %103 = arith.divf %101, %102 : vector<2x128xf32>
    %104 = arith.mulf %95, %46 : vector<2x128xf32>
    %105 = arith.mulf %89, %97 : vector<2x128xf32>
    %106 = arith.addf %104, %105 : vector<2x128xf32>
    %107 = math.tanh %106 : vector<2x128xf32>
    %108 = arith.mulf %103, %107 : vector<2x128xf32>
    %109 = vector.extract_strided_slice %83 {offsets = [0, 0], sizes = [2, 128], strides = [1, 1]} : vector<2x512xf32> to vector<2x128xf32>
    %110 = arith.negf %109 : vector<2x128xf32>
    %111 = math.exp %110 : vector<2x128xf32>
    %cst_30 = arith.constant 1.000000e+00 : f32
    %112 = vector.broadcast %cst_30 : f32 to vector<2x128xf32>
    %113 = arith.addf %112, %111 : vector<2x128xf32>
    %114 = arith.divf %112, %113 : vector<2x128xf32>
    %115 = vector.extract_strided_slice %83 {offsets = [0, 128], sizes = [2, 128], strides = [1, 1]} : vector<2x512xf32> to vector<2x128xf32>
    %116 = arith.negf %115 : vector<2x128xf32>
    %117 = math.exp %116 : vector<2x128xf32>
    %cst_31 = arith.constant 1.000000e+00 : f32
    %118 = vector.broadcast %cst_31 : f32 to vector<2x128xf32>
    %119 = arith.addf %118, %117 : vector<2x128xf32>
    %120 = arith.divf %118, %119 : vector<2x128xf32>
    %121 = vector.extract_strided_slice %83 {offsets = [0, 256], sizes = [2, 128], strides = [1, 1]} : vector<2x512xf32> to vector<2x128xf32>
    %122 = math.tanh %121 : vector<2x128xf32>
    %123 = vector.extract_strided_slice %83 {offsets = [0, 384], sizes = [2, 128], strides = [1, 1]} : vector<2x512xf32> to vector<2x128xf32>
    %124 = arith.negf %123 : vector<2x128xf32>
    %125 = math.exp %124 : vector<2x128xf32>
    %cst_32 = arith.constant 1.000000e+00 : f32
    %126 = vector.broadcast %cst_32 : f32 to vector<2x128xf32>
    %127 = arith.addf %126, %125 : vector<2x128xf32>
    %128 = arith.divf %126, %127 : vector<2x128xf32>
    %129 = arith.mulf %120, %71 : vector<2x128xf32>
    %130 = arith.mulf %114, %122 : vector<2x128xf32>
    %131 = arith.addf %129, %130 : vector<2x128xf32>
    %132 = math.tanh %131 : vector<2x128xf32>
    %133 = arith.mulf %128, %132 : vector<2x128xf32>
    %134 = arith.maximumf %74, %108 : vector<2x128xf32>
    %135 = arith.maximumf %75, %133 : vector<2x128xf32>
    %136 = vector.extract_strided_slice %6 {offsets = [4, 0], sizes = [2, 512], strides = [1, 1]} : vector<16x1024xf32> to vector<2x512xf32>
    %137 = arith.truncf %108 : vector<2x128xf32> to vector<2x128xbf16>
    %cst_33 = arith.constant dense<0.000000e+00> : vector<2x512xf32>
    %138 = tpu.matmul %137, %7, %cst_33 {dimension_numbers = #tpu.dot_dimension_numbers<[1], [0], [0], [1], [0, 0, 1, 1], [], []>} : vector<2x128xbf16>, vector<128x512xbf16>, vector<2x512xf32> -> vector<2x512xf32>
    %139 = arith.addf %136, %138 : vector<2x512xf32>
    %140 = vector.extract_strided_slice %6 {offsets = [10, 512], sizes = [2, 512], strides = [1, 1]} : vector<16x1024xf32> to vector<2x512xf32>
    %141 = arith.truncf %133 : vector<2x128xf32> to vector<2x128xbf16>
    %cst_34 = arith.constant dense<0.000000e+00> : vector<2x512xf32>
    %142 = tpu.matmul %141, %8, %cst_34 {dimension_numbers = #tpu.dot_dimension_numbers<[1], [0], [0], [1], [0, 0, 1, 1], [], []>} : vector<2x128xbf16>, vector<128x512xbf16>, vector<2x512xf32> -> vector<2x512xf32>
    %143 = arith.addf %140, %142 : vector<2x512xf32>
    %144 = vector.extract_strided_slice %139 {offsets = [0, 0], sizes = [2, 128], strides = [1, 1]} : vector<2x512xf32> to vector<2x128xf32>
    %145 = arith.negf %144 : vector<2x128xf32>
    %146 = math.exp %145 : vector<2x128xf32>
    %cst_35 = arith.constant 1.000000e+00 : f32
    %147 = vector.broadcast %cst_35 : f32 to vector<2x128xf32>
    %148 = arith.addf %147, %146 : vector<2x128xf32>
    %149 = arith.divf %147, %148 : vector<2x128xf32>
    %150 = vector.extract_strided_slice %139 {offsets = [0, 128], sizes = [2, 128], strides = [1, 1]} : vector<2x512xf32> to vector<2x128xf32>
    %151 = arith.negf %150 : vector<2x128xf32>
    %152 = math.exp %151 : vector<2x128xf32>
    %cst_36 = arith.constant 1.000000e+00 : f32
    %153 = vector.broadcast %cst_36 : f32 to vector<2x128xf32>
    %154 = arith.addf %153, %152 : vector<2x128xf32>
    %155 = arith.divf %153, %154 : vector<2x128xf32>
    %156 = vector.extract_strided_slice %139 {offsets = [0, 256], sizes = [2, 128], strides = [1, 1]} : vector<2x512xf32> to vector<2x128xf32>
    %157 = math.tanh %156 : vector<2x128xf32>
    %158 = vector.extract_strided_slice %139 {offsets = [0, 384], sizes = [2, 128], strides = [1, 1]} : vector<2x512xf32> to vector<2x128xf32>
    %159 = arith.negf %158 : vector<2x128xf32>
    %160 = math.exp %159 : vector<2x128xf32>
    %cst_37 = arith.constant 1.000000e+00 : f32
    %161 = vector.broadcast %cst_37 : f32 to vector<2x128xf32>
    %162 = arith.addf %161, %160 : vector<2x128xf32>
    %163 = arith.divf %161, %162 : vector<2x128xf32>
    %164 = arith.mulf %155, %106 : vector<2x128xf32>
    %165 = arith.mulf %149, %157 : vector<2x128xf32>
    %166 = arith.addf %164, %165 : vector<2x128xf32>
    %167 = math.tanh %166 : vector<2x128xf32>
    %168 = arith.mulf %163, %167 : vector<2x128xf32>
    %169 = vector.extract_strided_slice %143 {offsets = [0, 0], sizes = [2, 128], strides = [1, 1]} : vector<2x512xf32> to vector<2x128xf32>
    %170 = arith.negf %169 : vector<2x128xf32>
    %171 = math.exp %170 : vector<2x128xf32>
    %cst_38 = arith.constant 1.000000e+00 : f32
    %172 = vector.broadcast %cst_38 : f32 to vector<2x128xf32>
    %173 = arith.addf %172, %171 : vector<2x128xf32>
    %174 = arith.divf %172, %173 : vector<2x128xf32>
    %175 = vector.extract_strided_slice %143 {offsets = [0, 128], sizes = [2, 128], strides = [1, 1]} : vector<2x512xf32> to vector<2x128xf32>
    %176 = arith.negf %175 : vector<2x128xf32>
    %177 = math.exp %176 : vector<2x128xf32>
    %cst_39 = arith.constant 1.000000e+00 : f32
    %178 = vector.broadcast %cst_39 : f32 to vector<2x128xf32>
    %179 = arith.addf %178, %177 : vector<2x128xf32>
    %180 = arith.divf %178, %179 : vector<2x128xf32>
    %181 = vector.extract_strided_slice %143 {offsets = [0, 256], sizes = [2, 128], strides = [1, 1]} : vector<2x512xf32> to vector<2x128xf32>
    %182 = math.tanh %181 : vector<2x128xf32>
    %183 = vector.extract_strided_slice %143 {offsets = [0, 384], sizes = [2, 128], strides = [1, 1]} : vector<2x512xf32> to vector<2x128xf32>
    %184 = arith.negf %183 : vector<2x128xf32>
    %185 = math.exp %184 : vector<2x128xf32>
    %cst_40 = arith.constant 1.000000e+00 : f32
    %186 = vector.broadcast %cst_40 : f32 to vector<2x128xf32>
    %187 = arith.addf %186, %185 : vector<2x128xf32>
    %188 = arith.divf %186, %187 : vector<2x128xf32>
    %189 = arith.mulf %180, %131 : vector<2x128xf32>
    %190 = arith.mulf %174, %182 : vector<2x128xf32>
    %191 = arith.addf %189, %190 : vector<2x128xf32>
    %192 = math.tanh %191 : vector<2x128xf32>
    %193 = arith.mulf %188, %192 : vector<2x128xf32>
    %194 = arith.maximumf %134, %168 : vector<2x128xf32>
    %195 = arith.maximumf %135, %193 : vector<2x128xf32>
    %196 = vector.extract_strided_slice %6 {offsets = [6, 0], sizes = [2, 512], strides = [1, 1]} : vector<16x1024xf32> to vector<2x512xf32>
    %197 = arith.truncf %168 : vector<2x128xf32> to vector<2x128xbf16>
    %cst_41 = arith.constant dense<0.000000e+00> : vector<2x512xf32>
    %198 = tpu.matmul %197, %7, %cst_41 {dimension_numbers = #tpu.dot_dimension_numbers<[1], [0], [0], [1], [0, 0, 1, 1], [], []>} : vector<2x128xbf16>, vector<128x512xbf16>, vector<2x512xf32> -> vector<2x512xf32>
    %199 = arith.addf %196, %198 : vector<2x512xf32>
    %200 = vector.extract_strided_slice %6 {offsets = [8, 512], sizes = [2, 512], strides = [1, 1]} : vector<16x1024xf32> to vector<2x512xf32>
    %201 = arith.truncf %193 : vector<2x128xf32> to vector<2x128xbf16>
    %cst_42 = arith.constant dense<0.000000e+00> : vector<2x512xf32>
    %202 = tpu.matmul %201, %8, %cst_42 {dimension_numbers = #tpu.dot_dimension_numbers<[1], [0], [0], [1], [0, 0, 1, 1], [], []>} : vector<2x128xbf16>, vector<128x512xbf16>, vector<2x512xf32> -> vector<2x512xf32>
    %203 = arith.addf %200, %202 : vector<2x512xf32>
    %204 = vector.extract_strided_slice %199 {offsets = [0, 0], sizes = [2, 128], strides = [1, 1]} : vector<2x512xf32> to vector<2x128xf32>
    %205 = arith.negf %204 : vector<2x128xf32>
    %206 = math.exp %205 : vector<2x128xf32>
    %cst_43 = arith.constant 1.000000e+00 : f32
    %207 = vector.broadcast %cst_43 : f32 to vector<2x128xf32>
    %208 = arith.addf %207, %206 : vector<2x128xf32>
    %209 = arith.divf %207, %208 : vector<2x128xf32>
    %210 = vector.extract_strided_slice %199 {offsets = [0, 128], sizes = [2, 128], strides = [1, 1]} : vector<2x512xf32> to vector<2x128xf32>
    %211 = arith.negf %210 : vector<2x128xf32>
    %212 = math.exp %211 : vector<2x128xf32>
    %cst_44 = arith.constant 1.000000e+00 : f32
    %213 = vector.broadcast %cst_44 : f32 to vector<2x128xf32>
    %214 = arith.addf %213, %212 : vector<2x128xf32>
    %215 = arith.divf %213, %214 : vector<2x128xf32>
    %216 = vector.extract_strided_slice %199 {offsets = [0, 256], sizes = [2, 128], strides = [1, 1]} : vector<2x512xf32> to vector<2x128xf32>
    %217 = math.tanh %216 : vector<2x128xf32>
    %218 = vector.extract_strided_slice %199 {offsets = [0, 384], sizes = [2, 128], strides = [1, 1]} : vector<2x512xf32> to vector<2x128xf32>
    %219 = arith.negf %218 : vector<2x128xf32>
    %220 = math.exp %219 : vector<2x128xf32>
    %cst_45 = arith.constant 1.000000e+00 : f32
    %221 = vector.broadcast %cst_45 : f32 to vector<2x128xf32>
    %222 = arith.addf %221, %220 : vector<2x128xf32>
    %223 = arith.divf %221, %222 : vector<2x128xf32>
    %224 = arith.mulf %215, %166 : vector<2x128xf32>
    %225 = arith.mulf %209, %217 : vector<2x128xf32>
    %226 = arith.addf %224, %225 : vector<2x128xf32>
    %227 = math.tanh %226 : vector<2x128xf32>
    %228 = arith.mulf %223, %227 : vector<2x128xf32>
    %229 = vector.extract_strided_slice %203 {offsets = [0, 0], sizes = [2, 128], strides = [1, 1]} : vector<2x512xf32> to vector<2x128xf32>
    %230 = arith.negf %229 : vector<2x128xf32>
    %231 = math.exp %230 : vector<2x128xf32>
    %cst_46 = arith.constant 1.000000e+00 : f32
    %232 = vector.broadcast %cst_46 : f32 to vector<2x128xf32>
    %233 = arith.addf %232, %231 : vector<2x128xf32>
    %234 = arith.divf %232, %233 : vector<2x128xf32>
    %235 = vector.extract_strided_slice %203 {offsets = [0, 128], sizes = [2, 128], strides = [1, 1]} : vector<2x512xf32> to vector<2x128xf32>
    %236 = arith.negf %235 : vector<2x128xf32>
    %237 = math.exp %236 : vector<2x128xf32>
    %cst_47 = arith.constant 1.000000e+00 : f32
    %238 = vector.broadcast %cst_47 : f32 to vector<2x128xf32>
    %239 = arith.addf %238, %237 : vector<2x128xf32>
    %240 = arith.divf %238, %239 : vector<2x128xf32>
    %241 = vector.extract_strided_slice %203 {offsets = [0, 256], sizes = [2, 128], strides = [1, 1]} : vector<2x512xf32> to vector<2x128xf32>
    %242 = math.tanh %241 : vector<2x128xf32>
    %243 = vector.extract_strided_slice %203 {offsets = [0, 384], sizes = [2, 128], strides = [1, 1]} : vector<2x512xf32> to vector<2x128xf32>
    %244 = arith.negf %243 : vector<2x128xf32>
    %245 = math.exp %244 : vector<2x128xf32>
    %cst_48 = arith.constant 1.000000e+00 : f32
    %246 = vector.broadcast %cst_48 : f32 to vector<2x128xf32>
    %247 = arith.addf %246, %245 : vector<2x128xf32>
    %248 = arith.divf %246, %247 : vector<2x128xf32>
    %249 = arith.mulf %240, %191 : vector<2x128xf32>
    %250 = arith.mulf %234, %242 : vector<2x128xf32>
    %251 = arith.addf %249, %250 : vector<2x128xf32>
    %252 = math.tanh %251 : vector<2x128xf32>
    %253 = arith.mulf %248, %252 : vector<2x128xf32>
    %254 = arith.maximumf %194, %228 : vector<2x128xf32>
    %255 = arith.maximumf %195, %253 : vector<2x128xf32>
    %256 = vector.extract_strided_slice %6 {offsets = [8, 0], sizes = [2, 512], strides = [1, 1]} : vector<16x1024xf32> to vector<2x512xf32>
    %257 = arith.truncf %228 : vector<2x128xf32> to vector<2x128xbf16>
    %cst_49 = arith.constant dense<0.000000e+00> : vector<2x512xf32>
    %258 = tpu.matmul %257, %7, %cst_49 {dimension_numbers = #tpu.dot_dimension_numbers<[1], [0], [0], [1], [0, 0, 1, 1], [], []>} : vector<2x128xbf16>, vector<128x512xbf16>, vector<2x512xf32> -> vector<2x512xf32>
    %259 = arith.addf %256, %258 : vector<2x512xf32>
    %260 = vector.extract_strided_slice %6 {offsets = [6, 512], sizes = [2, 512], strides = [1, 1]} : vector<16x1024xf32> to vector<2x512xf32>
    %261 = arith.truncf %253 : vector<2x128xf32> to vector<2x128xbf16>
    %cst_50 = arith.constant dense<0.000000e+00> : vector<2x512xf32>
    %262 = tpu.matmul %261, %8, %cst_50 {dimension_numbers = #tpu.dot_dimension_numbers<[1], [0], [0], [1], [0, 0, 1, 1], [], []>} : vector<2x128xbf16>, vector<128x512xbf16>, vector<2x512xf32> -> vector<2x512xf32>
    %263 = arith.addf %260, %262 : vector<2x512xf32>
    %264 = vector.extract_strided_slice %259 {offsets = [0, 0], sizes = [2, 128], strides = [1, 1]} : vector<2x512xf32> to vector<2x128xf32>
    %265 = arith.negf %264 : vector<2x128xf32>
    %266 = math.exp %265 : vector<2x128xf32>
    %cst_51 = arith.constant 1.000000e+00 : f32
    %267 = vector.broadcast %cst_51 : f32 to vector<2x128xf32>
    %268 = arith.addf %267, %266 : vector<2x128xf32>
    %269 = arith.divf %267, %268 : vector<2x128xf32>
    %270 = vector.extract_strided_slice %259 {offsets = [0, 128], sizes = [2, 128], strides = [1, 1]} : vector<2x512xf32> to vector<2x128xf32>
    %271 = arith.negf %270 : vector<2x128xf32>
    %272 = math.exp %271 : vector<2x128xf32>
    %cst_52 = arith.constant 1.000000e+00 : f32
    %273 = vector.broadcast %cst_52 : f32 to vector<2x128xf32>
    %274 = arith.addf %273, %272 : vector<2x128xf32>
    %275 = arith.divf %273, %274 : vector<2x128xf32>
    %276 = vector.extract_strided_slice %259 {offsets = [0, 256], sizes = [2, 128], strides = [1, 1]} : vector<2x512xf32> to vector<2x128xf32>
    %277 = math.tanh %276 : vector<2x128xf32>
    %278 = vector.extract_strided_slice %259 {offsets = [0, 384], sizes = [2, 128], strides = [1, 1]} : vector<2x512xf32> to vector<2x128xf32>
    %279 = arith.negf %278 : vector<2x128xf32>
    %280 = math.exp %279 : vector<2x128xf32>
    %cst_53 = arith.constant 1.000000e+00 : f32
    %281 = vector.broadcast %cst_53 : f32 to vector<2x128xf32>
    %282 = arith.addf %281, %280 : vector<2x128xf32>
    %283 = arith.divf %281, %282 : vector<2x128xf32>
    %284 = arith.mulf %275, %226 : vector<2x128xf32>
    %285 = arith.mulf %269, %277 : vector<2x128xf32>
    %286 = arith.addf %284, %285 : vector<2x128xf32>
    %287 = math.tanh %286 : vector<2x128xf32>
    %288 = arith.mulf %283, %287 : vector<2x128xf32>
    %289 = vector.extract_strided_slice %263 {offsets = [0, 0], sizes = [2, 128], strides = [1, 1]} : vector<2x512xf32> to vector<2x128xf32>
    %290 = arith.negf %289 : vector<2x128xf32>
    %291 = math.exp %290 : vector<2x128xf32>
    %cst_54 = arith.constant 1.000000e+00 : f32
    %292 = vector.broadcast %cst_54 : f32 to vector<2x128xf32>
    %293 = arith.addf %292, %291 : vector<2x128xf32>
    %294 = arith.divf %292, %293 : vector<2x128xf32>
    %295 = vector.extract_strided_slice %263 {offsets = [0, 128], sizes = [2, 128], strides = [1, 1]} : vector<2x512xf32> to vector<2x128xf32>
    %296 = arith.negf %295 : vector<2x128xf32>
    %297 = math.exp %296 : vector<2x128xf32>
    %cst_55 = arith.constant 1.000000e+00 : f32
    %298 = vector.broadcast %cst_55 : f32 to vector<2x128xf32>
    %299 = arith.addf %298, %297 : vector<2x128xf32>
    %300 = arith.divf %298, %299 : vector<2x128xf32>
    %301 = vector.extract_strided_slice %263 {offsets = [0, 256], sizes = [2, 128], strides = [1, 1]} : vector<2x512xf32> to vector<2x128xf32>
    %302 = math.tanh %301 : vector<2x128xf32>
    %303 = vector.extract_strided_slice %263 {offsets = [0, 384], sizes = [2, 128], strides = [1, 1]} : vector<2x512xf32> to vector<2x128xf32>
    %304 = arith.negf %303 : vector<2x128xf32>
    %305 = math.exp %304 : vector<2x128xf32>
    %cst_56 = arith.constant 1.000000e+00 : f32
    %306 = vector.broadcast %cst_56 : f32 to vector<2x128xf32>
    %307 = arith.addf %306, %305 : vector<2x128xf32>
    %308 = arith.divf %306, %307 : vector<2x128xf32>
    %309 = arith.mulf %300, %251 : vector<2x128xf32>
    %310 = arith.mulf %294, %302 : vector<2x128xf32>
    %311 = arith.addf %309, %310 : vector<2x128xf32>
    %312 = math.tanh %311 : vector<2x128xf32>
    %313 = arith.mulf %308, %312 : vector<2x128xf32>
    %314 = arith.maximumf %254, %288 : vector<2x128xf32>
    %315 = arith.maximumf %255, %313 : vector<2x128xf32>
    %316 = vector.extract_strided_slice %6 {offsets = [10, 0], sizes = [2, 512], strides = [1, 1]} : vector<16x1024xf32> to vector<2x512xf32>
    %317 = arith.truncf %288 : vector<2x128xf32> to vector<2x128xbf16>
    %cst_57 = arith.constant dense<0.000000e+00> : vector<2x512xf32>
    %318 = tpu.matmul %317, %7, %cst_57 {dimension_numbers = #tpu.dot_dimension_numbers<[1], [0], [0], [1], [0, 0, 1, 1], [], []>} : vector<2x128xbf16>, vector<128x512xbf16>, vector<2x512xf32> -> vector<2x512xf32>
    %319 = arith.addf %316, %318 : vector<2x512xf32>
    %320 = vector.extract_strided_slice %6 {offsets = [4, 512], sizes = [2, 512], strides = [1, 1]} : vector<16x1024xf32> to vector<2x512xf32>
    %321 = arith.truncf %313 : vector<2x128xf32> to vector<2x128xbf16>
    %cst_58 = arith.constant dense<0.000000e+00> : vector<2x512xf32>
    %322 = tpu.matmul %321, %8, %cst_58 {dimension_numbers = #tpu.dot_dimension_numbers<[1], [0], [0], [1], [0, 0, 1, 1], [], []>} : vector<2x128xbf16>, vector<128x512xbf16>, vector<2x512xf32> -> vector<2x512xf32>
    %323 = arith.addf %320, %322 : vector<2x512xf32>
    %324 = vector.extract_strided_slice %319 {offsets = [0, 0], sizes = [2, 128], strides = [1, 1]} : vector<2x512xf32> to vector<2x128xf32>
    %325 = arith.negf %324 : vector<2x128xf32>
    %326 = math.exp %325 : vector<2x128xf32>
    %cst_59 = arith.constant 1.000000e+00 : f32
    %327 = vector.broadcast %cst_59 : f32 to vector<2x128xf32>
    %328 = arith.addf %327, %326 : vector<2x128xf32>
    %329 = arith.divf %327, %328 : vector<2x128xf32>
    %330 = vector.extract_strided_slice %319 {offsets = [0, 128], sizes = [2, 128], strides = [1, 1]} : vector<2x512xf32> to vector<2x128xf32>
    %331 = arith.negf %330 : vector<2x128xf32>
    %332 = math.exp %331 : vector<2x128xf32>
    %cst_60 = arith.constant 1.000000e+00 : f32
    %333 = vector.broadcast %cst_60 : f32 to vector<2x128xf32>
    %334 = arith.addf %333, %332 : vector<2x128xf32>
    %335 = arith.divf %333, %334 : vector<2x128xf32>
    %336 = vector.extract_strided_slice %319 {offsets = [0, 256], sizes = [2, 128], strides = [1, 1]} : vector<2x512xf32> to vector<2x128xf32>
    %337 = math.tanh %336 : vector<2x128xf32>
    %338 = vector.extract_strided_slice %319 {offsets = [0, 384], sizes = [2, 128], strides = [1, 1]} : vector<2x512xf32> to vector<2x128xf32>
    %339 = arith.negf %338 : vector<2x128xf32>
    %340 = math.exp %339 : vector<2x128xf32>
    %cst_61 = arith.constant 1.000000e+00 : f32
    %341 = vector.broadcast %cst_61 : f32 to vector<2x128xf32>
    %342 = arith.addf %341, %340 : vector<2x128xf32>
    %343 = arith.divf %341, %342 : vector<2x128xf32>
    %344 = arith.mulf %335, %286 : vector<2x128xf32>
    %345 = arith.mulf %329, %337 : vector<2x128xf32>
    %346 = arith.addf %344, %345 : vector<2x128xf32>
    %347 = math.tanh %346 : vector<2x128xf32>
    %348 = arith.mulf %343, %347 : vector<2x128xf32>
    %349 = vector.extract_strided_slice %323 {offsets = [0, 0], sizes = [2, 128], strides = [1, 1]} : vector<2x512xf32> to vector<2x128xf32>
    %350 = arith.negf %349 : vector<2x128xf32>
    %351 = math.exp %350 : vector<2x128xf32>
    %cst_62 = arith.constant 1.000000e+00 : f32
    %352 = vector.broadcast %cst_62 : f32 to vector<2x128xf32>
    %353 = arith.addf %352, %351 : vector<2x128xf32>
    %354 = arith.divf %352, %353 : vector<2x128xf32>
    %355 = vector.extract_strided_slice %323 {offsets = [0, 128], sizes = [2, 128], strides = [1, 1]} : vector<2x512xf32> to vector<2x128xf32>
    %356 = arith.negf %355 : vector<2x128xf32>
    %357 = math.exp %356 : vector<2x128xf32>
    %cst_63 = arith.constant 1.000000e+00 : f32
    %358 = vector.broadcast %cst_63 : f32 to vector<2x128xf32>
    %359 = arith.addf %358, %357 : vector<2x128xf32>
    %360 = arith.divf %358, %359 : vector<2x128xf32>
    %361 = vector.extract_strided_slice %323 {offsets = [0, 256], sizes = [2, 128], strides = [1, 1]} : vector<2x512xf32> to vector<2x128xf32>
    %362 = math.tanh %361 : vector<2x128xf32>
    %363 = vector.extract_strided_slice %323 {offsets = [0, 384], sizes = [2, 128], strides = [1, 1]} : vector<2x512xf32> to vector<2x128xf32>
    %364 = arith.negf %363 : vector<2x128xf32>
    %365 = math.exp %364 : vector<2x128xf32>
    %cst_64 = arith.constant 1.000000e+00 : f32
    %366 = vector.broadcast %cst_64 : f32 to vector<2x128xf32>
    %367 = arith.addf %366, %365 : vector<2x128xf32>
    %368 = arith.divf %366, %367 : vector<2x128xf32>
    %369 = arith.mulf %360, %311 : vector<2x128xf32>
    %370 = arith.mulf %354, %362 : vector<2x128xf32>
    %371 = arith.addf %369, %370 : vector<2x128xf32>
    %372 = math.tanh %371 : vector<2x128xf32>
    %373 = arith.mulf %368, %372 : vector<2x128xf32>
    %374 = arith.maximumf %314, %348 : vector<2x128xf32>
    %375 = arith.maximumf %315, %373 : vector<2x128xf32>
    %376 = vector.extract_strided_slice %6 {offsets = [12, 0], sizes = [2, 512], strides = [1, 1]} : vector<16x1024xf32> to vector<2x512xf32>
    %377 = arith.truncf %348 : vector<2x128xf32> to vector<2x128xbf16>
    %cst_65 = arith.constant dense<0.000000e+00> : vector<2x512xf32>
    %378 = tpu.matmul %377, %7, %cst_65 {dimension_numbers = #tpu.dot_dimension_numbers<[1], [0], [0], [1], [0, 0, 1, 1], [], []>} : vector<2x128xbf16>, vector<128x512xbf16>, vector<2x512xf32> -> vector<2x512xf32>
    %379 = arith.addf %376, %378 : vector<2x512xf32>
    %380 = vector.extract_strided_slice %6 {offsets = [2, 512], sizes = [2, 512], strides = [1, 1]} : vector<16x1024xf32> to vector<2x512xf32>
    %381 = arith.truncf %373 : vector<2x128xf32> to vector<2x128xbf16>
    %cst_66 = arith.constant dense<0.000000e+00> : vector<2x512xf32>
    %382 = tpu.matmul %381, %8, %cst_66 {dimension_numbers = #tpu.dot_dimension_numbers<[1], [0], [0], [1], [0, 0, 1, 1], [], []>} : vector<2x128xbf16>, vector<128x512xbf16>, vector<2x512xf32> -> vector<2x512xf32>
    %383 = arith.addf %380, %382 : vector<2x512xf32>
    %384 = vector.extract_strided_slice %379 {offsets = [0, 0], sizes = [2, 128], strides = [1, 1]} : vector<2x512xf32> to vector<2x128xf32>
    %385 = arith.negf %384 : vector<2x128xf32>
    %386 = math.exp %385 : vector<2x128xf32>
    %cst_67 = arith.constant 1.000000e+00 : f32
    %387 = vector.broadcast %cst_67 : f32 to vector<2x128xf32>
    %388 = arith.addf %387, %386 : vector<2x128xf32>
    %389 = arith.divf %387, %388 : vector<2x128xf32>
    %390 = vector.extract_strided_slice %379 {offsets = [0, 128], sizes = [2, 128], strides = [1, 1]} : vector<2x512xf32> to vector<2x128xf32>
    %391 = arith.negf %390 : vector<2x128xf32>
    %392 = math.exp %391 : vector<2x128xf32>
    %cst_68 = arith.constant 1.000000e+00 : f32
    %393 = vector.broadcast %cst_68 : f32 to vector<2x128xf32>
    %394 = arith.addf %393, %392 : vector<2x128xf32>
    %395 = arith.divf %393, %394 : vector<2x128xf32>
    %396 = vector.extract_strided_slice %379 {offsets = [0, 256], sizes = [2, 128], strides = [1, 1]} : vector<2x512xf32> to vector<2x128xf32>
    %397 = math.tanh %396 : vector<2x128xf32>
    %398 = vector.extract_strided_slice %379 {offsets = [0, 384], sizes = [2, 128], strides = [1, 1]} : vector<2x512xf32> to vector<2x128xf32>
    %399 = arith.negf %398 : vector<2x128xf32>
    %400 = math.exp %399 : vector<2x128xf32>
    %cst_69 = arith.constant 1.000000e+00 : f32
    %401 = vector.broadcast %cst_69 : f32 to vector<2x128xf32>
    %402 = arith.addf %401, %400 : vector<2x128xf32>
    %403 = arith.divf %401, %402 : vector<2x128xf32>
    %404 = arith.mulf %395, %346 : vector<2x128xf32>
    %405 = arith.mulf %389, %397 : vector<2x128xf32>
    %406 = arith.addf %404, %405 : vector<2x128xf32>
    %407 = math.tanh %406 : vector<2x128xf32>
    %408 = arith.mulf %403, %407 : vector<2x128xf32>
    %409 = vector.extract_strided_slice %383 {offsets = [0, 0], sizes = [2, 128], strides = [1, 1]} : vector<2x512xf32> to vector<2x128xf32>
    %410 = arith.negf %409 : vector<2x128xf32>
    %411 = math.exp %410 : vector<2x128xf32>
    %cst_70 = arith.constant 1.000000e+00 : f32
    %412 = vector.broadcast %cst_70 : f32 to vector<2x128xf32>
    %413 = arith.addf %412, %411 : vector<2x128xf32>
    %414 = arith.divf %412, %413 : vector<2x128xf32>
    %415 = vector.extract_strided_slice %383 {offsets = [0, 128], sizes = [2, 128], strides = [1, 1]} : vector<2x512xf32> to vector<2x128xf32>
    %416 = arith.negf %415 : vector<2x128xf32>
    %417 = math.exp %416 : vector<2x128xf32>
    %cst_71 = arith.constant 1.000000e+00 : f32
    %418 = vector.broadcast %cst_71 : f32 to vector<2x128xf32>
    %419 = arith.addf %418, %417 : vector<2x128xf32>
    %420 = arith.divf %418, %419 : vector<2x128xf32>
    %421 = vector.extract_strided_slice %383 {offsets = [0, 256], sizes = [2, 128], strides = [1, 1]} : vector<2x512xf32> to vector<2x128xf32>
    %422 = math.tanh %421 : vector<2x128xf32>
    %423 = vector.extract_strided_slice %383 {offsets = [0, 384], sizes = [2, 128], strides = [1, 1]} : vector<2x512xf32> to vector<2x128xf32>
    %424 = arith.negf %423 : vector<2x128xf32>
    %425 = math.exp %424 : vector<2x128xf32>
    %cst_72 = arith.constant 1.000000e+00 : f32
    %426 = vector.broadcast %cst_72 : f32 to vector<2x128xf32>
    %427 = arith.addf %426, %425 : vector<2x128xf32>
    %428 = arith.divf %426, %427 : vector<2x128xf32>
    %429 = arith.mulf %420, %371 : vector<2x128xf32>
    %430 = arith.mulf %414, %422 : vector<2x128xf32>
    %431 = arith.addf %429, %430 : vector<2x128xf32>
    %432 = math.tanh %431 : vector<2x128xf32>
    %433 = arith.mulf %428, %432 : vector<2x128xf32>
    %434 = arith.maximumf %374, %408 : vector<2x128xf32>
    %435 = arith.maximumf %375, %433 : vector<2x128xf32>
    %436 = vector.extract_strided_slice %6 {offsets = [14, 0], sizes = [2, 512], strides = [1, 1]} : vector<16x1024xf32> to vector<2x512xf32>
    %437 = arith.truncf %408 : vector<2x128xf32> to vector<2x128xbf16>
    %cst_73 = arith.constant dense<0.000000e+00> : vector<2x512xf32>
    %438 = tpu.matmul %437, %7, %cst_73 {dimension_numbers = #tpu.dot_dimension_numbers<[1], [0], [0], [1], [0, 0, 1, 1], [], []>} : vector<2x128xbf16>, vector<128x512xbf16>, vector<2x512xf32> -> vector<2x512xf32>
    %439 = arith.addf %436, %438 : vector<2x512xf32>
    %440 = vector.extract_strided_slice %6 {offsets = [0, 512], sizes = [2, 512], strides = [1, 1]} : vector<16x1024xf32> to vector<2x512xf32>
    %441 = arith.truncf %433 : vector<2x128xf32> to vector<2x128xbf16>
    %cst_74 = arith.constant dense<0.000000e+00> : vector<2x512xf32>
    %442 = tpu.matmul %441, %8, %cst_74 {dimension_numbers = #tpu.dot_dimension_numbers<[1], [0], [0], [1], [0, 0, 1, 1], [], []>} : vector<2x128xbf16>, vector<128x512xbf16>, vector<2x512xf32> -> vector<2x512xf32>
    %443 = arith.addf %440, %442 : vector<2x512xf32>
    %444 = vector.extract_strided_slice %439 {offsets = [0, 0], sizes = [2, 128], strides = [1, 1]} : vector<2x512xf32> to vector<2x128xf32>
    %445 = arith.negf %444 : vector<2x128xf32>
    %446 = math.exp %445 : vector<2x128xf32>
    %cst_75 = arith.constant 1.000000e+00 : f32
    %447 = vector.broadcast %cst_75 : f32 to vector<2x128xf32>
    %448 = arith.addf %447, %446 : vector<2x128xf32>
    %449 = arith.divf %447, %448 : vector<2x128xf32>
    %450 = vector.extract_strided_slice %439 {offsets = [0, 128], sizes = [2, 128], strides = [1, 1]} : vector<2x512xf32> to vector<2x128xf32>
    %451 = arith.negf %450 : vector<2x128xf32>
    %452 = math.exp %451 : vector<2x128xf32>
    %cst_76 = arith.constant 1.000000e+00 : f32
    %453 = vector.broadcast %cst_76 : f32 to vector<2x128xf32>
    %454 = arith.addf %453, %452 : vector<2x128xf32>
    %455 = arith.divf %453, %454 : vector<2x128xf32>
    %456 = vector.extract_strided_slice %439 {offsets = [0, 256], sizes = [2, 128], strides = [1, 1]} : vector<2x512xf32> to vector<2x128xf32>
    %457 = math.tanh %456 : vector<2x128xf32>
    %458 = vector.extract_strided_slice %439 {offsets = [0, 384], sizes = [2, 128], strides = [1, 1]} : vector<2x512xf32> to vector<2x128xf32>
    %459 = arith.negf %458 : vector<2x128xf32>
    %460 = math.exp %459 : vector<2x128xf32>
    %cst_77 = arith.constant 1.000000e+00 : f32
    %461 = vector.broadcast %cst_77 : f32 to vector<2x128xf32>
    %462 = arith.addf %461, %460 : vector<2x128xf32>
    %463 = arith.divf %461, %462 : vector<2x128xf32>
    %464 = arith.mulf %455, %406 : vector<2x128xf32>
    %465 = arith.mulf %449, %457 : vector<2x128xf32>
    %466 = arith.addf %464, %465 : vector<2x128xf32>
    %467 = math.tanh %466 : vector<2x128xf32>
    %468 = arith.mulf %463, %467 : vector<2x128xf32>
    %469 = vector.extract_strided_slice %443 {offsets = [0, 0], sizes = [2, 128], strides = [1, 1]} : vector<2x512xf32> to vector<2x128xf32>
    %470 = arith.negf %469 : vector<2x128xf32>
    %471 = math.exp %470 : vector<2x128xf32>
    %cst_78 = arith.constant 1.000000e+00 : f32
    %472 = vector.broadcast %cst_78 : f32 to vector<2x128xf32>
    %473 = arith.addf %472, %471 : vector<2x128xf32>
    %474 = arith.divf %472, %473 : vector<2x128xf32>
    %475 = vector.extract_strided_slice %443 {offsets = [0, 128], sizes = [2, 128], strides = [1, 1]} : vector<2x512xf32> to vector<2x128xf32>
    %476 = arith.negf %475 : vector<2x128xf32>
    %477 = math.exp %476 : vector<2x128xf32>
    %cst_79 = arith.constant 1.000000e+00 : f32
    %478 = vector.broadcast %cst_79 : f32 to vector<2x128xf32>
    %479 = arith.addf %478, %477 : vector<2x128xf32>
    %480 = arith.divf %478, %479 : vector<2x128xf32>
    %481 = vector.extract_strided_slice %443 {offsets = [0, 256], sizes = [2, 128], strides = [1, 1]} : vector<2x512xf32> to vector<2x128xf32>
    %482 = math.tanh %481 : vector<2x128xf32>
    %483 = vector.extract_strided_slice %443 {offsets = [0, 384], sizes = [2, 128], strides = [1, 1]} : vector<2x512xf32> to vector<2x128xf32>
    %484 = arith.negf %483 : vector<2x128xf32>
    %485 = math.exp %484 : vector<2x128xf32>
    %cst_80 = arith.constant 1.000000e+00 : f32
    %486 = vector.broadcast %cst_80 : f32 to vector<2x128xf32>
    %487 = arith.addf %486, %485 : vector<2x128xf32>
    %488 = arith.divf %486, %487 : vector<2x128xf32>
    %489 = arith.mulf %480, %431 : vector<2x128xf32>
    %490 = arith.mulf %474, %482 : vector<2x128xf32>
    %491 = arith.addf %489, %490 : vector<2x128xf32>
    %492 = math.tanh %491 : vector<2x128xf32>
    %493 = arith.mulf %488, %492 : vector<2x128xf32>
    %494 = arith.maximumf %434, %468 : vector<2x128xf32>
    %495 = arith.maximumf %435, %493 : vector<2x128xf32>
    %496 = arith.truncf %494 : vector<2x128xf32> to vector<2x128xbf16>
    %c0_81 = arith.constant 0 : index
    %c0_82 = arith.constant 0 : index
    %497 = vector.load %arg5[%c0_81, %c0_82] : memref<256x32xbf16, #tpu.memory_space<vmem>>, vector<128x32xbf16>
    %cst_83 = arith.constant dense<0.000000e+00> : vector<2x32xf32>
    %498 = tpu.matmul %496, %497, %cst_83 {dimension_numbers = #tpu.dot_dimension_numbers<[1], [0], [0], [1], [0, 0, 1, 1], [], []>} : vector<2x128xbf16>, vector<128x32xbf16>, vector<2x32xf32> -> vector<2x32xf32>
    %499 = arith.truncf %495 : vector<2x128xf32> to vector<2x128xbf16>
    %c128_84 = arith.constant 128 : index
    %c0_85 = arith.constant 0 : index
    %500 = vector.load %arg5[%c128_84, %c0_85] : memref<256x32xbf16, #tpu.memory_space<vmem>>, vector<128x32xbf16>
    %cst_86 = arith.constant dense<0.000000e+00> : vector<2x32xf32>
    %501 = tpu.matmul %499, %500, %cst_86 {dimension_numbers = #tpu.dot_dimension_numbers<[1], [0], [0], [1], [0, 0, 1, 1], [], []>} : vector<2x128xbf16>, vector<128x32xbf16>, vector<2x32xf32> -> vector<2x32xf32>
    %502 = arith.addf %498, %501 : vector<2x32xf32>
    %503 = vector.extract_strided_slice %9 {offsets = [0, 0], sizes = [1, 32], strides = [1, 1]} : vector<8x32xf32> to vector<1x32xf32>
    %504 = vector.broadcast %503 : vector<1x32xf32> to vector<2x32xf32>
    %505 = arith.addf %502, %504 : vector<2x32xf32>
    %506 = math.tanh %505 : vector<2x32xf32>
    %507 = vector.extract_strided_slice %9 {offsets = [1, 0], sizes = [1, 32], strides = [1, 1]} : vector<8x32xf32> to vector<1x32xf32>
    %508 = vector.broadcast %507 : vector<1x32xf32> to vector<2x32xf32>
    %509 = arith.mulf %506, %508 : vector<2x32xf32>
    %cst_87 = arith.constant dense<0.000000e+00> : vector<2xf32>
    %510 = vector.multi_reduction <add>, %509, %cst_87 [1] : vector<2x32xf32> to vector<2xf32>
    %511 = vector.shape_cast %510 : vector<2xf32> to vector<2x1xf32>
    %512 = vector.extract_strided_slice %9 {offsets = [2, 0], sizes = [1, 1], strides = [1, 1]} : vector<8x32xf32> to vector<1x1xf32>
    %513 = vector.broadcast %512 : vector<1x1xf32> to vector<2x1xf32>
    %514 = arith.addf %511, %513 : vector<2x1xf32>
    %515 = arith.negf %514 : vector<2x1xf32>
    %516 = math.exp %515 : vector<2x1xf32>
    %cst_88 = arith.constant 1.000000e+00 : f32
    %517 = vector.broadcast %cst_88 : f32 to vector<2x1xf32>
    %518 = arith.addf %517, %516 : vector<2x1xf32>
    %519 = arith.divf %517, %518 : vector<2x1xf32>
    %c0_89 = arith.constant 0 : index
    %c0_90 = arith.constant 0 : index
    %c0_91 = arith.constant 0 : index
    %520 = vector.load %arg7[%c0_89, %c0_90, %c0_91] : memref<1x2x1xf32, #tpu.memory_space<vmem>>, vector<1x2x1xf32>
    %521 = vector.shape_cast %520 : vector<1x2x1xf32> to vector<2x1xf32>
    %522 = vector.shape_cast %519 : vector<2x1xf32> to vector<1x2x1xf32>
    tpu.vector_store %arg7[%c0_89, %c0_90, %c0_91], %522 {strides = array<i32>} : memref<1x2x1xf32, #tpu.memory_space<vmem>>, vector<1x2x1xf32>,
    return
  }
  func.func @transform_0(%arg0: i32) -> (i32, i32, i32) {
    %c0_i32 = arith.constant 0 : i32
    %c0_i32_0 = arith.constant 0 : i32
    %c0_i32_1 = arith.constant 0 : i32
    return %arg0, %c0_i32, %c0_i32_0 : i32, i32, i32
  }
  func.func @transform_1(%arg0: i32) -> (i32, i32) {
    %c0_i32 = arith.constant 0 : i32
    %c0_i32_0 = arith.constant 0 : i32
    %c0_i32_1 = arith.constant 0 : i32
    return %c0_i32, %c0_i32_0 : i32, i32
  }
  func.func @transform_2(%arg0: i32) -> (i32, i32) {
    %c0_i32 = arith.constant 0 : i32
    %c0_i32_0 = arith.constant 0 : i32
    %c0_i32_1 = arith.constant 0 : i32
    return %c0_i32, %c0_i32_0 : i32, i32
  }
  func.func @transform_3(%arg0: i32) -> (i32, i32) {
    %c0_i32 = arith.constant 0 : i32
    %c0_i32_0 = arith.constant 0 : i32
    %c0_i32_1 = arith.constant 0 : i32
    return %c0_i32, %c0_i32_0 : i32, i32
  }
  func.func @transform_4(%arg0: i32) -> (i32, i32) {
    %c0_i32 = arith.constant 0 : i32
    %c0_i32_0 = arith.constant 0 : i32
    %c0_i32_1 = arith.constant 0 : i32
    return %c0_i32, %c0_i32_0 : i32, i32
  }
  func.func @transform_5(%arg0: i32) -> (i32, i32) {
    %c0_i32 = arith.constant 0 : i32
    %c0_i32_0 = arith.constant 0 : i32
    %c0_i32_1 = arith.constant 0 : i32
    return %c0_i32, %c0_i32_0 : i32, i32
  }
  func.func @transform_6(%arg0: i32) -> (i32, i32, i32) {
    %c0_i32 = arith.constant 0 : i32
    %c0_i32_0 = arith.constant 0 : i32
    %c0_i32_1 = arith.constant 0 : i32
    return %arg0, %c0_i32, %c0_i32_0 : i32, i32, i32
  }
}

</mosaic_0001>

<llo_original>
// kernel: tpu_custom_call.1
$region0: #{tpu_custom_call.1}
  #allocation0 [shape = 'u32[]', space=smem, size = 0x4, offset = 0x4, fixed_abs, tag = 'smem constant byte address 0x4 - core index']
  #allocation1 [shape = 'u32[72,128]{1,0:T(1,128)}', space=vmem, size = 0x9000, scoped, tag = 'internal scratch']
  %s0 = inlined_call_operand.vmem [shape: bf16[1,16,32], index: 0, kind: input, shape index: {}]
  %s1 = inlined_call_operand.vmem [shape: bf16[32,1024], index: 1, kind: input, shape index: {}]
  %s2 = inlined_call_operand.vmem [shape: f32[1,1024], index: 2, kind: input, shape index: {}]
  %s3 = inlined_call_operand.hbm [shape: bf16[256,512], index: 3, kind: input, shape index: {}]
  %s4 = inlined_call_operand.vmem [shape: bf16[256,32], index: 4, kind: input, shape index: {}]
  %s5 = inlined_call_operand.vmem [shape: f32[8,32], index: 5, kind: input, shape index: {}]
  %s6 = inlined_call_operand.vmem [shape: f32[1,2,1], index: 6, kind: output, shape index: {}]
  %s7 = sld [smem:[#allocation0]]
  $region38: #{tpu_custom_call.1} parent=0
    _
  %s9 = ssub.s32 1, %s7
  %s10 = scalar_select 0, %s9, %s7
  $region1: #{tpu_custom_call.1} parent=0
    #allocation2 [shape = 'u8[262144]{0}', space=vmem, size = 0x40000, scoped, tag = 'input window, operand 3, single buffered']
    #allocation3 [shape = 's32[1]{0}', space=sflag, size = 0x4, scoped, tag = 'scoped memory for tpu_custom_call.1']
    %11 = vsyncpa [#allocation3], 0
    // Predicated region
    $region2: #{tpu_custom_call.1} parent=1 // pred_check
      _
    $region3: #{tpu_custom_call.1} parent=1 // pred_check_branch
      %13 = sbr.rel (0) target = $region5
    $region4: #{tpu_custom_call.1} parent=1 // pred_region
      _
    $region5: #{tpu_custom_call.1} parent=1 // pred_fallthru
      _
    // Predicated region
    $region6: #{tpu_custom_call.1} parent=1 // pred_check
      _
    $region7: #{tpu_custom_call.1} parent=1 // pred_check_branch
      %15 = sbr.rel (0) target = $region9
    $region8: #{tpu_custom_call.1} parent=1 // pred_region
      _
    $region9: #{tpu_custom_call.1} parent=1 // pred_fallthru
      _
    // Predicated region
    $region10: #{tpu_custom_call.1} parent=1 // pred_check
      _
    $region11: #{tpu_custom_call.1} parent=1 // pred_check_branch
      %17 = sbr.rel (0) target = $region13
    $region12: #{tpu_custom_call.1} parent=1 // pred_region
      _
    $region13: #{tpu_custom_call.1} parent=1 // pred_fallthru
      _
    // Predicated region
    $region14: #{tpu_custom_call.1} parent=1 // pred_check
      _
    $region15: #{tpu_custom_call.1} parent=1 // pred_check_branch
      %19 = sbr.rel (0) target = $region17
    $region16: #{tpu_custom_call.1} parent=1 // pred_region
      %21 = vsyncadd [#allocation3], 0
      %s22 = sshll.u32 %s3, 4
      %s23 = int_to_ptr.hbm [resolvable:$true] %s22
      %s24 = sshll.u32 [#allocation2], 4
      %s25 = int_to_ptr.vmem [resolvable:$true] %s24
      %30 = dma.hbm_to_vmem [thread:$0]  %s23, 8192, %s25, [#allocation3], 256, 256, 16
    $region17: #{tpu_custom_call.1} parent=1 // pred_fallthru
      _
    // Predicated region
    $region18: #{tpu_custom_call.1} parent=1 // pred_check
      _
    $region19: #{tpu_custom_call.1} parent=1 // pred_check_branch
      %32 = sbr.rel (0) target = $region21
    $region20: #{tpu_custom_call.1} parent=1 // pred_region
      _
    $region21: #{tpu_custom_call.1} parent=1 // pred_fallthru
      _
    // Predicated region
    $region22: #{tpu_custom_call.1} parent=1 // pred_check
      _
    $region23: #{tpu_custom_call.1} parent=1 // pred_check_branch
      %34 = sbr.rel (0) target = $region25
    $region24: #{tpu_custom_call.1} parent=1 // pred_region
      _
    $region25: #{tpu_custom_call.1} parent=1 // pred_fallthru
      _
    // Predicated region
    $region26: #{tpu_custom_call.1} parent=1 // pred_check
      _
    $region27: #{tpu_custom_call.1} parent=1 // pred_check_branch
      %36 = sbr.rel (0) target = $region29
    $region28: #{tpu_custom_call.1} parent=1 // pred_region
      %38 = dma.done [#allocation3], 8192
    $region29: #{tpu_custom_call.1} parent=1 // pred_fallthru
      _
    %v40 = vld [vmem:[%s0] sm:$0xf]
    %v41 = vld [vmem:[%s0 + $0x4] sm:$0xf]
    %v42 = vld [vmem:[%s1] sm:$0xff]
    %v43 = vld [vmem:[%s1 + $0x8] sm:$0xff]
    %v44 = vld [vmem:[%s1 + $0x10] sm:$0xff]
    %v45 = vld [vmem:[%s1 + $0x18] sm:$0xff]
    %v46 = vld [vmem:[%s1 + $0x20] sm:$0xff]
    %v47 = vld [vmem:[%s1 + $0x28] sm:$0xff]
    %v48 = vld [vmem:[%s1 + $0x30] sm:$0xff]
    %v49 = vld [vmem:[%s1 + $0x38] sm:$0xff]
    %v50 = vld [vmem:[%s1 + $0x40] sm:$0xff]
    %v51 = vld [vmem:[%s1 + $0x48] sm:$0xff]
    %v52 = vld [vmem:[%s1 + $0x50] sm:$0xff]
    %v53 = vld [vmem:[%s1 + $0x58] sm:$0xff]
    %v54 = vld [vmem:[%s1 + $0x60] sm:$0xff]
    %v55 = vld [vmem:[%s1 + $0x68] sm:$0xff]
    %v56 = vld [vmem:[%s1 + $0x70] sm:$0xff]
    %v57 = vld [vmem:[%s1 + $0x78] sm:$0xff]
    %v58 = vld [vmem:[%s2] sm:$0xff]
    %v60 = vperm.slane %v58, 0
    %v61 = vperm.slane %v58, 1
    %v62 = vperm.slane %v58, 2
    %v63 = vperm.slane %v58, 3
    %v64 = vperm.slane %v58, 4
    %v65 = vperm.slane %v58, 5
    %v66 = vperm.slane %v58, 6
    %v67 = vperm.slane %v58, 7
    %v78 = vunpack.c.l.b16 %v40
    %v79 = vunpack.c.l.b16 %v41
    %v80 = vpack.c.b16 %v79, %v78
    %v97 = vunpack.c.l.b16 %v42
    %v98 = vunpack.c.h.b16 %v42
    %v99 = vunpack.c.l.b16 %v43
    %v100 = vunpack.c.h.b16 %v43
    %v101 = vunpack.c.l.b16 %v44
    %v102 = vunpack.c.h.b16 %v44
    %v103 = vunpack.c.l.b16 %v45
    %v104 = vunpack.c.h.b16 %v45
    %v105 = vunpack.c.l.b16 %v46
    %v106 = vunpack.c.h.b16 %v46
    %v107 = vunpack.c.l.b16 %v47
    %v108 = vunpack.c.h.b16 %v47
    %v109 = vunpack.c.l.b16 %v48
    %v110 = vunpack.c.h.b16 %v48
    %v111 = vunpack.c.l.b16 %v49
    %v112 = vunpack.c.h.b16 %v49
    %v113 = vunpack.c.l.b16 %v50
    %v114 = vunpack.c.h.b16 %v50
    %v115 = vunpack.c.l.b16 %v51
    %v116 = vunpack.c.h.b16 %v51
    %v117 = vunpack.c.l.b16 %v52
    %v118 = vunpack.c.h.b16 %v52
    %v119 = vunpack.c.l.b16 %v53
    %v120 = vunpack.c.h.b16 %v53
    %v121 = vunpack.c.l.b16 %v54
    %v122 = vunpack.c.h.b16 %v54
    %v123 = vunpack.c.l.b16 %v55
    %v124 = vunpack.c.h.b16 %v55
    %v125 = vunpack.c.l.b16 %v56
    %v126 = vunpack.c.h.b16 %v56
    %v127 = vunpack.c.l.b16 %v57
    %v128 = vunpack.c.h.b16 %v57
    %v129 = vpack.c.b16 %v105, %v97
    %v130 = vpack.c.b16 %v106, %v98
    %v131 = vpack.c.b16 %v107, %v99
    %v132 = vpack.c.b16 %v108, %v100
    %v133 = vpack.c.b16 %v109, %v101
    %v134 = vpack.c.b16 %v110, %v102
    %v135 = vpack.c.b16 %v111, %v103
    %v136 = vpack.c.b16 %v112, %v104
    %v137 = vpack.c.b16 %v121, %v113
    %v138 = vpack.c.b16 %v122, %v114
    %v139 = vpack.c.b16 %v123, %v115
    %v140 = vpack.c.b16 %v124, %v116
    %v141 = vpack.c.b16 %v125, %v117
    %v142 = vpack.c.b16 %v126, %v118
    %v143 = vpack.c.b16 %v127, %v119
    %v144 = vpack.c.b16 %v128, %v120
    %vm161 = vcmask 261120
    %v163 = vsel %vm161, %v80, 0
    %165 = vmatpush.bf16.msra.mxu0 0
    %166 = vmatpush.bf16.msra.mxu0 0
    %167 = vmatpush.bf16.msra.mxu0 0
    %168 = vmatpush.bf16.msra.mxu0 0
    %169 = vmatpush.bf16.msra.mxu0 0
    %170 = vmatpush.bf16.msra.mxu0 0
    %171 = vmatpush.bf16.msra.mxu0 %v137
    %172 = vmatpush.bf16.msra.mxu0 %v129
    %173 = vmatmul.bf16.gmra.mxu0 %v163
    %v174 = vpop.f32.mrf.mxu0
    %v175 = vadd.f32 %v60, %v174
    %v176 = vpop.f32.mrf.mxu0
    %v177 = vadd.f32 %v60, %v176
    %178 = vdwg.mxu0
    %179 = vmatpush.bf16.msra.mxu0 0
    %180 = vmatpush.bf16.msra.mxu0 0
    %181 = vmatpush.bf16.msra.mxu0 0
    %182 = vmatpush.bf16.msra.mxu0 0
    %183 = vmatpush.bf16.msra.mxu0 0
    %184 = vmatpush.bf16.msra.mxu0 0
    %185 = vmatpush.bf16.msra.mxu0 %v138
    %186 = vmatpush.bf16.msra.mxu0 %v130
    %187 = vmatmul.bf16.gmra.mxu0 %v163
    %v188 = vpop.f32.mrf.mxu0
    %v189 = vadd.f32 %v61, %v188
    %v190 = vpop.f32.mrf.mxu0
    %v191 = vadd.f32 %v61, %v190
    %192 = vdwg.mxu0
    %193 = vmatpush.bf16.msra.mxu0 0
    %194 = vmatpush.bf16.msra.mxu0 0
    %195 = vmatpush.bf16.msra.mxu0 0
    %196 = vmatpush.bf16.msra.mxu0 0
    %197 = vmatpush.bf16.msra.mxu0 0
    %198 = vmatpush.bf16.msra.mxu0 0
    %199 = vmatpush.bf16.msra.mxu0 %v139
    %200 = vmatpush.bf16.msra.mxu0 %v131
    %201 = vmatmul.bf16.gmra.mxu0 %v163
    %v202 = vpop.f32.mrf.mxu0
    %v203 = vadd.f32 %v62, %v202
    %v204 = vpop.f32.mrf.mxu0
    %v205 = vadd.f32 %v62, %v204
    %206 = vdwg.mxu0
    %207 = vmatpush.bf16.msra.mxu0 0
    %208 = vmatpush.bf16.msra.mxu0 0
    %209 = vmatpush.bf16.msra.mxu0 0
    %210 = vmatpush.bf16.msra.mxu0 0
    %211 = vmatpush.bf16.msra.mxu0 0
    %212 = vmatpush.bf16.msra.mxu0 0
    %213 = vmatpush.bf16.msra.mxu0 %v140
    %214 = vmatpush.bf16.msra.mxu0 %v132
    %215 = vmatmul.bf16.gmra.mxu0 %v163
    %v216 = vpop.f32.mrf.mxu0
    %v217 = vadd.f32 %v63, %v216
    %v218 = vpop.f32.mrf.mxu0
    %v219 = vadd.f32 %v63, %v218
    %220 = vdwg.mxu0
    %221 = vmatpush.bf16.msra.mxu0 0
    %222 = vmatpush.bf16.msra.mxu0 0
    %223 = vmatpush.bf16.msra.mxu0 0
    %224 = vmatpush.bf16.msra.mxu0 0
    %225 = vmatpush.bf16.msra.mxu0 0
    %226 = vmatpush.bf16.msra.mxu0 0
    %227 = vmatpush.bf16.msra.mxu0 %v141
    %228 = vmatpush.bf16.msra.mxu0 %v133
    %229 = vmatmul.bf16.gmra.mxu0 %v163
    %v230 = vpop.f32.mrf.mxu0
    %v231 = vadd.f32 %v64, %v230
    %v232 = vpop.f32.mrf.mxu0
    %v233 = vadd.f32 %v64, %v232
    %234 = vdwg.mxu0
    %235 = vmatpush.bf16.msra.mxu0 0
    %236 = vmatpush.bf16.msra.mxu0 0
    %237 = vmatpush.bf16.msra.mxu0 0
    %238 = vmatpush.bf16.msra.mxu0 0
    %239 = vmatpush.bf16.msra.mxu0 0
    %240 = vmatpush.bf16.msra.mxu0 0
    %241 = vmatpush.bf16.msra.mxu0 %v142
    %242 = vmatpush.bf16.msra.mxu0 %v134
    %243 = vmatmul.bf16.gmra.mxu0 %v163
    %v244 = vpop.f32.mrf.mxu0
    %v245 = vadd.f32 %v65, %v244
    %v246 = vpop.f32.mrf.mxu0
    %v247 = vadd.f32 %v65, %v246
    %248 = vdwg.mxu0
    %249 = vmatpush.bf16.msra.mxu0 0
    %250 = vmatpush.bf16.msra.mxu0 0
    %251 = vmatpush.bf16.msra.mxu0 0
    %252 = vmatpush.bf16.msra.mxu0 0
    %253 = vmatpush.bf16.msra.mxu0 0
    %254 = vmatpush.bf16.msra.mxu0 0
    %255 = vmatpush.bf16.msra.mxu0 %v143
    %256 = vmatpush.bf16.msra.mxu0 %v135
    %257 = vmatmul.bf16.gmra.mxu0 %v163
    %v258 = vpop.f32.mrf.mxu0
    %v259 = vadd.f32 %v66, %v258
    %v260 = vpop.f32.mrf.mxu0
    %v261 = vadd.f32 %v66, %v260
    %262 = vdwg.mxu0
    %263 = vmatpush.bf16.msra.mxu0 0
    %264 = vmatpush.bf16.msra.mxu0 0
    %265 = vmatpush.bf16.msra.mxu0 0
    %266 = vmatpush.bf16.msra.mxu0 0
    %267 = vmatpush.bf16.msra.mxu0 0
    %268 = vmatpush.bf16.msra.mxu0 0
    %269 = vmatpush.bf16.msra.mxu0 %v144
    %270 = vmatpush.bf16.msra.mxu0 %v136
    %271 = vmatmul.bf16.gmra.mxu0 %v163
    %v272 = vpop.f32.mrf.mxu0
    %v273 = vadd.f32 %v67, %v272
    %v274 = vpop.f32.mrf.mxu0
    %v275 = vadd.f32 %v67, %v274
    %276 = vdwg.mxu0
    %v277 = vld [vmem:[#allocation2] sm:$0xff]
    %v278 = vld [vmem:[#allocation2 + $0x8] sm:$0xff]
    %v279 = vld [vmem:[#allocation2 + $0x10] sm:$0xff]
    %v280 = vld [vmem:[#allocation2 + $0x18] sm:$0xff]
    %v281 = vld [vmem:[#allocation2 + $0x20] sm:$0xff]
    %v282 = vld [vmem:[#allocation2 + $0x28] sm:$0xff]
    %v283 = vld [vmem:[#allocation2 + $0x30] sm:$0xff]
    %v284 = vld [vmem:[#allocation2 + $0x38] sm:$0xff]
    %v285 = vld [vmem:[#allocation2 + $0x40] sm:$0xff]
    %v286 = vld [vmem:[#allocation2 + $0x48] sm:$0xff]
    %v287 = vld [vmem:[#allocation2 + $0x50] sm:$0xff]
    %v288 = vld [vmem:[#allocation2 + $0x58] sm:$0xff]
    %v289 = vld [vmem:[#allocation2 + $0x60] sm:$0xff]
    %v290 = vld [vmem:[#allocation2 + $0x68] sm:$0xff]
    %v291 = vld [vmem:[#allocation2 + $0x70] sm:$0xff]
    %v292 = vld [vmem:[#allocation2 + $0x78] sm:$0xff]
    %v293 = vld [vmem:[#allocation2 + $0x80] sm:$0xff]
    %v294 = vld [vmem:[#allocation2 + $0x88] sm:$0xff]
    %v295 = vld [vmem:[#allocation2 + $0x90] sm:$0xff]
    %v296 = vld [vmem:[#allocation2 + $0x98] sm:$0xff]
    %v297 = vld [vmem:[#allocation2 + $0xa0] sm:$0xff]
    %v298 = vld [vmem:[#allocation2 + $0xa8] sm:$0xff]
    %v299 = vld [vmem:[#allocation2 + $0xb0] sm:$0xff]
    %v300 = vld [vmem:[#allocation2 + $0xb8] sm:$0xff]
    %v301 = vld [vmem:[#allocation2 + $0xc0] sm:$0xff]
    %v302 = vld [vmem:[#allocation2 + $0xc8] sm:$0xff]
    %v303 = vld [vmem:[#allocation2 + $0xd0] sm:$0xff]
    %v304 = vld [vmem:[#allocation2 + $0xd8] sm:$0xff]
    %v305 = vld [vmem:[#allocation2 + $0xe0] sm:$0xff]
    %v306 = vld [vmem:[#allocation2 + $0xe8] sm:$0xff]
    %v307 = vld [vmem:[#allocation2 + $0xf0] sm:$0xff]
    %v308 = vld [vmem:[#allocation2 + $0xf8] sm:$0xff]
    %v309 = vld [vmem:[#allocation2 + $0x100] sm:$0xff]
    %v310 = vld [vmem:[#allocation2 + $0x108] sm:$0xff]
    %v311 = vld [vmem:[#allocation2 + $0x110] sm:$0xff]
    %v312 = vld [vmem:[#allocation2 + $0x118] sm:$0xff]
    %v313 = vld [vmem:[#allocation2 + $0x120] sm:$0xff]
    %v314 = vld [vmem:[#allocation2 + $0x128] sm:$0xff]
    %v315 = vld [vmem:[#allocation2 + $0x130] sm:$0xff]
    %v316 = vld [vmem:[#allocation2 + $0x138] sm:$0xff]
    %v317 = vld [vmem:[#allocation2 + $0x140] sm:$0xff]
    %v318 = vld [vmem:[#allocation2 + $0x148] sm:$0xff]
    %v319 = vld [vmem:[#allocation2 + $0x150] sm:$0xff]
    %v320 = vld [vmem:[#allocation2 + $0x158] sm:$0xff]
    %v321 = vld [vmem:[#allocation2 + $0x160] sm:$0xff]
    %v322 = vld [vmem:[#allocation2 + $0x168] sm:$0xff]
    %v323 = vld [vmem:[#allocation2 + $0x170] sm:$0xff]
    %v324 = vld [vmem:[#allocation2 + $0x178] sm:$0xff]
    %v325 = vld [vmem:[#allocation2 + $0x180] sm:$0xff]
    %v326 = vld [vmem:[#allocation2 + $0x188] sm:$0xff]
    %v327 = vld [vmem:[#allocation2 + $0x190] sm:$0xff]
    %v328 = vld [vmem:[#allocation2 + $0x198] sm:$0xff]
    %v329 = vld [vmem:[#allocation2 + $0x1a0] sm:$0xff]
    %v330 = vld [vmem:[#allocation2 + $0x1a8] sm:$0xff]
    %v331 = vld [vmem:[#allocation2 + $0x1b0] sm:$0xff]
    %v332 = vld [vmem:[#allocation2 + $0x1b8] sm:$0xff]
    %v333 = vld [vmem:[#allocation2 + $0x1c0] sm:$0xff]
    %v334 = vld [vmem:[#allocation2 + $0x1c8] sm:$0xff]
    %v335 = vld [vmem:[#allocation2 + $0x1d0] sm:$0xff]
    %v336 = vld [vmem:[#allocation2 + $0x1d8] sm:$0xff]
    %v337 = vld [vmem:[#allocation2 + $0x1e0] sm:$0xff]
    %v338 = vld [vmem:[#allocation2 + $0x1e8] sm:$0xff]
    %v339 = vld [vmem:[#allocation2 + $0x1f0] sm:$0xff]
    %v340 = vld [vmem:[#allocation2 + $0x1f8] sm:$0xff]
    %v341 = vld [vmem:[%s5] sm:$0xff]
    %v374 = vunpack.c.l.b16 %v277
    %v375 = vunpack.c.h.b16 %v277
    %v376 = vunpack.c.l.b16 %v278
    %v377 = vunpack.c.h.b16 %v278
    %v378 = vunpack.c.l.b16 %v279
    %v379 = vunpack.c.h.b16 %v279
    %v380 = vunpack.c.l.b16 %v280
    %v381 = vunpack.c.h.b16 %v280
    %v382 = vunpack.c.l.b16 %v281
    %v383 = vunpack.c.h.b16 %v281
    %v384 = vunpack.c.l.b16 %v282
    %v385 = vunpack.c.h.b16 %v282
    %v386 = vunpack.c.l.b16 %v283
    %v387 = vunpack.c.h.b16 %v283
    %v388 = vunpack.c.l.b16 %v284
    %v389 = vunpack.c.h.b16 %v284
    %v390 = vunpack.c.l.b16 %v285
    %v391 = vunpack.c.h.b16 %v285
    %v392 = vunpack.c.l.b16 %v286
    %v393 = vunpack.c.h.b16 %v286
    %v394 = vunpack.c.l.b16 %v287
    %v395 = vunpack.c.h.b16 %v287
    %v396 = vunpack.c.l.b16 %v288
    %v397 = vunpack.c.h.b16 %v288
    %v398 = vunpack.c.l.b16 %v289
    %v399 = vunpack.c.h.b16 %v289
    %v400 = vunpack.c.l.b16 %v290
    %v401 = vunpack.c.h.b16 %v290
    %v402 = vunpack.c.l.b16 %v291
    %v403 = vunpack.c.h.b16 %v291
    %v404 = vunpack.c.l.b16 %v292
    %v405 = vunpack.c.h.b16 %v292
    %v406 = vunpack.c.l.b16 %v293
    %v407 = vunpack.c.h.b16 %v293
    %v408 = vunpack.c.l.b16 %v294
    %v409 = vunpack.c.h.b16 %v294
    %v410 = vunpack.c.l.b16 %v295
    %v411 = vunpack.c.h.b16 %v295
    %v412 = vunpack.c.l.b16 %v296
    %v413 = vunpack.c.h.b16 %v296
    %v414 = vunpack.c.l.b16 %v297
    %v415 = vunpack.c.h.b16 %v297
    %v416 = vunpack.c.l.b16 %v298
    %v417 = vunpack.c.h.b16 %v298
    %v418 = vunpack.c.l.b16 %v299
    %v419 = vunpack.c.h.b16 %v299
    %v420 = vunpack.c.l.b16 %v300
    %v421 = vunpack.c.h.b16 %v300
    %v422 = vunpack.c.l.b16 %v301
    %v423 = vunpack.c.h.b16 %v301
    %v424 = vunpack.c.l.b16 %v302
    %v425 = vunpack.c.h.b16 %v302
    %v426 = vunpack.c.l.b16 %v303
    %v427 = vunpack.c.h.b16 %v303
    %v428 = vunpack.c.l.b16 %v304
    %v429 = vunpack.c.h.b16 %v304
    %v430 = vunpack.c.l.b16 %v305
    %v431 = vunpack.c.h.b16 %v305
    %v432 = vunpack.c.l.b16 %v306
    %v433 = vunpack.c.h.b16 %v306
    %v434 = vunpack.c.l.b16 %v307
    %v435 = vunpack.c.h.b16 %v307
    %v436 = vunpack.c.l.b16 %v308
    %v437 = vunpack.c.h.b16 %v308
    %v438 = vpack.c.b16 %v378, %v374
    %v439 = vpack.c.b16 %v379, %v375
    %v440 = vpack.c.b16 %v380, %v376
    %v441 = vpack.c.b16 %v381, %v377
    %v442 = vpack.c.b16 %v386, %v382
    %v443 = vpack.c.b16 %v387, %v383
    %v444 = vpack.c.b16 %v388, %v384
    %v445 = vpack.c.b16 %v389, %v385
    %v446 = vpack.c.b16 %v394, %v390
    %v447 = vpack.c.b16 %v395, %v391
    %v448 = vpack.c.b16 %v396, %v392
    %v449 = vpack.c.b16 %v397, %v393
    %v450 = vpack.c.b16 %v402, %v398
    %v451 = vpack.c.b16 %v403, %v399
    %v452 = vpack.c.b16 %v404, %v400
    %v453 = vpack.c.b16 %v405, %v401
    %v454 = vpack.c.b16 %v410, %v406
    %v455 = vpack.c.b16 %v411, %v407
    %v456 = vpack.c.b16 %v412, %v408
    %v457 = vpack.c.b16 %v413, %v409
    %v458 = vpack.c.b16 %v418, %v414
    %v459 = vpack.c.b16 %v419, %v415
    %v460 = vpack.c.b16 %v420, %v416
    %v461 = vpack.c.b16 %v421, %v417
    %v462 = vpack.c.b16 %v426, %v422
    %v463 = vpack.c.b16 %v427, %v423
    %v464 = vpack.c.b16 %v428, %v424
    %v465 = vpack.c.b16 %v429, %v425
    %v466 = vpack.c.b16 %v434, %v430
    %v467 = vpack.c.b16 %v435, %v431
    %v468 = vpack.c.b16 %v436, %v432
    %v469 = vpack.c.b16 %v437, %v433
    %502 = vmatpush.bf16.msra.mxu0 %v466
    %503 = vmatpush.bf16.msra.mxu0 %v462
    %504 = vmatpush.bf16.msra.mxu0 %v458
    %505 = vmatpush.bf16.msra.mxu0 %v454
    %506 = vmatpush.bf16.msra.mxu0 %v450
    %507 = vmatpush.bf16.msra.mxu0 %v446
    %508 = vmatpush.bf16.msra.mxu0 %v442
    %509 = vmatpush.bf16.msra.mxu0 %v438
    %510 = vmatmul.bf16.gmra.mxu0 0
    %v511 = vpop.f32.mrf.mxu0
    %v512 = vadd.f32 0.0, %v511
    %v513 = vpop.f32.mrf.mxu0
    %514 = vdwg.mxu0
    %515 = vmatpush.bf16.msra.mxu0 %v467
    %516 = vmatpush.bf16.msra.mxu0 %v463
    %517 = vmatpush.bf16.msra.mxu0 %v459
    %518 = vmatpush.bf16.msra.mxu0 %v455
    %519 = vmatpush.bf16.msra.mxu0 %v451
    %520 = vmatpush.bf16.msra.mxu0 %v447
    %521 = vmatpush.bf16.msra.mxu0 %v443
    %522 = vmatpush.bf16.msra.mxu0 %v439
    %523 = vmatmul.bf16.gmra.mxu0 0
    %v524 = vpop.f32.mrf.mxu0
    %v525 = vadd.f32 0.0, %v524
    %v526 = vpop.f32.mrf.mxu0
    %527 = vdwg.mxu0
    %528 = vmatpush.bf16.msra.mxu0 %v468
    %529 = vmatpush.bf16.msra.mxu0 %v464
    %530 = vmatpush.bf16.msra.mxu0 %v460
    %531 = vmatpush.bf16.msra.mxu0 %v456
    %532 = vmatpush.bf16.msra.mxu0 %v452
    %533 = vmatpush.bf16.msra.mxu0 %v448
    %534 = vmatpush.bf16.msra.mxu0 %v444
    %535 = vmatpush.bf16.msra.mxu0 %v440
    %536 = vmatmul.bf16.gmra.mxu0 0
    %v537 = vpop.f32.mrf.mxu0
    %v538 = vadd.f32 0.0, %v537
    %v539 = vpop.f32.mrf.mxu0
    %540 = vdwg.mxu0
    %541 = vmatpush.bf16.msra.mxu0 %v469
    %542 = vmatpush.bf16.msra.mxu0 %v465
    %543 = vmatpush.bf16.msra.mxu0 %v461
    %544 = vmatpush.bf16.msra.mxu0 %v457
    %545 = vmatpush.bf16.msra.mxu0 %v453
    %546 = vmatpush.bf16.msra.mxu0 %v449
    %547 = vmatpush.bf16.msra.mxu0 %v445
    %548 = vmatpush.bf16.msra.mxu0 %v441
    %549 = vmatmul.bf16.gmra.mxu0 0
    %v550 = vpop.f32.mrf.mxu0
    %v551 = vadd.f32 0.0, %v550
    %v552 = vpop.f32.mrf.mxu0
    %553 = vdwg.mxu0
    %v554 = vadd.f32 %v175, %v512
    %v555 = vadd.f32 %v189, %v525
    %v556 = vadd.f32 %v203, %v538
    %v557 = vadd.f32 %v217, %v551
    %v590 = vunpack.c.l.b16 %v309
    %v591 = vunpack.c.h.b16 %v309
    %v592 = vunpack.c.l.b16 %v310
    %v593 = vunpack.c.h.b16 %v310
    %v594 = vunpack.c.l.b16 %v311
    %v595 = vunpack.c.h.b16 %v311
    %v596 = vunpack.c.l.b16 %v312
    %v597 = vunpack.c.h.b16 %v312
    %v598 = vunpack.c.l.b16 %v313
    %v599 = vunpack.c.h.b16 %v313
    %v600 = vunpack.c.l.b16 %v314
    %v601 = vunpack.c.h.b16 %v314
    %v602 = vunpack.c.l.b16 %v315
    %v603 = vunpack.c.h.b16 %v315
    %v604 = vunpack.c.l.b16 %v316
    %v605 = vunpack.c.h.b16 %v316
    %v606 = vunpack.c.l.b16 %v317
    %v607 = vunpack.c.h.b16 %v317
    %v608 = vunpack.c.l.b16 %v318
    %v609 = vunpack.c.h.b16 %v318
    %v610 = vunpack.c.l.b16 %v319
    %v611 = vunpack.c.h.b16 %v319
    %v612 = vunpack.c.l.b16 %v320
    %v613 = vunpack.c.h.b16 %v320
    %v614 = vunpack.c.l.b16 %v321
    %v615 = vunpack.c.h.b16 %v321
    %v616 = vunpack.c.l.b16 %v322
    %v617 = vunpack.c.h.b16 %v322
    %v618 = vunpack.c.l.b16 %v323
    %v619 = vunpack.c.h.b16 %v323
    %v620 = vunpack.c.l.b16 %v324
    %v621 = vunpack.c.h.b16 %v324
    %v622 = vunpack.c.l.b16 %v325
    %v623 = vunpack.c.h.b16 %v325
    %v624 = vunpack.c.l.b16 %v326
    %v625 = vunpack.c.h.b16 %v326
    %v626 = vunpack.c.l.b16 %v327
    %v627 = vunpack.c.h.b16 %v327
    %v628 = vunpack.c.l.b16 %v328
    %v629 = vunpack.c.h.b16 %v328
    %v630 = vunpack.c.l.b16 %v329
    %v631 = vunpack.c.h.b16 %v329
    %v632 = vunpack.c.l.b16 %v330
    %v633 = vunpack.c.h.b16 %v330
    %v634 = vunpack.c.l.b16 %v331
    %v635 = vunpack.c.h.b16 %v331
    %v636 = vunpack.c.l.b16 %v332
    %v637 = vunpack.c.h.b16 %v332
    %v638 = vunpack.c.l.b16 %v333
    %v639 = vunpack.c.h.b16 %v333
    %v640 = vunpack.c.l.b16 %v334
    %v641 = vunpack.c.h.b16 %v334
    %v642 = vunpack.c.l.b16 %v335
    %v643 = vunpack.c.h.b16 %v335
    %v644 = vunpack.c.l.b16 %v336
    %v645 = vunpack.c.h.b16 %v336
    %v646 = vunpack.c.l.b16 %v337
    %v647 = vunpack.c.h.b16 %v337
    %v648 = vunpack.c.l.b16 %v338
    %v649 = vunpack.c.h.b16 %v338
    %v650 = vunpack.c.l.b16 %v339
    %v651 = vunpack.c.h.b16 %v339
    %v652 = vunpack.c.l.b16 %v340
    %v653 = vunpack.c.h.b16 %v340
    %v654 = vpack.c.b16 %v594, %v590
    %v655 = vpack.c.b16 %v595, %v591
    %v656 = vpack.c.b16 %v596, %v592
    %v657 = vpack.c.b16 %v597, %v593
    %v658 = vpack.c.b16 %v602, %v598
    %v659 = vpack.c.b16 %v603, %v599
    %v660 = vpack.c.b16 %v604, %v600
    %v661 = vpack.c.b16 %v605, %v601
    %v662 = vpack.c.b16 %v610, %v606
    %v663 = vpack.c.b16 %v611, %v607
    %v664 = vpack.c.b16 %v612, %v608
    %v665 = vpack.c.b16 %v613, %v609
    %v666 = vpack.c.b16 %v618, %v614
    %v667 = vpack.c.b16 %v619, %v615
    %v668 = vpack.c.b16 %v620, %v616
    %v669 = vpack.c.b16 %v621, %v617
    %v670 = vpack.c.b16 %v626, %v622
    %v671 = vpack.c.b16 %v627, %v623
    %v672 = vpack.c.b16 %v628, %v624
    %v673 = vpack.c.b16 %v629, %v625
    %v674 = vpack.c.b16 %v634, %v630
    %v675 = vpack.c.b16 %v635, %v631
    %v676 = vpack.c.b16 %v636, %v632
    %v677 = vpack.c.b16 %v637, %v633
    %v678 = vpack.c.b16 %v642, %v638
    %v679 = vpack.c.b16 %v643, %v639
    %v680 = vpack.c.b16 %v644, %v640
    %v681 = vpack.c.b16 %v645, %v641
    %v682 = vpack.c.b16 %v650, %v646
    %v683 = vpack.c.b16 %v651, %v647
    %v684 = vpack.c.b16 %v652, %v648
    %v685 = vpack.c.b16 %v653, %v649
    %718 = vmatpush.bf16.msra.mxu0 %v682
    %719 = vmatpush.bf16.msra.mxu0 %v678
    %720 = vmatpush.bf16.msra.mxu0 %v674
    %721 = vmatpush.bf16.msra.mxu0 %v670
    %722 = vmatpush.bf16.msra.mxu0 %v666
    %723 = vmatpush.bf16.msra.mxu0 %v662
    %724 = vmatpush.bf16.msra.mxu0 %v658
    %725 = vmatpush.bf16.msra.mxu0 %v654
    %726 = vmatmul.bf16.gmra.mxu0 0
    %v727 = vpop.f32.mrf.mxu0
    %v728 = vadd.f32 0.0, %v727
    %v729 = vpop.f32.mrf.mxu0
    %730 = vdwg.mxu0
    %731 = vmatpush.bf16.msra.mxu0 %v683
    %732 = vmatpush.bf16.msra.mxu0 %v679
    %733 = vmatpush.bf16.msra.mxu0 %v675
    %734 = vmatpush.bf16.msra.mxu0 %v671
    %735 = vmatpush.bf16.msra.mxu0 %v667
    %736 = vmatpush.bf16.msra.mxu0 %v663
    %737 = vmatpush.bf16.msra.mxu0 %v659
    %738 = vmatpush.bf16.msra.mxu0 %v655
    %739 = vmatmul.bf16.gmra.mxu0 0
    %v740 = vpop.f32.mrf.mxu0
    %v741 = vadd.f32 0.0, %v740
    %v742 = vpop.f32.mrf.mxu0
    %743 = vdwg.mxu0
    %744 = vmatpush.bf16.msra.mxu0 %v684
    %745 = vmatpush.bf16.msra.mxu0 %v680
    %746 = vmatpush.bf16.msra.mxu0 %v676
    %747 = vmatpush.bf16.msra.mxu0 %v672
    %748 = vmatpush.bf16.msra.mxu0 %v668
    %749 = vmatpush.bf16.msra.mxu0 %v664
    %750 = vmatpush.bf16.msra.mxu0 %v660
    %751 = vmatpush.bf16.msra.mxu0 %v656
    %752 = vmatmul.bf16.gmra.mxu0 0
    %v753 = vpop.f32.mrf.mxu0
    %v754 = vadd.f32 0.0, %v753
    %v755 = vpop.f32.mrf.mxu0
    %756 = vdwg.mxu0
    %757 = vmatpush.bf16.msra.mxu0 %v685
    %758 = vmatpush.bf16.msra.mxu0 %v681
    %759 = vmatpush.bf16.msra.mxu0 %v677
    %760 = vmatpush.bf16.msra.mxu0 %v673
    %761 = vmatpush.bf16.msra.mxu0 %v669
    %762 = vmatpush.bf16.msra.mxu0 %v665
    %763 = vmatpush.bf16.msra.mxu0 %v661
    %764 = vmatpush.bf16.msra.mxu0 %v657
    %765 = vmatmul.bf16.gmra.mxu0 0
    %v766 = vpop.f32.mrf.mxu0
    %v767 = vadd.f32 0.0, %v766
    %v768 = vpop.f32.mrf.mxu0
    %769 = vdwg.mxu0
    %v774 = vrot.slane %v728, 2
    %v775 = vrot.slane %v741, 2
    %v776 = vrot.slane %v754, 2
    %v777 = vrot.slane %v767, 2
    %v782 = vadd.f32 %v233, %v774
    %v783 = vadd.f32 %v247, %v775
    %v784 = vadd.f32 %v261, %v776
    %v785 = vadd.f32 %v275, %v777
    %v786 = vxor.u32 %v554, 2147483648
    %v787 = vmul.f32 %v786, 1.442695
    %v788 = vpow.pop %v787
    %v789 = vadd.f32 %v788, 1.0
    %v790 = vrcp.pop %v789
    %v791 = vmul.f32 %v789, %v790
    %v792 = vsub.f32 1.0, %v791
    %v793 = vmul.f32 %v790, %v792
    %v794 = vadd.f32 %v790, %v793
    %vm795 = vweird.f32 %v789
    %vm796 = vweird.f32 %v790
    %vm797 = vmor %vm795, %vm796
    %v798 = vsel %vm797, %v790, %v794
    %v799 = vand.u32 2147483647, %v789
    %vm800 = vcmp.eq.f32.partialorder %v799, 8.507059e+37
    %v801 = vand.u32 %v789, 2147483648
    %v802 = vor.u32 1.1754944e-38, %v801
    %v803 = vsel %vm800, %v802, %v798
    %v804 = vmul.f32 1.0, %v803
    %v805 = vxor.u32 %v555, 2147483648
    %v806 = vmul.f32 %v805, 1.442695
    %v807 = vpow.pop %v806
    %v808 = vadd.f32 %v807, 1.0
    %v809 = vrcp.pop %v808
    %v810 = vmul.f32 %v808, %v809
    %v811 = vsub.f32 1.0, %v810
    %v812 = vmul.f32 %v809, %v811
    %v813 = vadd.f32 %v809, %v812
    %vm814 = vweird.f32 %v808
    %vm815 = vweird.f32 %v809
    %vm816 = vmor %vm814, %vm815
    %v817 = vsel %vm816, %v809, %v813
    %v818 = vand.u32 2147483647, %v808
    %vm819 = vcmp.eq.f32.partialorder %v818, 8.507059e+37
    %v820 = vand.u32 %v808, 2147483648
    %v821 = vor.u32 1.1754944e-38, %v820
    %v822 = vsel %vm819, %v821, %v817
    %v823 = vmul.f32 1.0, %v822
    %v824 = vtanh.pop %v556
    %v825 = vxor.u32 %v557, 2147483648
    %v826 = vmul.f32 %v825, 1.442695
    %v827 = vpow.pop %v826
    %v828 = vadd.f32 %v827, 1.0
    %v829 = vrcp.pop %v828
    %v830 = vmul.f32 %v828, %v829
    %v831 = vsub.f32 1.0, %v830
    %v832 = vmul.f32 %v829, %v831
    %v833 = vadd.f32 %v829, %v832
    %vm834 = vweird.f32 %v828
    %vm835 = vweird.f32 %v829
    %vm836 = vmor %vm834, %vm835
    %v837 = vsel %vm836, %v829, %v833
    %v838 = vand.u32 2147483647, %v828
    %vm839 = vcmp.eq.f32.partialorder %v838, 8.507059e+37
    %v840 = vand.u32 %v828, 2147483648
    %v841 = vor.u32 1.1754944e-38, %v840
    %v842 = vsel %vm839, %v841, %v837
    %v843 = vmul.f32 1.0, %v842
    %v844 = vmul.f32 %v823, 0.0
    %v845 = vmul.f32 %v804, %v824
    %v846 = vadd.f32 %v844, %v845
    %v847 = vtanh.pop %v846
    %v848 = vmul.f32 %v843, %v847
    %v849 = vxor.u32 %v782, 2147483648
    %v850 = vmul.f32 %v849, 1.442695
    %v851 = vpow.pop %v850
    %v852 = vadd.f32 %v851, 1.0
    %v853 = vrcp.pop %v852
    %v854 = vmul.f32 %v852, %v853
    %v855 = vsub.f32 1.0, %v854
    %v856 = vmul.f32 %v853, %v855
    %v857 = vadd.f32 %v853, %v856
    %vm858 = vweird.f32 %v852
    %vm859 = vweird.f32 %v853
    %vm860 = vmor %vm858, %vm859
    %v861 = vsel %vm860, %v853, %v857
    %v862 = vand.u32 2147483647, %v852
    %vm863 = vcmp.eq.f32.partialorder %v862, 8.507059e+37
    %v864 = vand.u32 %v852, 2147483648
    %v865 = vor.u32 1.1754944e-38, %v864
    %v866 = vsel %vm863, %v865, %v861
    %v867 = vmul.f32 1.0, %v866
    %v868 = vxor.u32 %v783, 2147483648
    %v869 = vmul.f32 %v868, 1.442695
    %v870 = vpow.pop %v869
    %v871 = vadd.f32 %v870, 1.0
    %v872 = vrcp.pop %v871
    %v873 = vmul.f32 %v871, %v872
    %v874 = vsub.f32 1.0, %v873
    %v875 = vmul.f32 %v872, %v874
    %v876 = vadd.f32 %v872, %v875
    %vm877 = vweird.f32 %v871
    %vm878 = vweird.f32 %v872
    %vm879 = vmor %vm877, %vm878
    %v880 = vsel %vm879, %v872, %v876
    %v881 = vand.u32 2147483647, %v871
    %vm882 = vcmp.eq.f32.partialorder %v881, 8.507059e+37
    %v883 = vand.u32 %v871, 2147483648
    %v884 = vor.u32 1.1754944e-38, %v883
    %v885 = vsel %vm882, %v884, %v880
    %v886 = vmul.f32 1.0, %v885
    %v887 = vtanh.pop %v784
    %v888 = vxor.u32 %v785, 2147483648
    %v889 = vmul.f32 %v888, 1.442695
    %v890 = vpow.pop %v889
    %v891 = vadd.f32 %v890, 1.0
    %v892 = vrcp.pop %v891
    %v893 = vmul.f32 %v891, %v892
    %v894 = vsub.f32 1.0, %v893
    %v895 = vmul.f32 %v892, %v894
    %v896 = vadd.f32 %v892, %v895
    %vm897 = vweird.f32 %v891
    %vm898 = vweird.f32 %v892
    %vm899 = vmor %vm897, %vm898
    %v900 = vsel %vm899, %v892, %v896
    %v901 = vand.u32 2147483647, %v891
    %vm902 = vcmp.eq.f32.partialorder %v901, 8.507059e+37
    %v903 = vand.u32 %v891, 2147483648
    %v904 = vor.u32 1.1754944e-38, %v903
    %v905 = vsel %vm902, %v904, %v900
    %v906 = vmul.f32 1.0, %v905
    %v907 = vmul.f32 %v886, 0.0
    %v908 = vmul.f32 %v867, %v887
    %v909 = vadd.f32 %v907, %v908
    %v910 = vtanh.pop %v909
    %v911 = vmul.f32 %v906, %v910
    %v912 = vmax.f32 %v848, -1.0
    %v913 = vmax.f32 %v911, -1.0
    %v914 = vpack.c.bf16 %v848, %v848
    %915 = vmatpush.bf16.msra.mxu0 %v466
    %916 = vmatpush.bf16.msra.mxu0 %v462
    %917 = vmatpush.bf16.msra.mxu0 %v458
    %918 = vmatpush.bf16.msra.mxu0 %v454
    %919 = vmatpush.bf16.msra.mxu0 %v450
    %920 = vmatpush.bf16.msra.mxu0 %v446
    %921 = vmatpush.bf16.msra.mxu0 %v442
    %922 = vmatpush.bf16.msra.mxu0 %v438
    %923 = vmatmul.bf16.gmra.mxu0 %v914
    %v924 = vpop.f32.mrf.mxu0
    %v925 = vadd.f32 0.0, %v924
    %v926 = vpop.f32.mrf.mxu0
    %927 = vdwg.mxu0
    %928 = vmatpush.bf16.msra.mxu0 %v467
    %929 = vmatpush.bf16.msra.mxu0 %v463
    %930 = vmatpush.bf16.msra.mxu0 %v459
    %931 = vmatpush.bf16.msra.mxu0 %v455
    %932 = vmatpush.bf16.msra.mxu0 %v451
    %933 = vmatpush.bf16.msra.mxu0 %v447
    %934 = vmatpush.bf16.msra.mxu0 %v443
    %935 = vmatpush.bf16.msra.mxu0 %v439
    %936 = vmatmul.bf16.gmra.mxu0 %v914
    %v937 = vpop.f32.mrf.mxu0
    %v938 = vadd.f32 0.0, %v937
    %v939 = vpop.f32.mrf.mxu0
    %940 = vdwg.mxu0
    %941 = vmatpush.bf16.msra.mxu0 %v468
    %942 = vmatpush.bf16.msra.mxu0 %v464
    %943 = vmatpush.bf16.msra.mxu0 %v460
    %944 = vmatpush.bf16.msra.mxu0 %v456
    %945 = vmatpush.bf16.msra.mxu0 %v452
    %946 = vmatpush.bf16.msra.mxu0 %v448
    %947 = vmatpush.bf16.msra.mxu0 %v444
    %948 = vmatpush.bf16.msra.mxu0 %v440
    %949 = vmatmul.bf16.gmra.mxu0 %v914
    %v950 = vpop.f32.mrf.mxu0
    %v951 = vadd.f32 0.0, %v950
    %v952 = vpop.f32.mrf.mxu0
    %953 = vdwg.mxu0
    %954 = vmatpush.bf16.msra.mxu0 %v469
    %955 = vmatpush.bf16.msra.mxu0 %v465
    %956 = vmatpush.bf16.msra.mxu0 %v461
    %957 = vmatpush.bf16.msra.mxu0 %v457
    %958 = vmatpush.bf16.msra.mxu0 %v453
    %959 = vmatpush.bf16.msra.mxu0 %v449
    %960 = vmatpush.bf16.msra.mxu0 %v445
    %961 = vmatpush.bf16.msra.mxu0 %v441
    %962 = vmatmul.bf16.gmra.mxu0 %v914
    %v963 = vpop.f32.mrf.mxu0
    %v964 = vadd.f32 0.0, %v963
    %v965 = vpop.f32.mrf.mxu0
    %966 = vdwg.mxu0
    %v971 = vrot.slane %v925, 6
    %v972 = vrot.slane %v938, 6
    %v973 = vrot.slane %v951, 6
    %v974 = vrot.slane %v964, 6
    %v979 = vadd.f32 %v175, %v971
    %v980 = vadd.f32 %v189, %v972
    %v981 = vadd.f32 %v203, %v973
    %v982 = vadd.f32 %v217, %v974
    %v983 = vpack.c.bf16 %v911, %v911
    %v985 = vrot.slane %v983, 3
    %987 = vmatpush.bf16.msra.mxu0 %v682
    %988 = vmatpush.bf16.msra.mxu0 %v678
    %989 = vmatpush.bf16.msra.mxu0 %v674
    %990 = vmatpush.bf16.msra.mxu0 %v670
    %991 = vmatpush.bf16.msra.mxu0 %v666
    %992 = vmatpush.bf16.msra.mxu0 %v662
    %993 = vmatpush.bf16.msra.mxu0 %v658
    %994 = vmatpush.bf16.msra.mxu0 %v654
    %995 = vmatmul.bf16.gmra.mxu0 %v985
    %v996 = vpop.f32.mrf.mxu0
    %v997 = vadd.f32 0.0, %v996
    %v998 = vpop.f32.mrf.mxu0
    %999 = vdwg.mxu0
    %1000 = vmatpush.bf16.msra.mxu0 %v683
    %1001 = vmatpush.bf16.msra.mxu0 %v679
    %1002 = vmatpush.bf16.msra.mxu0 %v675
    %1003 = vmatpush.bf16.msra.mxu0 %v671
    %1004 = vmatpush.bf16.msra.mxu0 %v667
    %1005 = vmatpush.bf16.msra.mxu0 %v663
    %1006 = vmatpush.bf16.msra.mxu0 %v659
    %1007 = vmatpush.bf16.msra.mxu0 %v655
    %1008 = vmatmul.bf16.gmra.mxu0 %v985
    %v1009 = vpop.f32.mrf.mxu0
    %v1010 = vadd.f32 0.0, %v1009
    %v1011 = vpop.f32.mrf.mxu0
    %1012 = vdwg.mxu0
    %1013 = vmatpush.bf16.msra.mxu0 %v684
    %1014 = vmatpush.bf16.msra.mxu0 %v680
    %1015 = vmatpush.bf16.msra.mxu0 %v676
    %1016 = vmatpush.bf16.msra.mxu0 %v672
    %1017 = vmatpush.bf16.msra.mxu0 %v668
    %1018 = vmatpush.bf16.msra.mxu0 %v664
    %1019 = vmatpush.bf16.msra.mxu0 %v660
    %1020 = vmatpush.bf16.msra.mxu0 %v656
    %1021 = vmatmul.bf16.gmra.mxu0 %v985
    %v1022 = vpop.f32.mrf.mxu0
    %v1023 = vadd.f32 0.0, %v1022
    %v1024 = vpop.f32.mrf.mxu0
    %1025 = vdwg.mxu0
    %1026 = vmatpush.bf16.msra.mxu0 %v685
    %1027 = vmatpush.bf16.msra.mxu0 %v681
    %1028 = vmatpush.bf16.msra.mxu0 %v677
    %1029 = vmatpush.bf16.msra.mxu0 %v673
    %1030 = vmatpush.bf16.msra.mxu0 %v669
    %1031 = vmatpush.bf16.msra.mxu0 %v665
    %1032 = vmatpush.bf16.msra.mxu0 %v661
    %1033 = vmatpush.bf16.msra.mxu0 %v657
    %1034 = vmatmul.bf16.gmra.mxu0 %v985
    %v1035 = vpop.f32.mrf.mxu0
    %v1036 = vadd.f32 0.0, %v1035
    %v1037 = vpop.f32.mrf.mxu0
    %1038 = vdwg.mxu0
    %v1043 = vrot.slane %v997, 4
    %v1044 = vrot.slane %v1010, 4
    %v1045 = vrot.slane %v1023, 4
    %v1046 = vrot.slane %v1036, 4
    %v1051 = vadd.f32 %v233, %v1043
    %v1052 = vadd.f32 %v247, %v1044
    %v1053 = vadd.f32 %v261, %v1045
    %v1054 = vadd.f32 %v275, %v1046
    %v1055 = vxor.u32 %v979, 2147483648
    %v1056 = vmul.f32 %v1055, 1.442695
    %v1057 = vpow.pop %v1056
    %v1058 = vadd.f32 %v1057, 1.0
    %v1059 = vrcp.pop %v1058
    %v1060 = vmul.f32 %v1058, %v1059
    %v1061 = vsub.f32 1.0, %v1060
    %v1062 = vmul.f32 %v1059, %v1061
    %v1063 = vadd.f32 %v1059, %v1062
    %vm1064 = vweird.f32 %v1058
    %vm1065 = vweird.f32 %v1059
    %vm1066 = vmor %vm1064, %vm1065
    %v1067 = vsel %vm1066, %v1059, %v1063
    %v1068 = vand.u32 2147483647, %v1058
    %vm1069 = vcmp.eq.f32.partialorder %v1068, 8.507059e+37
    %v1070 = vand.u32 %v1058, 2147483648
    %v1071 = vor.u32 1.1754944e-38, %v1070
    %v1072 = vsel %vm1069, %v1071, %v1067
    %v1073 = vmul.f32 1.0, %v1072
    %v1074 = vxor.u32 %v980, 2147483648
    %v1075 = vmul.f32 %v1074, 1.442695
    %v1076 = vpow.pop %v1075
    %v1077 = vadd.f32 %v1076, 1.0
    %v1078 = vrcp.pop %v1077
    %v1079 = vmul.f32 %v1077, %v1078
    %v1080 = vsub.f32 1.0, %v1079
    %v1081 = vmul.f32 %v1078, %v1080
    %v1082 = vadd.f32 %v1078, %v1081
    %vm1083 = vweird.f32 %v1077
    %vm1084 = vweird.f32 %v1078
    %vm1085 = vmor %vm1083, %vm1084
    %v1086 = vsel %vm1085, %v1078, %v1082
    %v1087 = vand.u32 2147483647, %v1077
    %vm1088 = vcmp.eq.f32.partialorder %v1087, 8.507059e+37
    %v1089 = vand.u32 %v1077, 2147483648
    %v1090 = vor.u32 1.1754944e-38, %v1089
    %v1091 = vsel %vm1088, %v1090, %v1086
    %v1092 = vmul.f32 1.0, %v1091
    %v1093 = vtanh.pop %v981
    %v1094 = vxor.u32 %v982, 2147483648
    %v1095 = vmul.f32 %v1094, 1.442695
    %v1096 = vpow.pop %v1095
    %v1097 = vadd.f32 %v1096, 1.0
    %v1098 = vrcp.pop %v1097
    %v1099 = vmul.f32 %v1097, %v1098
    %v1100 = vsub.f32 1.0, %v1099
    %v1101 = vmul.f32 %v1098, %v1100
    %v1102 = vadd.f32 %v1098, %v1101
    %vm1103 = vweird.f32 %v1097
    %vm1104 = vweird.f32 %v1098
    %vm1105 = vmor %vm1103, %vm1104
    %v1106 = vsel %vm1105, %v1098, %v1102
    %v1107 = vand.u32 2147483647, %v1097
    %vm1108 = vcmp.eq.f32.partialorder %v1107, 8.507059e+37
    %v1109 = vand.u32 %v1097, 2147483648
    %v1110 = vor.u32 1.1754944e-38, %v1109
    %v1111 = vsel %vm1108, %v1110, %v1106
    %v1112 = vmul.f32 1.0, %v1111
    %v1114 = vrot.slane %v846, 6
    %v1116 = vmul.f32 %v1092, %v1114
    %v1117 = vmul.f32 %v1073, %v1093
    %v1118 = vadd.f32 %v1116, %v1117
    %v1119 = vtanh.pop %v1118
    %v1120 = vmul.f32 %v1112, %v1119
    %v1121 = vxor.u32 %v1051, 2147483648
    %v1122 = vmul.f32 %v1121, 1.442695
    %v1123 = vpow.pop %v1122
    %v1124 = vadd.f32 %v1123, 1.0
    %v1125 = vrcp.pop %v1124
    %v1126 = vmul.f32 %v1124, %v1125
    %v1127 = vsub.f32 1.0, %v1126
    %v1128 = vmul.f32 %v1125, %v1127
    %v1129 = vadd.f32 %v1125, %v1128
    %vm1130 = vweird.f32 %v1124
    %vm1131 = vweird.f32 %v1125
    %vm1132 = vmor %vm1130, %vm1131
    %v1133 = vsel %vm1132, %v1125, %v1129
    %v1134 = vand.u32 2147483647, %v1124
    %vm1135 = vcmp.eq.f32.partialorder %v1134, 8.507059e+37
    %v1136 = vand.u32 %v1124, 2147483648
    %v1137 = vor.u32 1.1754944e-38, %v1136
    %v1138 = vsel %vm1135, %v1137, %v1133
    %v1139 = vmul.f32 1.0, %v1138
    %v1140 = vxor.u32 %v1052, 2147483648
    %v1141 = vmul.f32 %v1140, 1.442695
    %v1142 = vpow.pop %v1141
    %v1143 = vadd.f32 %v1142, 1.0
    %v1144 = vrcp.pop %v1143
    %v1145 = vmul.f32 %v1143, %v1144
    %v1146 = vsub.f32 1.0, %v1145
    %v1147 = vmul.f32 %v1144, %v1146
    %v1148 = vadd.f32 %v1144, %v1147
    %vm1149 = vweird.f32 %v1143
    %vm1150 = vweird.f32 %v1144
    %vm1151 = vmor %vm1149, %vm1150
    %v1152 = vsel %vm1151, %v1144, %v1148
    %v1153 = vand.u32 2147483647, %v1143
    %vm1154 = vcmp.eq.f32.partialorder %v1153, 8.507059e+37
    %v1155 = vand.u32 %v1143, 2147483648
    %v1156 = vor.u32 1.1754944e-38, %v1155
    %v1157 = vsel %vm1154, %v1156, %v1152
    %v1158 = vmul.f32 1.0, %v1157
    %v1159 = vtanh.pop %v1053
    %v1160 = vxor.u32 %v1054, 2147483648
    %v1161 = vmul.f32 %v1160, 1.442695
    %v1162 = vpow.pop %v1161
    %v1163 = vadd.f32 %v1162, 1.0
    %v1164 = vrcp.pop %v1163
    %v1165 = vmul.f32 %v1163, %v1164
    %v1166 = vsub.f32 1.0, %v1165
    %v1167 = vmul.f32 %v1164, %v1166
    %v1168 = vadd.f32 %v1164, %v1167
    %vm1169 = vweird.f32 %v1163
    %vm1170 = vweird.f32 %v1164
    %vm1171 = vmor %vm1169, %vm1170
    %v1172 = vsel %vm1171, %v1164, %v1168
    %v1173 = vand.u32 2147483647, %v1163
    %vm1174 = vcmp.eq.f32.partialorder %v1173, 8.507059e+37
    %v1175 = vand.u32 %v1163, 2147483648
    %v1176 = vor.u32 1.1754944e-38, %v1175
    %v1177 = vsel %vm1174, %v1176, %v1172
    %v1178 = vmul.f32 1.0, %v1177
    %v1180 = vrot.slane %v909, 2
    %v1182 = vmul.f32 %v1158, %v1180
    %v1183 = vmul.f32 %v1139, %v1159
    %v1184 = vadd.f32 %v1182, %v1183
    %v1185 = vtanh.pop %v1184
    %v1186 = vmul.f32 %v1178, %v1185
    %v1188 = vrot.slane %v1120, 2
    %v1190 = vmax.f32 %v912, %v1188
    %v1192 = vrot.slane %v1186, 6
    %v1194 = vmax.f32 %v913, %v1192
    %v1195 = vpack.c.bf16 %v1120, %v1120
    %v1197 = vrot.slane %v1195, 1
    %1199 = vmatpush.bf16.msra.mxu0 %v466
    %1200 = vmatpush.bf16.msra.mxu0 %v462
    %1201 = vmatpush.bf16.msra.mxu0 %v458
    %1202 = vmatpush.bf16.msra.mxu0 %v454
    %1203 = vmatpush.bf16.msra.mxu0 %v450
    %1204 = vmatpush.bf16.msra.mxu0 %v446
    %1205 = vmatpush.bf16.msra.mxu0 %v442
    %1206 = vmatpush.bf16.msra.mxu0 %v438
    %1207 = vmatmul.bf16.gmra.mxu0 %v1197
    %v1208 = vpop.f32.mrf.mxu0
    %v1209 = vadd.f32 0.0, %v1208
    %v1210 = vpop.f32.mrf.mxu0
    %1211 = vdwg.mxu0
    %1212 = vmatpush.bf16.msra.mxu0 %v467
    %1213 = vmatpush.bf16.msra.mxu0 %v463
    %1214 = vmatpush.bf16.msra.mxu0 %v459
    %1215 = vmatpush.bf16.msra.mxu0 %v455
    %1216 = vmatpush.bf16.msra.mxu0 %v451
    %1217 = vmatpush.bf16.msra.mxu0 %v447
    %1218 = vmatpush.bf16.msra.mxu0 %v443
    %1219 = vmatpush.bf16.msra.mxu0 %v439
    %1220 = vmatmul.bf16.gmra.mxu0 %v1197
    %v1221 = vpop.f32.mrf.mxu0
    %v1222 = vadd.f32 0.0, %v1221
    %v1223 = vpop.f32.mrf.mxu0
    %1224 = vdwg.mxu0
    %1225 = vmatpush.bf16.msra.mxu0 %v468
    %1226 = vmatpush.bf16.msra.mxu0 %v464
    %1227 = vmatpush.bf16.msra.mxu0 %v460
    %1228 = vmatpush.bf16.msra.mxu0 %v456
    %1229 = vmatpush.bf16.msra.mxu0 %v452
    %1230 = vmatpush.bf16.msra.mxu0 %v448
    %1231 = vmatpush.bf16.msra.mxu0 %v444
    %1232 = vmatpush.bf16.msra.mxu0 %v440
    %1233 = vmatmul.bf16.gmra.mxu0 %v1197
    %v1234 = vpop.f32.mrf.mxu0
    %v1235 = vadd.f32 0.0, %v1234
    %v1236 = vpop.f32.mrf.mxu0
    %1237 = vdwg.mxu0
    %1238 = vmatpush.bf16.msra.mxu0 %v469
    %1239 = vmatpush.bf16.msra.mxu0 %v465
    %1240 = vmatpush.bf16.msra.mxu0 %v461
    %1241 = vmatpush.bf16.msra.mxu0 %v457
    %1242 = vmatpush.bf16.msra.mxu0 %v453
    %1243 = vmatpush.bf16.msra.mxu0 %v449
    %1244 = vmatpush.bf16.msra.mxu0 %v445
    %1245 = vmatpush.bf16.msra.mxu0 %v441
    %1246 = vmatmul.bf16.gmra.mxu0 %v1197
    %v1247 = vpop.f32.mrf.mxu0
    %v1248 = vadd.f32 0.0, %v1247
    %v1249 = vpop.f32.mrf.mxu0
    %1250 = vdwg.mxu0
    %v1255 = vrot.slane %v1209, 4
    %v1256 = vrot.slane %v1222, 4
    %v1257 = vrot.slane %v1235, 4
    %v1258 = vrot.slane %v1248, 4
    %v1263 = vadd.f32 %v175, %v1255
    %v1264 = vadd.f32 %v189, %v1256
    %v1265 = vadd.f32 %v203, %v1257
    %v1266 = vadd.f32 %v217, %v1258
    %v1267 = vpack.c.bf16 %v1186, %v1186
    %v1269 = vrot.slane %v1267, 2
    %1271 = vmatpush.bf16.msra.mxu0 %v682
    %1272 = vmatpush.bf16.msra.mxu0 %v678
    %1273 = vmatpush.bf16.msra.mxu0 %v674
    %1274 = vmatpush.bf16.msra.mxu0 %v670
    %1275 = vmatpush.bf16.msra.mxu0 %v666
    %1276 = vmatpush.bf16.msra.mxu0 %v662
    %1277 = vmatpush.bf16.msra.mxu0 %v658
    %1278 = vmatpush.bf16.msra.mxu0 %v654
    %1279 = vmatmul.bf16.gmra.mxu0 %v1269
    %v1280 = vpop.f32.mrf.mxu0
    %v1281 = vadd.f32 0.0, %v1280
    %v1282 = vpop.f32.mrf.mxu0
    %1283 = vdwg.mxu0
    %1284 = vmatpush.bf16.msra.mxu0 %v683
    %1285 = vmatpush.bf16.msra.mxu0 %v679
    %1286 = vmatpush.bf16.msra.mxu0 %v675
    %1287 = vmatpush.bf16.msra.mxu0 %v671
    %1288 = vmatpush.bf16.msra.mxu0 %v667
    %1289 = vmatpush.bf16.msra.mxu0 %v663
    %1290 = vmatpush.bf16.msra.mxu0 %v659
    %1291 = vmatpush.bf16.msra.mxu0 %v655
    %1292 = vmatmul.bf16.gmra.mxu0 %v1269
    %v1293 = vpop.f32.mrf.mxu0
    %v1294 = vadd.f32 0.0, %v1293
    %v1295 = vpop.f32.mrf.mxu0
    %1296 = vdwg.mxu0
    %1297 = vmatpush.bf16.msra.mxu0 %v684
    %1298 = vmatpush.bf16.msra.mxu0 %v680
    %1299 = vmatpush.bf16.msra.mxu0 %v676
    %1300 = vmatpush.bf16.msra.mxu0 %v672
    %1301 = vmatpush.bf16.msra.mxu0 %v668
    %1302 = vmatpush.bf16.msra.mxu0 %v664
    %1303 = vmatpush.bf16.msra.mxu0 %v660
    %1304 = vmatpush.bf16.msra.mxu0 %v656
    %1305 = vmatmul.bf16.gmra.mxu0 %v1269
    %v1306 = vpop.f32.mrf.mxu0
    %v1307 = vadd.f32 0.0, %v1306
    %v1308 = vpop.f32.mrf.mxu0
    %1309 = vdwg.mxu0
    %1310 = vmatpush.bf16.msra.mxu0 %v685
    %1311 = vmatpush.bf16.msra.mxu0 %v681
    %1312 = vmatpush.bf16.msra.mxu0 %v677
    %1313 = vmatpush.bf16.msra.mxu0 %v673
    %1314 = vmatpush.bf16.msra.mxu0 %v669
    %1315 = vmatpush.bf16.msra.mxu0 %v665
    %1316 = vmatpush.bf16.msra.mxu0 %v661
    %1317 = vmatpush.bf16.msra.mxu0 %v657
    %1318 = vmatmul.bf16.gmra.mxu0 %v1269
    %v1319 = vpop.f32.mrf.mxu0
    %v1320 = vadd.f32 0.0, %v1319
    %v1321 = vpop.f32.mrf.mxu0
    %1322 = vdwg.mxu0
    %v1327 = vrot.slane %v1281, 6
    %v1328 = vrot.slane %v1294, 6
    %v1329 = vrot.slane %v1307, 6
    %v1330 = vrot.slane %v1320, 6
    %v1335 = vadd.f32 %v233, %v1327
    %v1336 = vadd.f32 %v247, %v1328
    %v1337 = vadd.f32 %v261, %v1329
    %v1338 = vadd.f32 %v275, %v1330
    %v1339 = vxor.u32 %v1263, 2147483648
    %v1340 = vmul.f32 %v1339, 1.442695
    %v1341 = vpow.pop %v1340
    %v1342 = vadd.f32 %v1341, 1.0
    %v1343 = vrcp.pop %v1342
    %v1344 = vmul.f32 %v1342, %v1343
    %v1345 = vsub.f32 1.0, %v1344
    %v1346 = vmul.f32 %v1343, %v1345
    %v1347 = vadd.f32 %v1343, %v1346
    %vm1348 = vweird.f32 %v1342
    %vm1349 = vweird.f32 %v1343
    %vm1350 = vmor %vm1348, %vm1349
    %v1351 = vsel %vm1350, %v1343, %v1347
    %v1352 = vand.u32 2147483647, %v1342
    %vm1353 = vcmp.eq.f32.partialorder %v1352, 8.507059e+37
    %v1354 = vand.u32 %v1342, 2147483648
    %v1355 = vor.u32 1.1754944e-38, %v1354
    %v1356 = vsel %vm1353, %v1355, %v1351
    %v1357 = vmul.f32 1.0, %v1356
    %v1358 = vxor.u32 %v1264, 2147483648
    %v1359 = vmul.f32 %v1358, 1.442695
    %v1360 = vpow.pop %v1359
    %v1361 = vadd.f32 %v1360, 1.0
    %v1362 = vrcp.pop %v1361
    %v1363 = vmul.f32 %v1361, %v1362
    %v1364 = vsub.f32 1.0, %v1363
    %v1365 = vmul.f32 %v1362, %v1364
    %v1366 = vadd.f32 %v1362, %v1365
    %vm1367 = vweird.f32 %v1361
    %vm1368 = vweird.f32 %v1362
    %vm1369 = vmor %vm1367, %vm1368
    %v1370 = vsel %vm1369, %v1362, %v1366
    %v1371 = vand.u32 2147483647, %v1361
    %vm1372 = vcmp.eq.f32.partialorder %v1371, 8.507059e+37
    %v1373 = vand.u32 %v1361, 2147483648
    %v1374 = vor.u32 1.1754944e-38, %v1373
    %v1375 = vsel %vm1372, %v1374, %v1370
    %v1376 = vmul.f32 1.0, %v1375
    %v1377 = vtanh.pop %v1265
    %v1378 = vxor.u32 %v1266, 2147483648
    %v1379 = vmul.f32 %v1378, 1.442695
    %v1380 = vpow.pop %v1379
    %v1381 = vadd.f32 %v1380, 1.0
    %v1382 = vrcp.pop %v1381
    %v1383 = vmul.f32 %v1381, %v1382
    %v1384 = vsub.f32 1.0, %v1383
    %v1385 = vmul.f32 %v1382, %v1384
    %v1386 = vadd.f32 %v1382, %v1385
    %vm1387 = vweird.f32 %v1381
    %vm1388 = vweird.f32 %v1382
    %vm1389 = vmor %vm1387, %vm1388
    %v1390 = vsel %vm1389, %v1382, %v1386
    %v1391 = vand.u32 2147483647, %v1381
    %vm1392 = vcmp.eq.f32.partialorder %v1391, 8.507059e+37
    %v1393 = vand.u32 %v1381, 2147483648
    %v1394 = vor.u32 1.1754944e-38, %v1393
    %v1395 = vsel %vm1392, %v1394, %v1390
    %v1396 = vmul.f32 1.0, %v1395
    %v1398 = vrot.slane %v1118, 6
    %v1400 = vmul.f32 %v1376, %v1398
    %v1401 = vmul.f32 %v1357, %v1377
    %v1402 = vadd.f32 %v1400, %v1401
    %v1403 = vtanh.pop %v1402
    %v1404 = vmul.f32 %v1396, %v1403
    %v1405 = vxor.u32 %v1335, 2147483648
    %v1406 = vmul.f32 %v1405, 1.442695
    %v1407 = vpow.pop %v1406
    %v1408 = vadd.f32 %v1407, 1.0
    %v1409 = vrcp.pop %v1408
    %v1410 = vmul.f32 %v1408, %v1409
    %v1411 = vsub.f32 1.0, %v1410
    %v1412 = vmul.f32 %v1409, %v1411
    %v1413 = vadd.f32 %v1409, %v1412
    %vm1414 = vweird.f32 %v1408
    %vm1415 = vweird.f32 %v1409
    %vm1416 = vmor %vm1414, %vm1415
    %v1417 = vsel %vm1416, %v1409, %v1413
    %v1418 = vand.u32 2147483647, %v1408
    %vm1419 = vcmp.eq.f32.partialorder %v1418, 8.507059e+37
    %v1420 = vand.u32 %v1408, 2147483648
    %v1421 = vor.u32 1.1754944e-38, %v1420
    %v1422 = vsel %vm1419, %v1421, %v1417
    %v1423 = vmul.f32 1.0, %v1422
    %v1424 = vxor.u32 %v1336, 2147483648
    %v1425 = vmul.f32 %v1424, 1.442695
    %v1426 = vpow.pop %v1425
    %v1427 = vadd.f32 %v1426, 1.0
    %v1428 = vrcp.pop %v1427
    %v1429 = vmul.f32 %v1427, %v1428
    %v1430 = vsub.f32 1.0, %v1429
    %v1431 = vmul.f32 %v1428, %v1430
    %v1432 = vadd.f32 %v1428, %v1431
    %vm1433 = vweird.f32 %v1427
    %vm1434 = vweird.f32 %v1428
    %vm1435 = vmor %vm1433, %vm1434
    %v1436 = vsel %vm1435, %v1428, %v1432
    %v1437 = vand.u32 2147483647, %v1427
    %vm1438 = vcmp.eq.f32.partialorder %v1437, 8.507059e+37
    %v1439 = vand.u32 %v1427, 2147483648
    %v1440 = vor.u32 1.1754944e-38, %v1439
    %v1441 = vsel %vm1438, %v1440, %v1436
    %v1442 = vmul.f32 1.0, %v1441
    %v1443 = vtanh.pop %v1337
    %v1444 = vxor.u32 %v1338, 2147483648
    %v1445 = vmul.f32 %v1444, 1.442695
    %v1446 = vpow.pop %v1445
    %v1447 = vadd.f32 %v1446, 1.0
    %v1448 = vrcp.pop %v1447
    %v1449 = vmul.f32 %v1447, %v1448
    %v1450 = vsub.f32 1.0, %v1449
    %v1451 = vmul.f32 %v1448, %v1450
    %v1452 = vadd.f32 %v1448, %v1451
    %vm1453 = vweird.f32 %v1447
    %vm1454 = vweird.f32 %v1448
    %vm1455 = vmor %vm1453, %vm1454
    %v1456 = vsel %vm1455, %v1448, %v1452
    %v1457 = vand.u32 2147483647, %v1447
    %vm1458 = vcmp.eq.f32.partialorder %v1457, 8.507059e+37
    %v1459 = vand.u32 %v1447, 2147483648
    %v1460 = vor.u32 1.1754944e-38, %v1459
    %v1461 = vsel %vm1458, %v1460, %v1456
    %v1462 = vmul.f32 1.0, %v1461
    %v1464 = vrot.slane %v1184, 2
    %v1466 = vmul.f32 %v1442, %v1464
    %v1467 = vmul.f32 %v1423, %v1443
    %v1468 = vadd.f32 %v1466, %v1467
    %v1469 = vtanh.pop %v1468
    %v1470 = vmul.f32 %v1462, %v1469
    %v1472 = vrot.slane %v1404, 4
    %v1474 = vmax.f32 %v1190, %v1472
    %v1476 = vrot.slane %v1470, 4
    %v1478 = vmax.f32 %v1194, %v1476
    %v1479 = vpack.c.bf16 %v1404, %v1404
    %v1481 = vrot.slane %v1479, 2
    %1483 = vmatpush.bf16.msra.mxu0 %v466
    %1484 = vmatpush.bf16.msra.mxu0 %v462
    %1485 = vmatpush.bf16.msra.mxu0 %v458
    %1486 = vmatpush.bf16.msra.mxu0 %v454
    %1487 = vmatpush.bf16.msra.mxu0 %v450
    %1488 = vmatpush.bf16.msra.mxu0 %v446
    %1489 = vmatpush.bf16.msra.mxu0 %v442
    %1490 = vmatpush.bf16.msra.mxu0 %v438
    %1491 = vmatmul.bf16.gmra.mxu0 %v1481
    %v1492 = vpop.f32.mrf.mxu0
    %v1493 = vadd.f32 0.0, %v1492
    %v1494 = vpop.f32.mrf.mxu0
    %1495 = vdwg.mxu0
    %1496 = vmatpush.bf16.msra.mxu0 %v467
    %1497 = vmatpush.bf16.msra.mxu0 %v463
    %1498 = vmatpush.bf16.msra.mxu0 %v459
    %1499 = vmatpush.bf16.msra.mxu0 %v455
    %1500 = vmatpush.bf16.msra.mxu0 %v451
    %1501 = vmatpush.bf16.msra.mxu0 %v447
    %1502 = vmatpush.bf16.msra.mxu0 %v443
    %1503 = vmatpush.bf16.msra.mxu0 %v439
    %1504 = vmatmul.bf16.gmra.mxu0 %v1481
    %v1505 = vpop.f32.mrf.mxu0
    %v1506 = vadd.f32 0.0, %v1505
    %v1507 = vpop.f32.mrf.mxu0
    %1508 = vdwg.mxu0
    %1509 = vmatpush.bf16.msra.mxu0 %v468
    %1510 = vmatpush.bf16.msra.mxu0 %v464
    %1511 = vmatpush.bf16.msra.mxu0 %v460
    %1512 = vmatpush.bf16.msra.mxu0 %v456
    %1513 = vmatpush.bf16.msra.mxu0 %v452
    %1514 = vmatpush.bf16.msra.mxu0 %v448
    %1515 = vmatpush.bf16.msra.mxu0 %v444
    %1516 = vmatpush.bf16.msra.mxu0 %v440
    %1517 = vmatmul.bf16.gmra.mxu0 %v1481
    %v1518 = vpop.f32.mrf.mxu0
    %v1519 = vadd.f32 0.0, %v1518
    %v1520 = vpop.f32.mrf.mxu0
    %1521 = vdwg.mxu0
    %1522 = vmatpush.bf16.msra.mxu0 %v469
    %1523 = vmatpush.bf16.msra.mxu0 %v465
    %1524 = vmatpush.bf16.msra.mxu0 %v461
    %1525 = vmatpush.bf16.msra.mxu0 %v457
    %1526 = vmatpush.bf16.msra.mxu0 %v453
    %1527 = vmatpush.bf16.msra.mxu0 %v449
    %1528 = vmatpush.bf16.msra.mxu0 %v445
    %1529 = vmatpush.bf16.msra.mxu0 %v441
    %1530 = vmatmul.bf16.gmra.mxu0 %v1481
    %v1531 = vpop.f32.mrf.mxu0
    %v1532 = vadd.f32 0.0, %v1531
    %v1533 = vpop.f32.mrf.mxu0
    %1534 = vdwg.mxu0
    %v1539 = vrot.slane %v1493, 2
    %v1540 = vrot.slane %v1506, 2
    %v1541 = vrot.slane %v1519, 2
    %v1542 = vrot.slane %v1532, 2
    %v1547 = vadd.f32 %v175, %v1539
    %v1548 = vadd.f32 %v189, %v1540
    %v1549 = vadd.f32 %v203, %v1541
    %v1550 = vadd.f32 %v217, %v1542
    %v1551 = vpack.c.bf16 %v1470, %v1470
    %v1553 = vrot.slane %v1551, 1
    %1555 = vmatpush.bf16.msra.mxu0 %v682
    %1556 = vmatpush.bf16.msra.mxu0 %v678
    %1557 = vmatpush.bf16.msra.mxu0 %v674
    %1558 = vmatpush.bf16.msra.mxu0 %v670
    %1559 = vmatpush.bf16.msra.mxu0 %v666
    %1560 = vmatpush.bf16.msra.mxu0 %v662
    %1561 = vmatpush.bf16.msra.mxu0 %v658
    %1562 = vmatpush.bf16.msra.mxu0 %v654
    %1563 = vmatmul.bf16.gmra.mxu0 %v1553
    %v1564 = vpop.f32.mrf.mxu0
    %v1565 = vadd.f32 0.0, %v1564
    %v1566 = vpop.f32.mrf.mxu0
    %1567 = vdwg.mxu0
    %1568 = vmatpush.bf16.msra.mxu0 %v683
    %1569 = vmatpush.bf16.msra.mxu0 %v679
    %1570 = vmatpush.bf16.msra.mxu0 %v675
    %1571 = vmatpush.bf16.msra.mxu0 %v671
    %1572 = vmatpush.bf16.msra.mxu0 %v667
    %1573 = vmatpush.bf16.msra.mxu0 %v663
    %1574 = vmatpush.bf16.msra.mxu0 %v659
    %1575 = vmatpush.bf16.msra.mxu0 %v655
    %1576 = vmatmul.bf16.gmra.mxu0 %v1553
    %v1577 = vpop.f32.mrf.mxu0
    %v1578 = vadd.f32 0.0, %v1577
    %v1579 = vpop.f32.mrf.mxu0
    %1580 = vdwg.mxu0
    %1581 = vmatpush.bf16.msra.mxu0 %v684
    %1582 = vmatpush.bf16.msra.mxu0 %v680
    %1583 = vmatpush.bf16.msra.mxu0 %v676
    %1584 = vmatpush.bf16.msra.mxu0 %v672
    %1585 = vmatpush.bf16.msra.mxu0 %v668
    %1586 = vmatpush.bf16.msra.mxu0 %v664
    %1587 = vmatpush.bf16.msra.mxu0 %v660
    %1588 = vmatpush.bf16.msra.mxu0 %v656
    %1589 = vmatmul.bf16.gmra.mxu0 %v1553
    %v1590 = vpop.f32.mrf.mxu0
    %v1591 = vadd.f32 0.0, %v1590
    %v1592 = vpop.f32.mrf.mxu0
    %1593 = vdwg.mxu0
    %1594 = vmatpush.bf16.msra.mxu0 %v685
    %1595 = vmatpush.bf16.msra.mxu0 %v681
    %1596 = vmatpush.bf16.msra.mxu0 %v677
    %1597 = vmatpush.bf16.msra.mxu0 %v673
    %1598 = vmatpush.bf16.msra.mxu0 %v669
    %1599 = vmatpush.bf16.msra.mxu0 %v665
    %1600 = vmatpush.bf16.msra.mxu0 %v661
    %1601 = vmatpush.bf16.msra.mxu0 %v657
    %1602 = vmatmul.bf16.gmra.mxu0 %v1553
    %v1603 = vpop.f32.mrf.mxu0
    %v1604 = vadd.f32 0.0, %v1603
    %v1605 = vpop.f32.mrf.mxu0
    %1606 = vdwg.mxu0
    %v1607 = vadd.f32 %v233, %v1565
    %v1608 = vadd.f32 %v247, %v1578
    %v1609 = vadd.f32 %v261, %v1591
    %v1610 = vadd.f32 %v275, %v1604
    %v1611 = vxor.u32 %v1547, 2147483648
    %v1612 = vmul.f32 %v1611, 1.442695
    %v1613 = vpow.pop %v1612
    %v1614 = vadd.f32 %v1613, 1.0
    %v1615 = vrcp.pop %v1614
    %v1616 = vmul.f32 %v1614, %v1615
    %v1617 = vsub.f32 1.0, %v1616
    %v1618 = vmul.f32 %v1615, %v1617
    %v1619 = vadd.f32 %v1615, %v1618
    %vm1620 = vweird.f32 %v1614
    %vm1621 = vweird.f32 %v1615
    %vm1622 = vmor %vm1620, %vm1621
    %v1623 = vsel %vm1622, %v1615, %v1619
    %v1624 = vand.u32 2147483647, %v1614
    %vm1625 = vcmp.eq.f32.partialorder %v1624, 8.507059e+37
    %v1626 = vand.u32 %v1614, 2147483648
    %v1627 = vor.u32 1.1754944e-38, %v1626
    %v1628 = vsel %vm1625, %v1627, %v1623
    %v1629 = vmul.f32 1.0, %v1628
    %v1630 = vxor.u32 %v1548, 2147483648
    %v1631 = vmul.f32 %v1630, 1.442695
    %v1632 = vpow.pop %v1631
    %v1633 = vadd.f32 %v1632, 1.0
    %v1634 = vrcp.pop %v1633
    %v1635 = vmul.f32 %v1633, %v1634
    %v1636 = vsub.f32 1.0, %v1635
    %v1637 = vmul.f32 %v1634, %v1636
    %v1638 = vadd.f32 %v1634, %v1637
    %vm1639 = vweird.f32 %v1633
    %vm1640 = vweird.f32 %v1634
    %vm1641 = vmor %vm1639, %vm1640
    %v1642 = vsel %vm1641, %v1634, %v1638
    %v1643 = vand.u32 2147483647, %v1633
    %vm1644 = vcmp.eq.f32.partialorder %v1643, 8.507059e+37
    %v1645 = vand.u32 %v1633, 2147483648
    %v1646 = vor.u32 1.1754944e-38, %v1645
    %v1647 = vsel %vm1644, %v1646, %v1642
    %v1648 = vmul.f32 1.0, %v1647
    %v1649 = vtanh.pop %v1549
    %v1650 = vxor.u32 %v1550, 2147483648
    %v1651 = vmul.f32 %v1650, 1.442695
    %v1652 = vpow.pop %v1651
    %v1653 = vadd.f32 %v1652, 1.0
    %v1654 = vrcp.pop %v1653
    %v1655 = vmul.f32 %v1653, %v1654
    %v1656 = vsub.f32 1.0, %v1655
    %v1657 = vmul.f32 %v1654, %v1656
    %v1658 = vadd.f32 %v1654, %v1657
    %vm1659 = vweird.f32 %v1653
    %vm1660 = vweird.f32 %v1654
    %vm1661 = vmor %vm1659, %vm1660
    %v1662 = vsel %vm1661, %v1654, %v1658
    %v1663 = vand.u32 2147483647, %v1653
    %vm1664 = vcmp.eq.f32.partialorder %v1663, 8.507059e+37
    %v1665 = vand.u32 %v1653, 2147483648
    %v1666 = vor.u32 1.1754944e-38, %v1665
    %v1667 = vsel %vm1664, %v1666, %v1662
    %v1668 = vmul.f32 1.0, %v1667
    %v1670 = vrot.slane %v1402, 6
    %v1672 = vmul.f32 %v1648, %v1670
    %v1673 = vmul.f32 %v1629, %v1649
    %v1674 = vadd.f32 %v1672, %v1673
    %v1675 = vtanh.pop %v1674
    %v1676 = vmul.f32 %v1668, %v1675
    %v1677 = vxor.u32 %v1607, 2147483648
    %v1678 = vmul.f32 %v1677, 1.442695
    %v1679 = vpow.pop %v1678
    %v1680 = vadd.f32 %v1679, 1.0
    %v1681 = vrcp.pop %v1680
    %v1682 = vmul.f32 %v1680, %v1681
    %v1683 = vsub.f32 1.0, %v1682
    %v1684 = vmul.f32 %v1681, %v1683
    %v1685 = vadd.f32 %v1681, %v1684
    %vm1686 = vweird.f32 %v1680
    %vm1687 = vweird.f32 %v1681
    %vm1688 = vmor %vm1686, %vm1687
    %v1689 = vsel %vm1688, %v1681, %v1685
    %v1690 = vand.u32 2147483647, %v1680
    %vm1691 = vcmp.eq.f32.partialorder %v1690, 8.507059e+37
    %v1692 = vand.u32 %v1680, 2147483648
    %v1693 = vor.u32 1.1754944e-38, %v1692
    %v1694 = vsel %vm1691, %v1693, %v1689
    %v1695 = vmul.f32 1.0, %v1694
    %v1696 = vxor.u32 %v1608, 2147483648
    %v1697 = vmul.f32 %v1696, 1.442695
    %v1698 = vpow.pop %v1697
    %v1699 = vadd.f32 %v1698, 1.0
    %v1700 = vrcp.pop %v1699
    %v1701 = vmul.f32 %v1699, %v1700
    %v1702 = vsub.f32 1.0, %v1701
    %v1703 = vmul.f32 %v1700, %v1702
    %v1704 = vadd.f32 %v1700, %v1703
    %vm1705 = vweird.f32 %v1699
    %vm1706 = vweird.f32 %v1700
    %vm1707 = vmor %vm1705, %vm1706
    %v1708 = vsel %vm1707, %v1700, %v1704
    %v1709 = vand.u32 2147483647, %v1699
    %vm1710 = vcmp.eq.f32.partialorder %v1709, 8.507059e+37
    %v1711 = vand.u32 %v1699, 2147483648
    %v1712 = vor.u32 1.1754944e-38, %v1711
    %v1713 = vsel %vm1710, %v1712, %v1708
    %v1714 = vmul.f32 1.0, %v1713
    %v1715 = vtanh.pop %v1609
    %v1716 = vxor.u32 %v1610, 2147483648
    %v1717 = vmul.f32 %v1716, 1.442695
    %v1718 = vpow.pop %v1717
    %v1719 = vadd.f32 %v1718, 1.0
    %v1720 = vrcp.pop %v1719
    %v1721 = vmul.f32 %v1719, %v1720
    %v1722 = vsub.f32 1.0, %v1721
    %v1723 = vmul.f32 %v1720, %v1722
    %v1724 = vadd.f32 %v1720, %v1723
    %vm1725 = vweird.f32 %v1719
    %vm1726 = vweird.f32 %v1720
    %vm1727 = vmor %vm1725, %vm1726
    %v1728 = vsel %vm1727, %v1720, %v1724
    %v1729 = vand.u32 2147483647, %v1719
    %vm1730 = vcmp.eq.f32.partialorder %v1729, 8.507059e+37
    %v1731 = vand.u32 %v1719, 2147483648
    %v1732 = vor.u32 1.1754944e-38, %v1731
    %v1733 = vsel %vm1730, %v1732, %v1728
    %v1734 = vmul.f32 1.0, %v1733
    %v1736 = vrot.slane %v1468, 2
    %v1738 = vmul.f32 %v1714, %v1736
    %v1739 = vmul.f32 %v1695, %v1715
    %v1740 = vadd.f32 %v1738, %v1739
    %v1741 = vtanh.pop %v1740
    %v1742 = vmul.f32 %v1734, %v1741
    %v1744 = vrot.slane %v1676, 6
    %v1746 = vmax.f32 %v1474, %v1744
    %v1748 = vrot.slane %v1742, 2
    %v1750 = vmax.f32 %v1478, %v1748
    %v1751 = vpack.c.bf16 %v1676, %v1676
    %v1753 = vrot.slane %v1751, 3
    %1755 = vmatpush.bf16.msra.mxu0 %v466
    %1756 = vmatpush.bf16.msra.mxu0 %v462
    %1757 = vmatpush.bf16.msra.mxu0 %v458
    %1758 = vmatpush.bf16.msra.mxu0 %v454
    %1759 = vmatpush.bf16.msra.mxu0 %v450
    %1760 = vmatpush.bf16.msra.mxu0 %v446
    %1761 = vmatpush.bf16.msra.mxu0 %v442
    %1762 = vmatpush.bf16.msra.mxu0 %v438
    %1763 = vmatmul.bf16.gmra.mxu0 %v1753
    %v1764 = vpop.f32.mrf.mxu0
    %v1765 = vadd.f32 0.0, %v1764
    %v1766 = vpop.f32.mrf.mxu0
    %1767 = vdwg.mxu0
    %1768 = vmatpush.bf16.msra.mxu0 %v467
    %1769 = vmatpush.bf16.msra.mxu0 %v463
    %1770 = vmatpush.bf16.msra.mxu0 %v459
    %1771 = vmatpush.bf16.msra.mxu0 %v455
    %1772 = vmatpush.bf16.msra.mxu0 %v451
    %1773 = vmatpush.bf16.msra.mxu0 %v447
    %1774 = vmatpush.bf16.msra.mxu0 %v443
    %1775 = vmatpush.bf16.msra.mxu0 %v439
    %1776 = vmatmul.bf16.gmra.mxu0 %v1753
    %v1777 = vpop.f32.mrf.mxu0
    %v1778 = vadd.f32 0.0, %v1777
    %v1779 = vpop.f32.mrf.mxu0
    %1780 = vdwg.mxu0
    %1781 = vmatpush.bf16.msra.mxu0 %v468
    %1782 = vmatpush.bf16.msra.mxu0 %v464
    %1783 = vmatpush.bf16.msra.mxu0 %v460
    %1784 = vmatpush.bf16.msra.mxu0 %v456
    %1785 = vmatpush.bf16.msra.mxu0 %v452
    %1786 = vmatpush.bf16.msra.mxu0 %v448
    %1787 = vmatpush.bf16.msra.mxu0 %v444
    %1788 = vmatpush.bf16.msra.mxu0 %v440
    %1789 = vmatmul.bf16.gmra.mxu0 %v1753
    %v1790 = vpop.f32.mrf.mxu0
    %v1791 = vadd.f32 0.0, %v1790
    %v1792 = vpop.f32.mrf.mxu0
    %1793 = vdwg.mxu0
    %1794 = vmatpush.bf16.msra.mxu0 %v469
    %1795 = vmatpush.bf16.msra.mxu0 %v465
    %1796 = vmatpush.bf16.msra.mxu0 %v461
    %1797 = vmatpush.bf16.msra.mxu0 %v457
    %1798 = vmatpush.bf16.msra.mxu0 %v453
    %1799 = vmatpush.bf16.msra.mxu0 %v449
    %1800 = vmatpush.bf16.msra.mxu0 %v445
    %1801 = vmatpush.bf16.msra.mxu0 %v441
    %1802 = vmatmul.bf16.gmra.mxu0 %v1753
    %v1803 = vpop.f32.mrf.mxu0
    %v1804 = vadd.f32 0.0, %v1803
    %v1805 = vpop.f32.mrf.mxu0
    %1806 = vdwg.mxu0
    %v1807 = vadd.f32 %v177, %v1765
    %v1808 = vadd.f32 %v191, %v1778
    %v1809 = vadd.f32 %v205, %v1791
    %v1810 = vadd.f32 %v219, %v1804
    %v1811 = vpack.c.bf16 %v1742, %v1742
    %1812 = vmatpush.bf16.msra.mxu0 %v682
    %1813 = vmatpush.bf16.msra.mxu0 %v678
    %1814 = vmatpush.bf16.msra.mxu0 %v674
    %1815 = vmatpush.bf16.msra.mxu0 %v670
    %1816 = vmatpush.bf16.msra.mxu0 %v666
    %1817 = vmatpush.bf16.msra.mxu0 %v662
    %1818 = vmatpush.bf16.msra.mxu0 %v658
    %1819 = vmatpush.bf16.msra.mxu0 %v654
    %1820 = vmatmul.bf16.gmra.mxu0 %v1811
    %v1821 = vpop.f32.mrf.mxu0
    %v1822 = vadd.f32 0.0, %v1821
    %v1823 = vpop.f32.mrf.mxu0
    %1824 = vdwg.mxu0
    %1825 = vmatpush.bf16.msra.mxu0 %v683
    %1826 = vmatpush.bf16.msra.mxu0 %v679
    %1827 = vmatpush.bf16.msra.mxu0 %v675
    %1828 = vmatpush.bf16.msra.mxu0 %v671
    %1829 = vmatpush.bf16.msra.mxu0 %v667
    %1830 = vmatpush.bf16.msra.mxu0 %v663
    %1831 = vmatpush.bf16.msra.mxu0 %v659
    %1832 = vmatpush.bf16.msra.mxu0 %v655
    %1833 = vmatmul.bf16.gmra.mxu0 %v1811
    %v1834 = vpop.f32.mrf.mxu0
    %v1835 = vadd.f32 0.0, %v1834
    %v1836 = vpop.f32.mrf.mxu0
    %1837 = vdwg.mxu0
    %1838 = vmatpush.bf16.msra.mxu0 %v684
    %1839 = vmatpush.bf16.msra.mxu0 %v680
    %1840 = vmatpush.bf16.msra.mxu0 %v676
    %1841 = vmatpush.bf16.msra.mxu0 %v672
    %1842 = vmatpush.bf16.msra.mxu0 %v668
    %1843 = vmatpush.bf16.msra.mxu0 %v664
    %1844 = vmatpush.bf16.msra.mxu0 %v660
    %1845 = vmatpush.bf16.msra.mxu0 %v656
    %1846 = vmatmul.bf16.gmra.mxu0 %v1811
    %v1847 = vpop.f32.mrf.mxu0
    %v1848 = vadd.f32 0.0, %v1847
    %v1849 = vpop.f32.mrf.mxu0
    %1850 = vdwg.mxu0
    %1851 = vmatpush.bf16.msra.mxu0 %v685
    %1852 = vmatpush.bf16.msra.mxu0 %v681
    %1853 = vmatpush.bf16.msra.mxu0 %v677
    %1854 = vmatpush.bf16.msra.mxu0 %v673
    %1855 = vmatpush.bf16.msra.mxu0 %v669
    %1856 = vmatpush.bf16.msra.mxu0 %v665
    %1857 = vmatpush.bf16.msra.mxu0 %v661
    %1858 = vmatpush.bf16.msra.mxu0 %v657
    %1859 = vmatmul.bf16.gmra.mxu0 %v1811
    %v1860 = vpop.f32.mrf.mxu0
    %v1861 = vadd.f32 0.0, %v1860
    %v1862 = vpop.f32.mrf.mxu0
    %1863 = vdwg.mxu0
    %v1868 = vrot.slane %v1822, 2
    %v1869 = vrot.slane %v1835, 2
    %v1870 = vrot.slane %v1848, 2
    %v1871 = vrot.slane %v1861, 2
    %v1876 = vadd.f32 %v231, %v1868
    %v1877 = vadd.f32 %v245, %v1869
    %v1878 = vadd.f32 %v259, %v1870
    %v1879 = vadd.f32 %v273, %v1871
    %v1880 = vxor.u32 %v1807, 2147483648
    %v1881 = vmul.f32 %v1880, 1.442695
    %v1882 = vpow.pop %v1881
    %v1883 = vadd.f32 %v1882, 1.0
    %v1884 = vrcp.pop %v1883
    %v1885 = vmul.f32 %v1883, %v1884
    %v1886 = vsub.f32 1.0, %v1885
    %v1887 = vmul.f32 %v1884, %v1886
    %v1888 = vadd.f32 %v1884, %v1887
    %vm1889 = vweird.f32 %v1883
    %vm1890 = vweird.f32 %v1884
    %vm1891 = vmor %vm1889, %vm1890
    %v1892 = vsel %vm1891, %v1884, %v1888
    %v1893 = vand.u32 2147483647, %v1883
    %vm1894 = vcmp.eq.f32.partialorder %v1893, 8.507059e+37
    %v1895 = vand.u32 %v1883, 2147483648
    %v1896 = vor.u32 1.1754944e-38, %v1895
    %v1897 = vsel %vm1894, %v1896, %v1892
    %v1898 = vmul.f32 1.0, %v1897
    %v1899 = vxor.u32 %v1808, 2147483648
    %v1900 = vmul.f32 %v1899, 1.442695
    %v1901 = vpow.pop %v1900
    %v1902 = vadd.f32 %v1901, 1.0
    %v1903 = vrcp.pop %v1902
    %v1904 = vmul.f32 %v1902, %v1903
    %v1905 = vsub.f32 1.0, %v1904
    %v1906 = vmul.f32 %v1903, %v1905
    %v1907 = vadd.f32 %v1903, %v1906
    %vm1908 = vweird.f32 %v1902
    %vm1909 = vweird.f32 %v1903
    %vm1910 = vmor %vm1908, %vm1909
    %v1911 = vsel %vm1910, %v1903, %v1907
    %v1912 = vand.u32 2147483647, %v1902
    %vm1913 = vcmp.eq.f32.partialorder %v1912, 8.507059e+37
    %v1914 = vand.u32 %v1902, 2147483648
    %v1915 = vor.u32 1.1754944e-38, %v1914
    %v1916 = vsel %vm1913, %v1915, %v1911
    %v1917 = vmul.f32 1.0, %v1916
    %v1918 = vtanh.pop %v1809
    %v1919 = vxor.u32 %v1810, 2147483648
    %v1920 = vmul.f32 %v1919, 1.442695
    %v1921 = vpow.pop %v1920
    %v1922 = vadd.f32 %v1921, 1.0
    %v1923 = vrcp.pop %v1922
    %v1924 = vmul.f32 %v1922, %v1923
    %v1925 = vsub.f32 1.0, %v1924
    %v1926 = vmul.f32 %v1923, %v1925
    %v1927 = vadd.f32 %v1923, %v1926
    %vm1928 = vweird.f32 %v1922
    %vm1929 = vweird.f32 %v1923
    %vm1930 = vmor %vm1928, %vm1929
    %v1931 = vsel %vm1930, %v1923, %v1927
    %v1932 = vand.u32 2147483647, %v1922
    %vm1933 = vcmp.eq.f32.partialorder %v1932, 8.507059e+37
    %v1934 = vand.u32 %v1922, 2147483648
    %v1935 = vor.u32 1.1754944e-38, %v1934
    %v1936 = vsel %vm1933, %v1935, %v1931
    %v1937 = vmul.f32 1.0, %v1936
    %v1939 = vrot.slane %v1674, 6
    %v1941 = vmul.f32 %v1917, %v1939
    %v1942 = vmul.f32 %v1898, %v1918
    %v1943 = vadd.f32 %v1941, %v1942
    %v1944 = vtanh.pop %v1943
    %v1945 = vmul.f32 %v1937, %v1944
    %v1946 = vxor.u32 %v1876, 2147483648
    %v1947 = vmul.f32 %v1946, 1.442695
    %v1948 = vpow.pop %v1947
    %v1949 = vadd.f32 %v1948, 1.0
    %v1950 = vrcp.pop %v1949
    %v1951 = vmul.f32 %v1949, %v1950
    %v1952 = vsub.f32 1.0, %v1951
    %v1953 = vmul.f32 %v1950, %v1952
    %v1954 = vadd.f32 %v1950, %v1953
    %vm1955 = vweird.f32 %v1949
    %vm1956 = vweird.f32 %v1950
    %vm1957 = vmor %vm1955, %vm1956
    %v1958 = vsel %vm1957, %v1950, %v1954
    %v1959 = vand.u32 2147483647, %v1949
    %vm1960 = vcmp.eq.f32.partialorder %v1959, 8.507059e+37
    %v1961 = vand.u32 %v1949, 2147483648
    %v1962 = vor.u32 1.1754944e-38, %v1961
    %v1963 = vsel %vm1960, %v1962, %v1958
    %v1964 = vmul.f32 1.0, %v1963
    %v1965 = vxor.u32 %v1877, 2147483648
    %v1966 = vmul.f32 %v1965, 1.442695
    %v1967 = vpow.pop %v1966
    %v1968 = vadd.f32 %v1967, 1.0
    %v1969 = vrcp.pop %v1968
    %v1970 = vmul.f32 %v1968, %v1969
    %v1971 = vsub.f32 1.0, %v1970
    %v1972 = vmul.f32 %v1969, %v1971
    %v1973 = vadd.f32 %v1969, %v1972
    %vm1974 = vweird.f32 %v1968
    %vm1975 = vweird.f32 %v1969
    %vm1976 = vmor %vm1974, %vm1975
    %v1977 = vsel %vm1976, %v1969, %v1973
    %v1978 = vand.u32 2147483647, %v1968
    %vm1979 = vcmp.eq.f32.partialorder %v1978, 8.507059e+37
    %v1980 = vand.u32 %v1968, 2147483648
    %v1981 = vor.u32 1.1754944e-38, %v1980
    %v1982 = vsel %vm1979, %v1981, %v1977
    %v1983 = vmul.f32 1.0, %v1982
    %v1984 = vtanh.pop %v1878
    %v1985 = vxor.u32 %v1879, 2147483648
    %v1986 = vmul.f32 %v1985, 1.442695
    %v1987 = vpow.pop %v1986
    %v1988 = vadd.f32 %v1987, 1.0
    %v1989 = vrcp.pop %v1988
    %v1990 = vmul.f32 %v1988, %v1989
    %v1991 = vsub.f32 1.0, %v1990
    %v1992 = vmul.f32 %v1989, %v1991
    %v1993 = vadd.f32 %v1989, %v1992
    %vm1994 = vweird.f32 %v1988
    %vm1995 = vweird.f32 %v1989
    %vm1996 = vmor %vm1994, %vm1995
    %v1997 = vsel %vm1996, %v1989, %v1993
    %v1998 = vand.u32 2147483647, %v1988
    %vm1999 = vcmp.eq.f32.partialorder %v1998, 8.507059e+37
    %v2000 = vand.u32 %v1988, 2147483648
    %v2001 = vor.u32 1.1754944e-38, %v2000
    %v2002 = vsel %vm1999, %v2001, %v1997
    %v2003 = vmul.f32 1.0, %v2002
    %v2005 = vrot.slane %v1740, 2
    %v2007 = vmul.f32 %v1983, %v2005
    %v2008 = vmul.f32 %v1964, %v1984
    %v2009 = vadd.f32 %v2007, %v2008
    %v2010 = vtanh.pop %v2009
    %v2011 = vmul.f32 %v2003, %v2010
    %v2012 = vmax.f32 %v1746, %v1945
    %v2013 = vmax.f32 %v1750, %v2011
    %v2014 = vpack.c.bf16 %v1945, %v1945
    %2015 = vmatpush.bf16.msra.mxu0 %v466
    %2016 = vmatpush.bf16.msra.mxu0 %v462
    %2017 = vmatpush.bf16.msra.mxu0 %v458
    %2018 = vmatpush.bf16.msra.mxu0 %v454
    %2019 = vmatpush.bf16.msra.mxu0 %v450
    %2020 = vmatpush.bf16.msra.mxu0 %v446
    %2021 = vmatpush.bf16.msra.mxu0 %v442
    %2022 = vmatpush.bf16.msra.mxu0 %v438
    %2023 = vmatmul.bf16.gmra.mxu0 %v2014
    %v2024 = vpop.f32.mrf.mxu0
    %v2025 = vadd.f32 0.0, %v2024
    %v2026 = vpop.f32.mrf.mxu0
    %2027 = vdwg.mxu0
    %2028 = vmatpush.bf16.msra.mxu0 %v467
    %2029 = vmatpush.bf16.msra.mxu0 %v463
    %2030 = vmatpush.bf16.msra.mxu0 %v459
    %2031 = vmatpush.bf16.msra.mxu0 %v455
    %2032 = vmatpush.bf16.msra.mxu0 %v451
    %2033 = vmatpush.bf16.msra.mxu0 %v447
    %2034 = vmatpush.bf16.msra.mxu0 %v443
    %2035 = vmatpush.bf16.msra.mxu0 %v439
    %2036 = vmatmul.bf16.gmra.mxu0 %v2014
    %v2037 = vpop.f32.mrf.mxu0
    %v2038 = vadd.f32 0.0, %v2037
    %v2039 = vpop.f32.mrf.mxu0
    %2040 = vdwg.mxu0
    %2041 = vmatpush.bf16.msra.mxu0 %v468
    %2042 = vmatpush.bf16.msra.mxu0 %v464
    %2043 = vmatpush.bf16.msra.mxu0 %v460
    %2044 = vmatpush.bf16.msra.mxu0 %v456
    %2045 = vmatpush.bf16.msra.mxu0 %v452
    %2046 = vmatpush.bf16.msra.mxu0 %v448
    %2047 = vmatpush.bf16.msra.mxu0 %v444
    %2048 = vmatpush.bf16.msra.mxu0 %v440
    %2049 = vmatmul.bf16.gmra.mxu0 %v2014
    %v2050 = vpop.f32.mrf.mxu0
    %v2051 = vadd.f32 0.0, %v2050
    %v2052 = vpop.f32.mrf.mxu0
    %2053 = vdwg.mxu0
    %2054 = vmatpush.bf16.msra.mxu0 %v469
    %2055 = vmatpush.bf16.msra.mxu0 %v465
    %2056 = vmatpush.bf16.msra.mxu0 %v461
    %2057 = vmatpush.bf16.msra.mxu0 %v457
    %2058 = vmatpush.bf16.msra.mxu0 %v453
    %2059 = vmatpush.bf16.msra.mxu0 %v449
    %2060 = vmatpush.bf16.msra.mxu0 %v445
    %2061 = vmatpush.bf16.msra.mxu0 %v441
    %2062 = vmatmul.bf16.gmra.mxu0 %v2014
    %v2063 = vpop.f32.mrf.mxu0
    %v2064 = vadd.f32 0.0, %v2063
    %v2065 = vpop.f32.mrf.mxu0
    %2066 = vdwg.mxu0
    %v2071 = vrot.slane %v2025, 6
    %v2072 = vrot.slane %v2038, 6
    %v2073 = vrot.slane %v2051, 6
    %v2074 = vrot.slane %v2064, 6
    %v2079 = vadd.f32 %v177, %v2071
    %v2080 = vadd.f32 %v191, %v2072
    %v2081 = vadd.f32 %v205, %v2073
    %v2082 = vadd.f32 %v219, %v2074
    %v2083 = vpack.c.bf16 %v2011, %v2011
    %v2085 = vrot.slane %v2083, 3
    %2087 = vmatpush.bf16.msra.mxu0 %v682
    %2088 = vmatpush.bf16.msra.mxu0 %v678
    %2089 = vmatpush.bf16.msra.mxu0 %v674
    %2090 = vmatpush.bf16.msra.mxu0 %v670
    %2091 = vmatpush.bf16.msra.mxu0 %v666
    %2092 = vmatpush.bf16.msra.mxu0 %v662
    %2093 = vmatpush.bf16.msra.mxu0 %v658
    %2094 = vmatpush.bf16.msra.mxu0 %v654
    %2095 = vmatmul.bf16.gmra.mxu0 %v2085
    %v2096 = vpop.f32.mrf.mxu0
    %v2097 = vadd.f32 0.0, %v2096
    %v2098 = vpop.f32.mrf.mxu0
    %2099 = vdwg.mxu0
    %2100 = vmatpush.bf16.msra.mxu0 %v683
    %2101 = vmatpush.bf16.msra.mxu0 %v679
    %2102 = vmatpush.bf16.msra.mxu0 %v675
    %2103 = vmatpush.bf16.msra.mxu0 %v671
    %2104 = vmatpush.bf16.msra.mxu0 %v667
    %2105 = vmatpush.bf16.msra.mxu0 %v663
    %2106 = vmatpush.bf16.msra.mxu0 %v659
    %2107 = vmatpush.bf16.msra.mxu0 %v655
    %2108 = vmatmul.bf16.gmra.mxu0 %v2085
    %v2109 = vpop.f32.mrf.mxu0
    %v2110 = vadd.f32 0.0, %v2109
    %v2111 = vpop.f32.mrf.mxu0
    %2112 = vdwg.mxu0
    %2113 = vmatpush.bf16.msra.mxu0 %v684
    %2114 = vmatpush.bf16.msra.mxu0 %v680
    %2115 = vmatpush.bf16.msra.mxu0 %v676
    %2116 = vmatpush.bf16.msra.mxu0 %v672
    %2117 = vmatpush.bf16.msra.mxu0 %v668
    %2118 = vmatpush.bf16.msra.mxu0 %v664
    %2119 = vmatpush.bf16.msra.mxu0 %v660
    %2120 = vmatpush.bf16.msra.mxu0 %v656
    %2121 = vmatmul.bf16.gmra.mxu0 %v2085
    %v2122 = vpop.f32.mrf.mxu0
    %v2123 = vadd.f32 0.0, %v2122
    %v2124 = vpop.f32.mrf.mxu0
    %2125 = vdwg.mxu0
    %2126 = vmatpush.bf16.msra.mxu0 %v685
    %2127 = vmatpush.bf16.msra.mxu0 %v681
    %2128 = vmatpush.bf16.msra.mxu0 %v677
    %2129 = vmatpush.bf16.msra.mxu0 %v673
    %2130 = vmatpush.bf16.msra.mxu0 %v669
    %2131 = vmatpush.bf16.msra.mxu0 %v665
    %2132 = vmatpush.bf16.msra.mxu0 %v661
    %2133 = vmatpush.bf16.msra.mxu0 %v657
    %2134 = vmatmul.bf16.gmra.mxu0 %v2085
    %v2135 = vpop.f32.mrf.mxu0
    %v2136 = vadd.f32 0.0, %v2135
    %v2137 = vpop.f32.mrf.mxu0
    %2138 = vdwg.mxu0
    %v2143 = vrot.slane %v2097, 4
    %v2144 = vrot.slane %v2110, 4
    %v2145 = vrot.slane %v2123, 4
    %v2146 = vrot.slane %v2136, 4
    %v2151 = vadd.f32 %v231, %v2143
    %v2152 = vadd.f32 %v245, %v2144
    %v2153 = vadd.f32 %v259, %v2145
    %v2154 = vadd.f32 %v273, %v2146
    %v2155 = vxor.u32 %v2079, 2147483648
    %v2156 = vmul.f32 %v2155, 1.442695
    %v2157 = vpow.pop %v2156
    %v2158 = vadd.f32 %v2157, 1.0
    %v2159 = vrcp.pop %v2158
    %v2160 = vmul.f32 %v2158, %v2159
    %v2161 = vsub.f32 1.0, %v2160
    %v2162 = vmul.f32 %v2159, %v2161
    %v2163 = vadd.f32 %v2159, %v2162
    %vm2164 = vweird.f32 %v2158
    %vm2165 = vweird.f32 %v2159
    %vm2166 = vmor %vm2164, %vm2165
    %v2167 = vsel %vm2166, %v2159, %v2163
    %v2168 = vand.u32 2147483647, %v2158
    %vm2169 = vcmp.eq.f32.partialorder %v2168, 8.507059e+37
    %v2170 = vand.u32 %v2158, 2147483648
    %v2171 = vor.u32 1.1754944e-38, %v2170
    %v2172 = vsel %vm2169, %v2171, %v2167
    %v2173 = vmul.f32 1.0, %v2172
    %v2174 = vxor.u32 %v2080, 2147483648
    %v2175 = vmul.f32 %v2174, 1.442695
    %v2176 = vpow.pop %v2175
    %v2177 = vadd.f32 %v2176, 1.0
    %v2178 = vrcp.pop %v2177
    %v2179 = vmul.f32 %v2177, %v2178
    %v2180 = vsub.f32 1.0, %v2179
    %v2181 = vmul.f32 %v2178, %v2180
    %v2182 = vadd.f32 %v2178, %v2181
    %vm2183 = vweird.f32 %v2177
    %vm2184 = vweird.f32 %v2178
    %vm2185 = vmor %vm2183, %vm2184
    %v2186 = vsel %vm2185, %v2178, %v2182
    %v2187 = vand.u32 2147483647, %v2177
    %vm2188 = vcmp.eq.f32.partialorder %v2187, 8.507059e+37
    %v2189 = vand.u32 %v2177, 2147483648
    %v2190 = vor.u32 1.1754944e-38, %v2189
    %v2191 = vsel %vm2188, %v2190, %v2186
    %v2192 = vmul.f32 1.0, %v2191
    %v2193 = vtanh.pop %v2081
    %v2194 = vxor.u32 %v2082, 2147483648
    %v2195 = vmul.f32 %v2194, 1.442695
    %v2196 = vpow.pop %v2195
    %v2197 = vadd.f32 %v2196, 1.0
    %v2198 = vrcp.pop %v2197
    %v2199 = vmul.f32 %v2197, %v2198
    %v2200 = vsub.f32 1.0, %v2199
    %v2201 = vmul.f32 %v2198, %v2200
    %v2202 = vadd.f32 %v2198, %v2201
    %vm2203 = vweird.f32 %v2197
    %vm2204 = vweird.f32 %v2198
    %vm2205 = vmor %vm2203, %vm2204
    %v2206 = vsel %vm2205, %v2198, %v2202
    %v2207 = vand.u32 2147483647, %v2197
    %vm2208 = vcmp.eq.f32.partialorder %v2207, 8.507059e+37
    %v2209 = vand.u32 %v2197, 2147483648
    %v2210 = vor.u32 1.1754944e-38, %v2209
    %v2211 = vsel %vm2208, %v2210, %v2206
    %v2212 = vmul.f32 1.0, %v2211
    %v2214 = vrot.slane %v1943, 6
    %v2216 = vmul.f32 %v2192, %v2214
    %v2217 = vmul.f32 %v2173, %v2193
    %v2218 = vadd.f32 %v2216, %v2217
    %v2219 = vtanh.pop %v2218
    %v2220 = vmul.f32 %v2212, %v2219
    %v2221 = vxor.u32 %v2151, 2147483648
    %v2222 = vmul.f32 %v2221, 1.442695
    %v2223 = vpow.pop %v2222
    %v2224 = vadd.f32 %v2223, 1.0
    %v2225 = vrcp.pop %v2224
    %v2226 = vmul.f32 %v2224, %v2225
    %v2227 = vsub.f32 1.0, %v2226
    %v2228 = vmul.f32 %v2225, %v2227
    %v2229 = vadd.f32 %v2225, %v2228
    %vm2230 = vweird.f32 %v2224
    %vm2231 = vweird.f32 %v2225
    %vm2232 = vmor %vm2230, %vm2231
    %v2233 = vsel %vm2232, %v2225, %v2229
    %v2234 = vand.u32 2147483647, %v2224
    %vm2235 = vcmp.eq.f32.partialorder %v2234, 8.507059e+37
    %v2236 = vand.u32 %v2224, 2147483648
    %v2237 = vor.u32 1.1754944e-38, %v2236
    %v2238 = vsel %vm2235, %v2237, %v2233
    %v2239 = vmul.f32 1.0, %v2238
    %v2240 = vxor.u32 %v2152, 2147483648
    %v2241 = vmul.f32 %v2240, 1.442695
    %v2242 = vpow.pop %v2241
    %v2243 = vadd.f32 %v2242, 1.0
    %v2244 = vrcp.pop %v2243
    %v2245 = vmul.f32 %v2243, %v2244
    %v2246 = vsub.f32 1.0, %v2245
    %v2247 = vmul.f32 %v2244, %v2246
    %v2248 = vadd.f32 %v2244, %v2247
    %vm2249 = vweird.f32 %v2243
    %vm2250 = vweird.f32 %v2244
    %vm2251 = vmor %vm2249, %vm2250
    %v2252 = vsel %vm2251, %v2244, %v2248
    %v2253 = vand.u32 2147483647, %v2243
    %vm2254 = vcmp.eq.f32.partialorder %v2253, 8.507059e+37
    %v2255 = vand.u32 %v2243, 2147483648
    %v2256 = vor.u32 1.1754944e-38, %v2255
    %v2257 = vsel %vm2254, %v2256, %v2252
    %v2258 = vmul.f32 1.0, %v2257
    %v2259 = vtanh.pop %v2153
    %v2260 = vxor.u32 %v2154, 2147483648
    %v2261 = vmul.f32 %v2260, 1.442695
    %v2262 = vpow.pop %v2261
    %v2263 = vadd.f32 %v2262, 1.0
    %v2264 = vrcp.pop %v2263
    %v2265 = vmul.f32 %v2263, %v2264
    %v2266 = vsub.f32 1.0, %v2265
    %v2267 = vmul.f32 %v2264, %v2266
    %v2268 = vadd.f32 %v2264, %v2267
    %vm2269 = vweird.f32 %v2263
    %vm2270 = vweird.f32 %v2264
    %vm2271 = vmor %vm2269, %vm2270
    %v2272 = vsel %vm2271, %v2264, %v2268
    %v2273 = vand.u32 2147483647, %v2263
    %vm2274 = vcmp.eq.f32.partialorder %v2273, 8.507059e+37
    %v2275 = vand.u32 %v2263, 2147483648
    %v2276 = vor.u32 1.1754944e-38, %v2275
    %v2277 = vsel %vm2274, %v2276, %v2272
    %v2278 = vmul.f32 1.0, %v2277
    %v2280 = vrot.slane %v2009, 2
    %v2282 = vmul.f32 %v2258, %v2280
    %v2283 = vmul.f32 %v2239, %v2259
    %v2284 = vadd.f32 %v2282, %v2283
    %v2285 = vtanh.pop %v2284
    %v2286 = vmul.f32 %v2278, %v2285
    %v2288 = vrot.slane %v2220, 2
    %v2290 = vmax.f32 %v2012, %v2288
    %v2292 = vrot.slane %v2286, 6
    %v2294 = vmax.f32 %v2013, %v2292
    %v2295 = vpack.c.bf16 %v2220, %v2220
    %v2297 = vrot.slane %v2295, 1
    %2299 = vmatpush.bf16.msra.mxu0 %v466
    %2300 = vmatpush.bf16.msra.mxu0 %v462
    %2301 = vmatpush.bf16.msra.mxu0 %v458
    %2302 = vmatpush.bf16.msra.mxu0 %v454
    %2303 = vmatpush.bf16.msra.mxu0 %v450
    %2304 = vmatpush.bf16.msra.mxu0 %v446
    %2305 = vmatpush.bf16.msra.mxu0 %v442
    %2306 = vmatpush.bf16.msra.mxu0 %v438
    %2307 = vmatmul.bf16.gmra.mxu0 %v2297
    %v2308 = vpop.f32.mrf.mxu0
    %v2309 = vadd.f32 0.0, %v2308
    %v2310 = vpop.f32.mrf.mxu0
    %2311 = vdwg.mxu0
    %2312 = vmatpush.bf16.msra.mxu0 %v467
    %2313 = vmatpush.bf16.msra.mxu0 %v463
    %2314 = vmatpush.bf16.msra.mxu0 %v459
    %2315 = vmatpush.bf16.msra.mxu0 %v455
    %2316 = vmatpush.bf16.msra.mxu0 %v451
    %2317 = vmatpush.bf16.msra.mxu0 %v447
    %2318 = vmatpush.bf16.msra.mxu0 %v443
    %2319 = vmatpush.bf16.msra.mxu0 %v439
    %2320 = vmatmul.bf16.gmra.mxu0 %v2297
    %v2321 = vpop.f32.mrf.mxu0
    %v2322 = vadd.f32 0.0, %v2321
    %v2323 = vpop.f32.mrf.mxu0
    %2324 = vdwg.mxu0
    %2325 = vmatpush.bf16.msra.mxu0 %v468
    %2326 = vmatpush.bf16.msra.mxu0 %v464
    %2327 = vmatpush.bf16.msra.mxu0 %v460
    %2328 = vmatpush.bf16.msra.mxu0 %v456
    %2329 = vmatpush.bf16.msra.mxu0 %v452
    %2330 = vmatpush.bf16.msra.mxu0 %v448
    %2331 = vmatpush.bf16.msra.mxu0 %v444
    %2332 = vmatpush.bf16.msra.mxu0 %v440
    %2333 = vmatmul.bf16.gmra.mxu0 %v2297
    %v2334 = vpop.f32.mrf.mxu0
    %v2335 = vadd.f32 0.0, %v2334
    %v2336 = vpop.f32.mrf.mxu0
    %2337 = vdwg.mxu0
    %2338 = vmatpush.bf16.msra.mxu0 %v469
    %2339 = vmatpush.bf16.msra.mxu0 %v465
    %2340 = vmatpush.bf16.msra.mxu0 %v461
    %2341 = vmatpush.bf16.msra.mxu0 %v457
    %2342 = vmatpush.bf16.msra.mxu0 %v453
    %2343 = vmatpush.bf16.msra.mxu0 %v449
    %2344 = vmatpush.bf16.msra.mxu0 %v445
    %2345 = vmatpush.bf16.msra.mxu0 %v441
    %2346 = vmatmul.bf16.gmra.mxu0 %v2297
    %v2347 = vpop.f32.mrf.mxu0
    %v2348 = vadd.f32 0.0, %v2347
    %v2349 = vpop.f32.mrf.mxu0
    %2350 = vdwg.mxu0
    %v2355 = vrot.slane %v2309, 4
    %v2356 = vrot.slane %v2322, 4
    %v2357 = vrot.slane %v2335, 4
    %v2358 = vrot.slane %v2348, 4
    %v2363 = vadd.f32 %v177, %v2355
    %v2364 = vadd.f32 %v191, %v2356
    %v2365 = vadd.f32 %v205, %v2357
    %v2366 = vadd.f32 %v219, %v2358
    %v2367 = vpack.c.bf16 %v2286, %v2286
    %v2369 = vrot.slane %v2367, 2
    %2371 = vmatpush.bf16.msra.mxu0 %v682
    %2372 = vmatpush.bf16.msra.mxu0 %v678
    %2373 = vmatpush.bf16.msra.mxu0 %v674
    %2374 = vmatpush.bf16.msra.mxu0 %v670
    %2375 = vmatpush.bf16.msra.mxu0 %v666
    %2376 = vmatpush.bf16.msra.mxu0 %v662
    %2377 = vmatpush.bf16.msra.mxu0 %v658
    %2378 = vmatpush.bf16.msra.mxu0 %v654
    %2379 = vmatmul.bf16.gmra.mxu0 %v2369
    %v2380 = vpop.f32.mrf.mxu0
    %v2381 = vadd.f32 0.0, %v2380
    %v2382 = vpop.f32.mrf.mxu0
    %2383 = vdwg.mxu0
    %2384 = vmatpush.bf16.msra.mxu0 %v683
    %2385 = vmatpush.bf16.msra.mxu0 %v679
    %2386 = vmatpush.bf16.msra.mxu0 %v675
    %2387 = vmatpush.bf16.msra.mxu0 %v671
    %2388 = vmatpush.bf16.msra.mxu0 %v667
    %2389 = vmatpush.bf16.msra.mxu0 %v663
    %2390 = vmatpush.bf16.msra.mxu0 %v659
    %2391 = vmatpush.bf16.msra.mxu0 %v655
    %2392 = vmatmul.bf16.gmra.mxu0 %v2369
    %v2393 = vpop.f32.mrf.mxu0
    %v2394 = vadd.f32 0.0, %v2393
    %v2395 = vpop.f32.mrf.mxu0
    %2396 = vdwg.mxu0
    %2397 = vmatpush.bf16.msra.mxu0 %v684
    %2398 = vmatpush.bf16.msra.mxu0 %v680
    %2399 = vmatpush.bf16.msra.mxu0 %v676
    %2400 = vmatpush.bf16.msra.mxu0 %v672
    %2401 = vmatpush.bf16.msra.mxu0 %v668
    %2402 = vmatpush.bf16.msra.mxu0 %v664
    %2403 = vmatpush.bf16.msra.mxu0 %v660
    %2404 = vmatpush.bf16.msra.mxu0 %v656
    %2405 = vmatmul.bf16.gmra.mxu0 %v2369
    %v2406 = vpop.f32.mrf.mxu0
    %v2407 = vadd.f32 0.0, %v2406
    %v2408 = vpop.f32.mrf.mxu0
    %2409 = vdwg.mxu0
    %2410 = vmatpush.bf16.msra.mxu0 %v685
    %2411 = vmatpush.bf16.msra.mxu0 %v681
    %2412 = vmatpush.bf16.msra.mxu0 %v677
    %2413 = vmatpush.bf16.msra.mxu0 %v673
    %2414 = vmatpush.bf16.msra.mxu0 %v669
    %2415 = vmatpush.bf16.msra.mxu0 %v665
    %2416 = vmatpush.bf16.msra.mxu0 %v661
    %2417 = vmatpush.bf16.msra.mxu0 %v657
    %2418 = vmatmul.bf16.gmra.mxu0 %v2369
    %v2419 = vpop.f32.mrf.mxu0
    %v2420 = vadd.f32 0.0, %v2419
    %v2421 = vpop.f32.mrf.mxu0
    %2422 = vdwg.mxu0
    %v2427 = vrot.slane %v2381, 6
    %v2428 = vrot.slane %v2394, 6
    %v2429 = vrot.slane %v2407, 6
    %v2430 = vrot.slane %v2420, 6
    %v2435 = vadd.f32 %v231, %v2427
    %v2436 = vadd.f32 %v245, %v2428
    %v2437 = vadd.f32 %v259, %v2429
    %v2438 = vadd.f32 %v273, %v2430
    %v2439 = vxor.u32 %v2363, 2147483648
    %v2440 = vmul.f32 %v2439, 1.442695
    %v2441 = vpow.pop %v2440
    %v2442 = vadd.f32 %v2441, 1.0
    %v2443 = vrcp.pop %v2442
    %v2444 = vmul.f32 %v2442, %v2443
    %v2445 = vsub.f32 1.0, %v2444
    %v2446 = vmul.f32 %v2443, %v2445
    %v2447 = vadd.f32 %v2443, %v2446
    %vm2448 = vweird.f32 %v2442
    %vm2449 = vweird.f32 %v2443
    %vm2450 = vmor %vm2448, %vm2449
    %v2451 = vsel %vm2450, %v2443, %v2447
    %v2452 = vand.u32 2147483647, %v2442
    %vm2453 = vcmp.eq.f32.partialorder %v2452, 8.507059e+37
    %v2454 = vand.u32 %v2442, 2147483648
    %v2455 = vor.u32 1.1754944e-38, %v2454
    %v2456 = vsel %vm2453, %v2455, %v2451
    %v2457 = vmul.f32 1.0, %v2456
    %v2458 = vxor.u32 %v2364, 2147483648
    %v2459 = vmul.f32 %v2458, 1.442695
    %v2460 = vpow.pop %v2459
    %v2461 = vadd.f32 %v2460, 1.0
    %v2462 = vrcp.pop %v2461
    %v2463 = vmul.f32 %v2461, %v2462
    %v2464 = vsub.f32 1.0, %v2463
    %v2465 = vmul.f32 %v2462, %v2464
    %v2466 = vadd.f32 %v2462, %v2465
    %vm2467 = vweird.f32 %v2461
    %vm2468 = vweird.f32 %v2462
    %vm2469 = vmor %vm2467, %vm2468
    %v2470 = vsel %vm2469, %v2462, %v2466
    %v2471 = vand.u32 2147483647, %v2461
    %vm2472 = vcmp.eq.f32.partialorder %v2471, 8.507059e+37
    %v2473 = vand.u32 %v2461, 2147483648
    %v2474 = vor.u32 1.1754944e-38, %v2473
    %v2475 = vsel %vm2472, %v2474, %v2470
    %v2476 = vmul.f32 1.0, %v2475
    %v2477 = vtanh.pop %v2365
    %v2478 = vxor.u32 %v2366, 2147483648
    %v2479 = vmul.f32 %v2478, 1.442695
    %v2480 = vpow.pop %v2479
    %v2481 = vadd.f32 %v2480, 1.0
    %v2482 = vrcp.pop %v2481
    %v2483 = vmul.f32 %v2481, %v2482
    %v2484 = vsub.f32 1.0, %v2483
    %v2485 = vmul.f32 %v2482, %v2484
    %v2486 = vadd.f32 %v2482, %v2485
    %vm2487 = vweird.f32 %v2481
    %vm2488 = vweird.f32 %v2482
    %vm2489 = vmor %vm2487, %vm2488
    %v2490 = vsel %vm2489, %v2482, %v2486
    %v2491 = vand.u32 2147483647, %v2481
    %vm2492 = vcmp.eq.f32.partialorder %v2491, 8.507059e+37
    %v2493 = vand.u32 %v2481, 2147483648
    %v2494 = vor.u32 1.1754944e-38, %v2493
    %v2495 = vsel %vm2492, %v2494, %v2490
    %v2496 = vmul.f32 1.0, %v2495
    %v2498 = vrot.slane %v2218, 6
    %v2500 = vmul.f32 %v2476, %v2498
    %v2501 = vmul.f32 %v2457, %v2477
    %v2502 = vadd.f32 %v2500, %v2501
    %v2503 = vtanh.pop %v2502
    %v2504 = vmul.f32 %v2496, %v2503
    %v2505 = vxor.u32 %v2435, 2147483648
    %v2506 = vmul.f32 %v2505, 1.442695
    %v2507 = vpow.pop %v2506
    %v2508 = vadd.f32 %v2507, 1.0
    %v2509 = vrcp.pop %v2508
    %v2510 = vmul.f32 %v2508, %v2509
    %v2511 = vsub.f32 1.0, %v2510
    %v2512 = vmul.f32 %v2509, %v2511
    %v2513 = vadd.f32 %v2509, %v2512
    %vm2514 = vweird.f32 %v2508
    %vm2515 = vweird.f32 %v2509
    %vm2516 = vmor %vm2514, %vm2515
    %v2517 = vsel %vm2516, %v2509, %v2513
    %v2518 = vand.u32 2147483647, %v2508
    %vm2519 = vcmp.eq.f32.partialorder %v2518, 8.507059e+37
    %v2520 = vand.u32 %v2508, 2147483648
    %v2521 = vor.u32 1.1754944e-38, %v2520
    %v2522 = vsel %vm2519, %v2521, %v2517
    %v2523 = vmul.f32 1.0, %v2522
    %v2524 = vxor.u32 %v2436, 2147483648
    %v2525 = vmul.f32 %v2524, 1.442695
    %v2526 = vpow.pop %v2525
    %v2527 = vadd.f32 %v2526, 1.0
    %v2528 = vrcp.pop %v2527
    %v2529 = vmul.f32 %v2527, %v2528
    %v2530 = vsub.f32 1.0, %v2529
    %v2531 = vmul.f32 %v2528, %v2530
    %v2532 = vadd.f32 %v2528, %v2531
    %vm2533 = vweird.f32 %v2527
    %vm2534 = vweird.f32 %v2528
    %vm2535 = vmor %vm2533, %vm2534
    %v2536 = vsel %vm2535, %v2528, %v2532
    %v2537 = vand.u32 2147483647, %v2527
    %vm2538 = vcmp.eq.f32.partialorder %v2537, 8.507059e+37
    %v2539 = vand.u32 %v2527, 2147483648
    %v2540 = vor.u32 1.1754944e-38, %v2539
    %v2541 = vsel %vm2538, %v2540, %v2536
    %v2542 = vmul.f32 1.0, %v2541
    %v2543 = vtanh.pop %v2437
    %v2544 = vxor.u32 %v2438, 2147483648
    %v2545 = vmul.f32 %v2544, 1.442695
    %v2546 = vpow.pop %v2545
    %v2547 = vadd.f32 %v2546, 1.0
    %v2548 = vrcp.pop %v2547
    %v2549 = vmul.f32 %v2547, %v2548
    %v2550 = vsub.f32 1.0, %v2549
    %v2551 = vmul.f32 %v2548, %v2550
    %v2552 = vadd.f32 %v2548, %v2551
    %vm2553 = vweird.f32 %v2547
    %vm2554 = vweird.f32 %v2548
    %vm2555 = vmor %vm2553, %vm2554
    %v2556 = vsel %vm2555, %v2548, %v2552
    %v2557 = vand.u32 2147483647, %v2547
    %vm2558 = vcmp.eq.f32.partialorder %v2557, 8.507059e+37
    %v2559 = vand.u32 %v2547, 2147483648
    %v2560 = vor.u32 1.1754944e-38, %v2559
    %v2561 = vsel %vm2558, %v2560, %v2556
    %v2562 = vmul.f32 1.0, %v2561
    %v2564 = vrot.slane %v2284, 2
    %v2566 = vmul.f32 %v2542, %v2564
    %v2567 = vmul.f32 %v2523, %v2543
    %v2568 = vadd.f32 %v2566, %v2567
    %v2569 = vtanh.pop %v2568
    %v2570 = vmul.f32 %v2562, %v2569
    %v2572 = vrot.slane %v2504, 4
    %v2574 = vmax.f32 %v2290, %v2572
    %v2576 = vrot.slane %v2570, 4
    %v2578 = vmax.f32 %v2294, %v2576
    %v2579 = vpack.c.bf16 %v2504, %v2504
    %v2581 = vrot.slane %v2579, 2
    %2583 = vmatpush.bf16.msra.mxu0 %v466
    %2584 = vmatpush.bf16.msra.mxu0 %v462
    %2585 = vmatpush.bf16.msra.mxu0 %v458
    %2586 = vmatpush.bf16.msra.mxu0 %v454
    %2587 = vmatpush.bf16.msra.mxu0 %v450
    %2588 = vmatpush.bf16.msra.mxu0 %v446
    %2589 = vmatpush.bf16.msra.mxu0 %v442
    %2590 = vmatpush.bf16.msra.mxu0 %v438
    %2591 = vmatmul.bf16.gmra.mxu0 %v2581
    %v2592 = vpop.f32.mrf.mxu0
    %v2593 = vadd.f32 0.0, %v2592
    %v2594 = vpop.f32.mrf.mxu0
    %2595 = vdwg.mxu0
    %2596 = vmatpush.bf16.msra.mxu0 %v467
    %2597 = vmatpush.bf16.msra.mxu0 %v463
    %2598 = vmatpush.bf16.msra.mxu0 %v459
    %2599 = vmatpush.bf16.msra.mxu0 %v455
    %2600 = vmatpush.bf16.msra.mxu0 %v451
    %2601 = vmatpush.bf16.msra.mxu0 %v447
    %2602 = vmatpush.bf16.msra.mxu0 %v443
    %2603 = vmatpush.bf16.msra.mxu0 %v439
    %2604 = vmatmul.bf16.gmra.mxu0 %v2581
    %v2605 = vpop.f32.mrf.mxu0
    %v2606 = vadd.f32 0.0, %v2605
    %v2607 = vpop.f32.mrf.mxu0
    %2608 = vdwg.mxu0
    %2609 = vmatpush.bf16.msra.mxu0 %v468
    %2610 = vmatpush.bf16.msra.mxu0 %v464
    %2611 = vmatpush.bf16.msra.mxu0 %v460
    %2612 = vmatpush.bf16.msra.mxu0 %v456
    %2613 = vmatpush.bf16.msra.mxu0 %v452
    %2614 = vmatpush.bf16.msra.mxu0 %v448
    %2615 = vmatpush.bf16.msra.mxu0 %v444
    %2616 = vmatpush.bf16.msra.mxu0 %v440
    %2617 = vmatmul.bf16.gmra.mxu0 %v2581
    %v2618 = vpop.f32.mrf.mxu0
    %v2619 = vadd.f32 0.0, %v2618
    %v2620 = vpop.f32.mrf.mxu0
    %2621 = vdwg.mxu0
    %2622 = vmatpush.bf16.msra.mxu0 %v469
    %2623 = vmatpush.bf16.msra.mxu0 %v465
    %2624 = vmatpush.bf16.msra.mxu0 %v461
    %2625 = vmatpush.bf16.msra.mxu0 %v457
    %2626 = vmatpush.bf16.msra.mxu0 %v453
    %2627 = vmatpush.bf16.msra.mxu0 %v449
    %2628 = vmatpush.bf16.msra.mxu0 %v445
    %2629 = vmatpush.bf16.msra.mxu0 %v441
    %2630 = vmatmul.bf16.gmra.mxu0 %v2581
    %v2631 = vpop.f32.mrf.mxu0
    %v2632 = vadd.f32 0.0, %v2631
    %v2633 = vpop.f32.mrf.mxu0
    %2634 = vdwg.mxu0
    %v2639 = vrot.slane %v2593, 2
    %v2640 = vrot.slane %v2606, 2
    %v2641 = vrot.slane %v2619, 2
    %v2642 = vrot.slane %v2632, 2
    %v2647 = vadd.f32 %v177, %v2639
    %v2648 = vadd.f32 %v191, %v2640
    %v2649 = vadd.f32 %v205, %v2641
    %v2650 = vadd.f32 %v219, %v2642
    %v2651 = vpack.c.bf16 %v2570, %v2570
    %v2653 = vrot.slane %v2651, 1
    %2655 = vmatpush.bf16.msra.mxu0 %v682
    %2656 = vmatpush.bf16.msra.mxu0 %v678
    %2657 = vmatpush.bf16.msra.mxu0 %v674
    %2658 = vmatpush.bf16.msra.mxu0 %v670
    %2659 = vmatpush.bf16.msra.mxu0 %v666
    %2660 = vmatpush.bf16.msra.mxu0 %v662
    %2661 = vmatpush.bf16.msra.mxu0 %v658
    %2662 = vmatpush.bf16.msra.mxu0 %v654
    %2663 = vmatmul.bf16.gmra.mxu0 %v2653
    %v2664 = vpop.f32.mrf.mxu0
    %v2665 = vadd.f32 0.0, %v2664
    %v2666 = vpop.f32.mrf.mxu0
    %2667 = vdwg.mxu0
    %2668 = vmatpush.bf16.msra.mxu0 %v683
    %2669 = vmatpush.bf16.msra.mxu0 %v679
    %2670 = vmatpush.bf16.msra.mxu0 %v675
    %2671 = vmatpush.bf16.msra.mxu0 %v671
    %2672 = vmatpush.bf16.msra.mxu0 %v667
    %2673 = vmatpush.bf16.msra.mxu0 %v663
    %2674 = vmatpush.bf16.msra.mxu0 %v659
    %2675 = vmatpush.bf16.msra.mxu0 %v655
    %2676 = vmatmul.bf16.gmra.mxu0 %v2653
    %v2677 = vpop.f32.mrf.mxu0
    %v2678 = vadd.f32 0.0, %v2677
    %v2679 = vpop.f32.mrf.mxu0
    %2680 = vdwg.mxu0
    %2681 = vmatpush.bf16.msra.mxu0 %v684
    %2682 = vmatpush.bf16.msra.mxu0 %v680
    %2683 = vmatpush.bf16.msra.mxu0 %v676
    %2684 = vmatpush.bf16.msra.mxu0 %v672
    %2685 = vmatpush.bf16.msra.mxu0 %v668
    %2686 = vmatpush.bf16.msra.mxu0 %v664
    %2687 = vmatpush.bf16.msra.mxu0 %v660
    %2688 = vmatpush.bf16.msra.mxu0 %v656
    %2689 = vmatmul.bf16.gmra.mxu0 %v2653
    %v2690 = vpop.f32.mrf.mxu0
    %v2691 = vadd.f32 0.0, %v2690
    %v2692 = vpop.f32.mrf.mxu0
    %2693 = vdwg.mxu0
    %2694 = vmatpush.bf16.msra.mxu0 %v685
    %2695 = vmatpush.bf16.msra.mxu0 %v681
    %2696 = vmatpush.bf16.msra.mxu0 %v677
    %2697 = vmatpush.bf16.msra.mxu0 %v673
    %2698 = vmatpush.bf16.msra.mxu0 %v669
    %2699 = vmatpush.bf16.msra.mxu0 %v665
    %2700 = vmatpush.bf16.msra.mxu0 %v661
    %2701 = vmatpush.bf16.msra.mxu0 %v657
    %2702 = vmatmul.bf16.gmra.mxu0 %v2653
    %v2703 = vpop.f32.mrf.mxu0
    %v2704 = vadd.f32 0.0, %v2703
    %v2705 = vpop.f32.mrf.mxu0
    %2706 = vdwg.mxu0
    %v2707 = vadd.f32 %v231, %v2665
    %v2708 = vadd.f32 %v245, %v2678
    %v2709 = vadd.f32 %v259, %v2691
    %v2710 = vadd.f32 %v273, %v2704
    %v2711 = vxor.u32 %v2647, 2147483648
    %v2712 = vmul.f32 %v2711, 1.442695
    %v2713 = vpow.pop %v2712
    %v2714 = vadd.f32 %v2713, 1.0
    %v2715 = vrcp.pop %v2714
    %v2716 = vmul.f32 %v2714, %v2715
    %v2717 = vsub.f32 1.0, %v2716
    %v2718 = vmul.f32 %v2715, %v2717
    %v2719 = vadd.f32 %v2715, %v2718
    %vm2720 = vweird.f32 %v2714
    %vm2721 = vweird.f32 %v2715
    %vm2722 = vmor %vm2720, %vm2721
    %v2723 = vsel %vm2722, %v2715, %v2719
    %v2724 = vand.u32 2147483647, %v2714
    %vm2725 = vcmp.eq.f32.partialorder %v2724, 8.507059e+37
    %v2726 = vand.u32 %v2714, 2147483648
    %v2727 = vor.u32 1.1754944e-38, %v2726
    %v2728 = vsel %vm2725, %v2727, %v2723
    %v2729 = vmul.f32 1.0, %v2728
    %v2730 = vxor.u32 %v2648, 2147483648
    %v2731 = vmul.f32 %v2730, 1.442695
    %v2732 = vpow.pop %v2731
    %v2733 = vadd.f32 %v2732, 1.0
    %v2734 = vrcp.pop %v2733
    %v2735 = vmul.f32 %v2733, %v2734
    %v2736 = vsub.f32 1.0, %v2735
    %v2737 = vmul.f32 %v2734, %v2736
    %v2738 = vadd.f32 %v2734, %v2737
    %vm2739 = vweird.f32 %v2733
    %vm2740 = vweird.f32 %v2734
    %vm2741 = vmor %vm2739, %vm2740
    %v2742 = vsel %vm2741, %v2734, %v2738
    %v2743 = vand.u32 2147483647, %v2733
    %vm2744 = vcmp.eq.f32.partialorder %v2743, 8.507059e+37
    %v2745 = vand.u32 %v2733, 2147483648
    %v2746 = vor.u32 1.1754944e-38, %v2745
    %v2747 = vsel %vm2744, %v2746, %v2742
    %v2748 = vmul.f32 1.0, %v2747
    %v2749 = vtanh.pop %v2649
    %v2750 = vxor.u32 %v2650, 2147483648
    %v2751 = vmul.f32 %v2750, 1.442695
    %v2752 = vpow.pop %v2751
    %v2753 = vadd.f32 %v2752, 1.0
    %v2754 = vrcp.pop %v2753
    %v2755 = vmul.f32 %v2753, %v2754
    %v2756 = vsub.f32 1.0, %v2755
    %v2757 = vmul.f32 %v2754, %v2756
    %v2758 = vadd.f32 %v2754, %v2757
    %vm2759 = vweird.f32 %v2753
    %vm2760 = vweird.f32 %v2754
    %vm2761 = vmor %vm2759, %vm2760
    %v2762 = vsel %vm2761, %v2754, %v2758
    %v2763 = vand.u32 2147483647, %v2753
    %vm2764 = vcmp.eq.f32.partialorder %v2763, 8.507059e+37
    %v2765 = vand.u32 %v2753, 2147483648
    %v2766 = vor.u32 1.1754944e-38, %v2765
    %v2767 = vsel %vm2764, %v2766, %v2762
    %v2768 = vmul.f32 1.0, %v2767
    %v2770 = vrot.slane %v2502, 6
    %v2772 = vmul.f32 %v2748, %v2770
    %v2773 = vmul.f32 %v2729, %v2749
    %v2774 = vadd.f32 %v2772, %v2773
    %v2775 = vtanh.pop %v2774
    %v2776 = vmul.f32 %v2768, %v2775
    %v2777 = vxor.u32 %v2707, 2147483648
    %v2778 = vmul.f32 %v2777, 1.442695
    %v2779 = vpow.pop %v2778
    %v2780 = vadd.f32 %v2779, 1.0
    %v2781 = vrcp.pop %v2780
    %v2782 = vmul.f32 %v2780, %v2781
    %v2783 = vsub.f32 1.0, %v2782
    %v2784 = vmul.f32 %v2781, %v2783
    %v2785 = vadd.f32 %v2781, %v2784
    %vm2786 = vweird.f32 %v2780
    %vm2787 = vweird.f32 %v2781
    %vm2788 = vmor %vm2786, %vm2787
    %v2789 = vsel %vm2788, %v2781, %v2785
    %v2790 = vand.u32 2147483647, %v2780
    %vm2791 = vcmp.eq.f32.partialorder %v2790, 8.507059e+37
    %v2792 = vand.u32 %v2780, 2147483648
    %v2793 = vor.u32 1.1754944e-38, %v2792
    %v2794 = vsel %vm2791, %v2793, %v2789
    %v2795 = vmul.f32 1.0, %v2794
    %v2796 = vxor.u32 %v2708, 2147483648
    %v2797 = vmul.f32 %v2796, 1.442695
    %v2798 = vpow.pop %v2797
    %v2799 = vadd.f32 %v2798, 1.0
    %v2800 = vrcp.pop %v2799
    %v2801 = vmul.f32 %v2799, %v2800
    %v2802 = vsub.f32 1.0, %v2801
    %v2803 = vmul.f32 %v2800, %v2802
    %v2804 = vadd.f32 %v2800, %v2803
    %vm2805 = vweird.f32 %v2799
    %vm2806 = vweird.f32 %v2800
    %vm2807 = vmor %vm2805, %vm2806
    %v2808 = vsel %vm2807, %v2800, %v2804
    %v2809 = vand.u32 2147483647, %v2799
    %vm2810 = vcmp.eq.f32.partialorder %v2809, 8.507059e+37
    %v2811 = vand.u32 %v2799, 2147483648
    %v2812 = vor.u32 1.1754944e-38, %v2811
    %v2813 = vsel %vm2810, %v2812, %v2808
    %v2814 = vmul.f32 1.0, %v2813
    %v2815 = vtanh.pop %v2709
    %v2816 = vxor.u32 %v2710, 2147483648
    %v2817 = vmul.f32 %v2816, 1.442695
    %v2818 = vpow.pop %v2817
    %v2819 = vadd.f32 %v2818, 1.0
    %v2820 = vrcp.pop %v2819
    %v2821 = vmul.f32 %v2819, %v2820
    %v2822 = vsub.f32 1.0, %v2821
    %v2823 = vmul.f32 %v2820, %v2822
    %v2824 = vadd.f32 %v2820, %v2823
    %vm2825 = vweird.f32 %v2819
    %vm2826 = vweird.f32 %v2820
    %vm2827 = vmor %vm2825, %vm2826
    %v2828 = vsel %vm2827, %v2820, %v2824
    %v2829 = vand.u32 2147483647, %v2819
    %vm2830 = vcmp.eq.f32.partialorder %v2829, 8.507059e+37
    %v2831 = vand.u32 %v2819, 2147483648
    %v2832 = vor.u32 1.1754944e-38, %v2831
    %v2833 = vsel %vm2830, %v2832, %v2828
    %v2834 = vmul.f32 1.0, %v2833
    %v2836 = vrot.slane %v2568, 2
    %v2838 = vmul.f32 %v2814, %v2836
    %v2839 = vmul.f32 %v2795, %v2815
    %v2840 = vadd.f32 %v2838, %v2839
    %v2841 = vtanh.pop %v2840
    %v2842 = vmul.f32 %v2834, %v2841
    %v2844 = vrot.slane %v2776, 6
    %v2846 = vmax.f32 %v2574, %v2844
    %v2848 = vrot.slane %v2842, 2
    %v2850 = vmax.f32 %v2578, %v2848
    %v2851 = vpack.c.bf16 %v2846, %v2846
    %v2852 = vld [vmem:[%s4] sm:$0xf]
    %v2853 = vld [vmem:[%s4 + $0x4] sm:$0xf]
    %v2854 = vld [vmem:[%s4 + $0x8] sm:$0xf]
    %v2855 = vld [vmem:[%s4 + $0xc] sm:$0xf]
    %v2856 = vld [vmem:[%s4 + $0x10] sm:$0xf]
    %v2857 = vld [vmem:[%s4 + $0x14] sm:$0xf]
    %v2858 = vld [vmem:[%s4 + $0x18] sm:$0xf]
    %v2859 = vld [vmem:[%s4 + $0x1c] sm:$0xf]
    %v2860 = vld [vmem:[%s4 + $0x20] sm:$0xf]
    %v2861 = vld [vmem:[%s4 + $0x24] sm:$0xf]
    %v2862 = vld [vmem:[%s4 + $0x28] sm:$0xf]
    %v2863 = vld [vmem:[%s4 + $0x2c] sm:$0xf]
    %v2864 = vld [vmem:[%s4 + $0x30] sm:$0xf]
    %v2865 = vld [vmem:[%s4 + $0x34] sm:$0xf]
    %v2866 = vld [vmem:[%s4 + $0x38] sm:$0xf]
    %v2867 = vld [vmem:[%s4 + $0x3c] sm:$0xf]
    %v2868 = vpack.c.bf16 %v2850, %v2850
    %v2869 = vld [vmem:[%s4 + $0x40] sm:$0xf]
    %v2870 = vld [vmem:[%s4 + $0x44] sm:$0xf]
    %v2871 = vld [vmem:[%s4 + $0x48] sm:$0xf]
    %v2872 = vld [vmem:[%s4 + $0x4c] sm:$0xf]
    %v2873 = vld [vmem:[%s4 + $0x50] sm:$0xf]
    %v2874 = vld [vmem:[%s4 + $0x54] sm:$0xf]
    %v2875 = vld [vmem:[%s4 + $0x58] sm:$0xf]
    %v2876 = vld [vmem:[%s4 + $0x5c] sm:$0xf]
    %v2877 = vld [vmem:[%s4 + $0x60] sm:$0xf]
    %v2878 = vld [vmem:[%s4 + $0x64] sm:$0xf]
    %v2879 = vld [vmem:[%s4 + $0x68] sm:$0xf]
    %v2880 = vld [vmem:[%s4 + $0x6c] sm:$0xf]
    %v2881 = vld [vmem:[%s4 + $0x70] sm:$0xf]
    %v2882 = vld [vmem:[%s4 + $0x74] sm:$0xf]
    %v2883 = vld [vmem:[%s4 + $0x78] sm:$0xf]
    %v2884 = vld [vmem:[%s4 + $0x7c] sm:$0xf]
    %v2886 = vrot.slane %v2868, 3
    %v2904 = vunpack.c.l.b16 %v2869
    %v2905 = vunpack.c.l.b16 %v2870
    %v2906 = vunpack.c.l.b16 %v2871
    %v2907 = vunpack.c.l.b16 %v2872
    %v2908 = vunpack.c.l.b16 %v2873
    %v2909 = vunpack.c.l.b16 %v2874
    %v2910 = vunpack.c.l.b16 %v2875
    %v2911 = vunpack.c.l.b16 %v2876
    %v2912 = vunpack.c.l.b16 %v2877
    %v2913 = vunpack.c.l.b16 %v2878
    %v2914 = vunpack.c.l.b16 %v2879
    %v2915 = vunpack.c.l.b16 %v2880
    %v2916 = vunpack.c.l.b16 %v2881
    %v2917 = vunpack.c.l.b16 %v2882
    %v2918 = vunpack.c.l.b16 %v2883
    %v2919 = vunpack.c.l.b16 %v2884
    %v2920 = vpack.c.b16 %v2905, %v2904
    %v2921 = vpack.c.b16 %v2907, %v2906
    %v2922 = vpack.c.b16 %v2909, %v2908
    %v2923 = vpack.c.b16 %v2911, %v2910
    %v2924 = vpack.c.b16 %v2913, %v2912
    %v2925 = vpack.c.b16 %v2915, %v2914
    %v2926 = vpack.c.b16 %v2917, %v2916
    %v2927 = vpack.c.b16 %v2919, %v2918
    %2936 = vmatpush.bf16.msra.mxu0 %v2927
    %2937 = vmatpush.bf16.msra.mxu0 %v2926
    %2938 = vmatpush.bf16.msra.mxu0 %v2925
    %2939 = vmatpush.bf16.msra.mxu0 %v2924
    %2940 = vmatpush.bf16.msra.mxu0 %v2923
    %2941 = vmatpush.bf16.msra.mxu0 %v2922
    %2942 = vmatpush.bf16.msra.mxu0 %v2921
    %2943 = vmatpush.bf16.msra.mxu0 %v2920
    %2944 = vmatmul.bf16.gmra.mxu0 %v2886
    %v2945 = vpop.f32.mrf.mxu0
    %v2946 = vadd.f32 0.0, %v2945
    %v2947 = vpop.f32.mrf.mxu0
    %2948 = vdwg.mxu0
    %v2965 = vunpack.c.l.b16 %v2852
    %v2966 = vunpack.c.l.b16 %v2853
    %v2967 = vunpack.c.l.b16 %v2854
    %v2968 = vunpack.c.l.b16 %v2855
    %v2969 = vunpack.c.l.b16 %v2856
    %v2970 = vunpack.c.l.b16 %v2857
    %v2971 = vunpack.c.l.b16 %v2858
    %v2972 = vunpack.c.l.b16 %v2859
    %v2973 = vunpack.c.l.b16 %v2860
    %v2974 = vunpack.c.l.b16 %v2861
    %v2975 = vunpack.c.l.b16 %v2862
    %v2976 = vunpack.c.l.b16 %v2863
    %v2977 = vunpack.c.l.b16 %v2864
    %v2978 = vunpack.c.l.b16 %v2865
    %v2979 = vunpack.c.l.b16 %v2866
    %v2980 = vunpack.c.l.b16 %v2867
    %v2981 = vpack.c.b16 %v2966, %v2965
    %v2982 = vpack.c.b16 %v2968, %v2967
    %v2983 = vpack.c.b16 %v2970, %v2969
    %v2984 = vpack.c.b16 %v2972, %v2971
    %v2985 = vpack.c.b16 %v2974, %v2973
    %v2986 = vpack.c.b16 %v2976, %v2975
    %v2987 = vpack.c.b16 %v2978, %v2977
    %v2988 = vpack.c.b16 %v2980, %v2979
    %2997 = vmatpush.bf16.msra.mxu0 %v2988
    %2998 = vmatpush.bf16.msra.mxu0 %v2987
    %2999 = vmatpush.bf16.msra.mxu0 %v2986
    %3000 = vmatpush.bf16.msra.mxu0 %v2985
    %3001 = vmatpush.bf16.msra.mxu0 %v2984
    %3002 = vmatpush.bf16.msra.mxu0 %v2983
    %3003 = vmatpush.bf16.msra.mxu0 %v2982
    %3004 = vmatpush.bf16.msra.mxu0 %v2981
    %3005 = vmatmul.bf16.gmra.mxu0 %v2851
    %v3006 = vpop.f32.mrf.mxu0
    %v3007 = vadd.f32 %v2946, %v3006
    %v3008 = vpop.f32.mrf.mxu0
    %3009 = vdwg.mxu0
    %v3010 = vperm.slane %v341, 0
    %v3011 = vadd.f32 %v3007, %v3010
    %v3012 = vtanh.pop %v3011
    %v3013 = vperm.slane %v341, 1
    %v3014 = vmul.f32 %v3012, %v3013
    %vm3015 = vcmask 254976
    %v3016 = vsel %vm3015, %v3014, 0.0
    %3017 = vadd.xlane.f32.xlu0 %v3016
    %v3018 = vpop.xlane.xlu0 %3017
    %v3019 = vperm.slane %v341, 2
    %v3020 = vadd.f32 %v3018, %v3019
    %v3021 = vxor.u32 %v3020, 2147483648
    %v3022 = vmul.f32 %v3021, 1.442695
    %v3023 = vpow.pop %v3022
    %v3024 = vadd.f32 %v3023, 1.0
    %v3025 = vrcp.pop %v3024
    %v3026 = vmul.f32 %v3024, %v3025
    %v3027 = vsub.f32 1.0, %v3026
    %v3028 = vmul.f32 %v3025, %v3027
    %v3029 = vadd.f32 %v3025, %v3028
    %vm3030 = vweird.f32 %v3024
    %vm3031 = vweird.f32 %v3025
    %vm3032 = vmor %vm3030, %vm3031
    %v3033 = vsel %vm3032, %v3025, %v3029
    %v3034 = vand.u32 2147483647, %v3024
    %vm3035 = vcmp.eq.f32.partialorder %v3034, 8.507059e+37
    %v3036 = vand.u32 %v3024, 2147483648
    %v3037 = vor.u32 1.1754944e-38, %v3036
    %v3038 = vsel %vm3035, %v3037, %v3033
    %v3039 = vmul.f32 1.0, %v3038
    %vm3040 = vcmask 1024
    %3041 = vst.msk [vmem:[%s6] sm:$0x3] %vm3040, %v3039
    // Predicated region
    $region30: #{tpu_custom_call.1} parent=1 // pred_check
      _
    $region31: #{tpu_custom_call.1} parent=1 // pred_check_branch
      %3043 = sbr.rel (0) target = $region33
    $region32: #{tpu_custom_call.1} parent=1 // pred_region
      _
    $region33: #{tpu_custom_call.1} parent=1 // pred_fallthru
      _
    // Predicated region
    $region34: #{tpu_custom_call.1} parent=1 // pred_check
      _
    $region35: #{tpu_custom_call.1} parent=1 // pred_check_branch
      %3045 = sbr.rel (0) target = $region37
    $region36: #{tpu_custom_call.1} parent=1 // pred_region
      _
    $region37: #{tpu_custom_call.1} parent=1 // pred_fallthru
      _
    %3046 = vsyncpa [#allocation3], 1

</llo_original>
